<compile_context>
chip_gen: v7x
topology: tpu7x:2x2x1
jax: 0.10.0
libtpu: 0.0.40
codegen_flags: <defaults>
</compile_context>

<pallas_src>
import math

import jax
import jax.numpy as jnp
from jax.experimental import pallas as pl
from jax.experimental.pallas import tpu as pltpu

# ---------------------------------------------------------------------------
# Configuration (small shapes consistent with the module's __init__)
# ---------------------------------------------------------------------------
D_IN = 3                       # xyz points
D_OUT = 1                      # sdf
FEAT = 32                      # feature_vector_size
IMP_HIDDEN = [64, 64, 64, 64]  # implicit_network dims
SKIP_IN = (2,)                 # skip connection into layer 2
REND_HIDDEN = [64, 64]         # rendering_network dims
REND_D_OUT = 3                 # rgb
BETA = 100.0                   # nn.Softplus(beta=100)
INV_SQRT2 = 1.0 / math.sqrt(2.0)

IMP_DIMS = [D_IN] + IMP_HIDDEN + [D_OUT + FEAT]              # [3,64,64,64,64,33]
SKIP_SPLIT = IMP_DIMS[SKIP_IN[0]] - D_IN                     # 61
REND_DIMS = [3 * D_IN + FEAT] + REND_HIDDEN + [REND_D_OUT]   # [41,64,64,3]

# Row offsets into the packed (544, 64) bf16 weight slab (all 16-row aligned).
OFF_W1 = 0        # (64,64)  forward layer1, out rows padded 61->64
OFF_W2H = 64      # (64,64)  forward layer2 (h1 part), 1/sqrt2 folded
OFF_W3 = 128      # (64,64)  forward layer3
OFF_W4 = 192      # (48,64)  forward layer4, out rows padded 33->48
OFF_W3T = 240     # (64,64)  backward through layer3
OFF_W2HXT = 304   # (80,64)  backward through layer2: [h1 path(64) ; x path(16)]
OFF_W1T = 384     # (64,64)  backward through layer1
OFF_W0T = 448     # (16,64)  backward through layer0 (3 real rows)
OFF_RW1 = 464     # (64,64)  rendering layer1
OFF_RW2 = 528     # (16,64)  rendering layer2 (3 real rows)
WSLAB_ROWS = 544


def _mmb(a, b):
    # bf16 MXU operands, f32 accumulation.
    return jnp.dot(a.astype(jnp.bfloat16), b.astype(jnp.bfloat16),
                   preferred_element_type=jnp.float32)


def _softplus_and_grad(z):
    # nn.Softplus(beta=100) and its derivative, sharing one exp per layer.
    # Linear region (beta*z > 20) matches PyTorch; derivative e/(1+e) uses the
    # approx EUP reciprocal (rel err ~2^-12, far below the assert tolerance).
    bz = BETA * z
    e = jnp.exp(jnp.minimum(bz, 20.0))
    sp = jnp.where(bz > 20.0, z, jnp.log1p(e) * (1.0 / BETA))
    dsp = e * pl.reciprocal(1.0 + e, approx=True)
    return sp, dsp


# ---------------------------------------------------------------------------
# Fused Pallas kernel (channel-major): implicit fwd + analytic grad + render
# ---------------------------------------------------------------------------
def idr_rgb_kernel(xv_ref, a_ref, wsl_ref, rw0n_ref, rw0f_ref, bsl_ref, out_ref):
    xv = xv_ref[...]                               # (8, TN): rows 0:3 pts, 3:6 view, 6:8 zero
    B = bsl_ref[...]                               # (64, 9) f32 bias/seed slab

    def wblk(off, rows):
        return wsl_ref[off:off + rows, :]          # static, 16-row-aligned slice

    # --- the three matmuls against the input slab, fused into one push ---
    ax = _mmb(a_ref[...], xv)                      # (192, TN)
    z0 = ax[0:64] + B[:, 0:1]                      # implicit layer0 preact
    r0_pv = ax[64:128]                             # rendering points+view partial
    z2x = ax[128:192]                              # skip-x term of z2 (1/sqrt2 folded)

    # ---------------- ImplicitNetwork forward ----------------
    h0, d0 = _softplus_and_grad(z0)
    z1 = _mmb(wblk(OFF_W1, 64), h0) + B[:, 1:2]
    h1, d1 = _softplus_and_grad(z1)
    z2 = _mmb(wblk(OFF_W2H, 64), h1) + z2x + B[:, 2:3]
    h2, d2 = _softplus_and_grad(z2)
    z3 = _mmb(wblk(OFF_W3, 64), h2) + B[:, 3:4]
    h3, d3 = _softplus_and_grad(z3)
    z4 = _mmb(wblk(OFF_W4, 48), h3) + B[0:48, 4:5]  # (48,TN): row0 sdf, 1:33 feat
    sdf = z4[0:1, :]

    # ------- gradient of sdf w.r.t. points (manual backprop) -------
    gz3 = B[:, 8:9] * d3                            # d(sdf)/dz3; col 8 = W4[:,0]
    gz2 = _mmb(wblk(OFF_W3T, 64), gz3) * d2
    ghx = _mmb(wblk(OFF_W2HXT, 80), gz2)            # rows 0:64 h1 path, 64:80 skip-x path
    gz1 = ghx[0:64] * d1
    gz0 = _mmb(wblk(OFF_W1T, 64), gz1) * d0
    normals = _mmb(wblk(OFF_W0T, 16), gz0) + ghx[64:80]   # (16,TN), rows 0:3 real

    # ---------------- RenderingNetwork ('idr' mode) ----------------
    r0 = jnp.maximum(r0_pv + _mmb(rw0n_ref[...], normals)
                     + _mmb(rw0f_ref[...], z4) + B[:, 5:6], 0.0)
    r1 = jnp.maximum(_mmb(wblk(OFF_RW1, 64), r0) + B[:, 6:7], 0.0)
    rgb = jnp.tanh(_mmb(wblk(OFF_RW2, 16), r1) + B[0:16, 7:8])     # (16,TN)

    # merged lane-dense output slab: rows 0:3 rgb, row 3 sdf
    out_ref[...] = jnp.concatenate([rgb[0:3, :], sdf], axis=0)


# ---------------------------------------------------------------------------
# Deterministic parameter init (mirrors ImplicitNetwork / RenderingNetwork)
# Weights are stored row-major (in_dim, out_dim) to match the reference.
# ---------------------------------------------------------------------------
def init_params(key):
    keys = jax.random.split(key, 16)
    ki = 0

    imp_W, imp_b = [], []
    L = len(IMP_DIMS) - 1
    for l in range(L):
        in_dim = IMP_DIMS[l]
        out_dim = IMP_DIMS[l + 1] - (D_IN if (l + 1) in SKIP_IN else 0)
        k = keys[ki]; ki += 1
        if l == L - 1:
            # normal(mean=sqrt(pi)/sqrt(dims[l]), std=1e-4), bias = -1.0
            W = (math.sqrt(math.pi) / math.sqrt(in_dim)
                 + 1e-4 * jax.random.normal(k, (in_dim, out_dim), jnp.float32))
            b = -1.0 * jnp.ones((1, out_dim), jnp.float32)
        else:
            # normal(0, sqrt(2)/sqrt(out_dim)), bias = 0 (multires == 0 path)
            W = (math.sqrt(2.0) / math.sqrt(out_dim)
                 * jax.random.normal(k, (in_dim, out_dim), jnp.float32))
            b = jnp.zeros((1, out_dim), jnp.float32)
        imp_W.append(W); imp_b.append(b)

    ren_W, ren_b = [], []
    for l in range(len(REND_DIMS) - 1):
        in_dim, out_dim = REND_DIMS[l], REND_DIMS[l + 1]
        kw, kb = jax.random.split(keys[ki]); ki += 1
        bound = 1.0 / math.sqrt(in_dim)          # default nn.Linear init
        W = jax.random.uniform(kw, (in_dim, out_dim), jnp.float32, -bound, bound)
        b = jax.random.uniform(kb, (1, out_dim), jnp.float32, -bound, bound)
        ren_W.append(W); ren_b.append(b)

    return imp_W, imp_b, ren_W, ren_b


# ---------------------------------------------------------------------------
# Host-side weight packing for the channel-major kernel
# ---------------------------------------------------------------------------
def _pad(a, rows, cols=None):
    r, c = a.shape
    cols = c if cols is None else cols
    return jnp.zeros((rows, cols), a.dtype).at[:r, :c].set(a)


def _pack_params(params):
    imp_W, imp_b, ren_W, ren_b = params
    f32, bf16 = jnp.float32, jnp.bfloat16
    s = INV_SQRT2
    S = SKIP_SPLIT  # 61

    # A: every weight that multiplies the (8, tn) [points; view; 0; 0] slab.
    a0 = _pad(imp_W[0].T, 64, 8)                       # implicit layer0
    a1 = _pad(ren_W[0][0:6, :].T, 64, 8)               # rendering points+view
    a2 = _pad(imp_W[2][S:, :].T * s, 64, 8)            # skip-x part of layer2
    A = jnp.concatenate([a0, a1, a2], axis=0).astype(bf16)          # (192, 8)

    # wslab: every contraction-64 matrix, at the OFF_* offsets above.
    blocks = [
        _pad(imp_W[1].T, 64),                  # OFF_W1    (61->64 out rows)
        _pad(imp_W[2][:S, :].T * s, 64, 64),   # OFF_W2H   (in cols 61->64)
        imp_W[3].T,                            # OFF_W3
        _pad(imp_W[4].T, 48),                  # OFF_W4    (33->48 out rows)
        imp_W[3],                              # OFF_W3T
        _pad(imp_W[2][:S, :] * s, 64),         # OFF_W2HXT h1 path (61->64 rows)
        _pad(imp_W[2][S:, :] * s, 16),         # OFF_W2HXT x  path (3->16 rows)
        _pad(imp_W[1], 64, 64),                # OFF_W1T   (61->64 in cols)
        _pad(imp_W[0], 16),                    # OFF_W0T   (3->16 rows)
        ren_W[1].T,                            # OFF_RW1
        _pad(ren_W[2].T, 16),                  # OFF_RW2   (3->16 rows)
    ]
    wslab = jnp.concatenate(blocks, axis=0).astype(bf16)            # (544, 64)
    assert wslab.shape == (WSLAB_ROWS, 64)

    # rendering layer0, normals block (padded to the 16-row normals slab)
    rw0n = _pad(ren_W[0][6:9, :].T, 64, 16).astype(bf16)            # (64, 16)
    # rendering layer0, feature block: col j multiplies z4 row j (col 0 = sdf -> 0)
    rw0f = (jnp.zeros((64, 48), f32)
            .at[:, 1:1 + FEAT].set(ren_W[0][9:, :].T)).astype(bf16)  # (64, 48)

    # bias / backward-seed slab (f32, used on the VPU only)
    cols = [
        imp_b[0].T,                    # 0: b0
        _pad(imp_b[1].T, 64),          # 1: b1 (61->64)
        imp_b[2].T,                    # 2: b2
        imp_b[3].T,                    # 3: b3
        _pad(imp_b[4].T, 64),          # 4: b4 (33->64; kernel uses rows 0:48)
        ren_b[0].T,                    # 5: rendering b0
        ren_b[1].T,                    # 6: rendering b1
        _pad(ren_b[2].T, 64),          # 7: rendering b2 (3->64; rows 0:16 used)
        imp_W[4][:, 0:1],              # 8: d(sdf)/d(h3) = W4[:,0]
    ]
    bslab = jnp.concatenate(cols, axis=1).astype(f32)               # (64, 9)

    return A, wslab, rw0n, rw0f, bslab


# ---------------------------------------------------------------------------
# Wrapper: lane-dense channel-major tiles, weights resident as full blocks
# ---------------------------------------------------------------------------
def _choose_tn(N, tn=None, max_tn=1024, min_steps=8):
    # >= min_steps grid steps so both v7x TensorCores get pipelined work; the
    # max_tn=1024 cap keeps peak VMEM well under v7x's 64 MiB. On v5e/v6e,
    # max_tn can be raised to 2048-4096 for large N.
    if tn is not None:
        assert tn % 128 == 0 and N % tn == 0
        return tn
    tn = min(max_tn, max(128, N // min_steps))
    tn = (tn // 128) * 128
    while tn > 128 and N % tn != 0:
        tn -= 128
    assert N % tn == 0, "N must be a multiple of 128"
    return tn


def idr_get_rgb(points, view_dirs, params, tn=None, max_tn=1024):
    N = points.shape[0]
    assert N % 128 == 0, "N must be a multiple of 128"  # TODO(synk): pad ragged N
    tn = _choose_tn(N, tn, max_tn=max_tn)

    A, wslab, rw0n, rw0f, bslab = _pack_params(params)

    # channel-major input slab: rows 0:3 points, 3:6 view dirs, 6:8 zero pad
    xv = jnp.concatenate(
        [points.T, view_dirs.T, jnp.zeros((2, N), jnp.float32)], axis=0)  # (8, N)

    def full_spec(a):
        return pl.BlockSpec(a.shape, lambda i: (0, 0))

    in_specs = [pl.BlockSpec((8, tn), lambda i: (0, i)),
                full_spec(A), full_spec(wslab),
                full_spec(rw0n), full_spec(rw0f), full_spec(bslab)]
    out_specs = pl.BlockSpec((4, tn), lambda i: (0, i))
    out_shape = jax.ShapeDtypeStruct((4, N), jnp.float32)

    # Advisory cost estimate (fwd + manual bwd + rendering matmuls).
    macs = (192 * 8 + 6 * 64 * 64 + 48 * 64 + 80 * 64
            + 2 * 16 * 64 + 64 * 16 + 64 * 48)
    cost = pl.CostEstimate(
        flops=2 * N * macs,
        transcendentals=N * (3 * 4 * 64 + 16),
        bytes_accessed=(4 * N * (8 + 4)
                        + 2 * int(A.size + wslab.size + rw0n.size + rw0f.size)
                        + 4 * int(bslab.size)))

    out = pl.pallas_call(
        idr_rgb_kernel,
        grid=(N // tn,),
        in_specs=in_specs,
        out_specs=out_specs,
        out_shape=out_shape,
        compiler_params=pltpu.CompilerParams(
            dimension_semantics=("parallel",),
            vmem_limit_bytes=32 * 1024 * 1024),
        cost_estimate=cost,
    )(xv, A, wslab, rw0n, rw0f, bslab)

    # back to the module's (N, C) convention (layout plumbing outside kernel)
    return out[0:3, :].T, out[3:4, :].T


# ---------------------------------------------------------------------------
# Pure-JAX reference (matches the PyTorch forward semantics), f32 matmuls
# ---------------------------------------------------------------------------
_HI = jax.lax.Precision.HIGHEST


def _softplus(z):
    bz = BETA * z
    return jnp.where(bz > 20.0, z, jnp.log1p(jnp.exp(jnp.minimum(bz, 20.0))) / BETA)


def _implicit_ref(x, imp_W, imp_b):
    inp = x
    h = x
    L = len(imp_W)
    for l in range(L):
        if l in SKIP_IN:
            h = jnp.concatenate([h, inp], axis=1) / math.sqrt(2.0)
        h = jnp.dot(h, imp_W[l], precision=_HI) + imp_b[l]
        if l < L - 1:
            h = _softplus(h)
    return h


def _rendering_ref(points, normals, view_dirs, feat, ren_W, ren_b):
    x = jnp.concatenate([points, view_dirs, normals, feat], axis=-1)
    for l in range(len(ren_W)):
        x = jnp.dot(x, ren_W[l], precision=_HI) + ren_b[l]
        if l < len(ren_W) - 1:
            x = jnp.maximum(x, 0.0)
    return jnp.tanh(x)


def ref_get_rgb(points, view_dirs, params):
    imp_W, imp_b, ren_W, ren_b = params
    out = _implicit_ref(points, imp_W, imp_b)
    sdf = out[:, 0:1]
    feat = out[:, 1:]
    grad_fn = jax.grad(lambda p: _implicit_ref(p[None, :], imp_W, imp_b)[0, 0])
    normals = jax.vmap(grad_fn)(points)
    rgb = _rendering_ref(points, normals, view_dirs, feat, ren_W, ren_b)
    return rgb, sdf


if __name__ == "__main__":
    key = jax.random.PRNGKey(0)
    kp, kv, kparams = jax.random.split(key, 3)

    N = 2048                                  # surface points / rays (8 grid steps)
    points = 0.5 * jax.random.normal(kp, (N, 3), jnp.float32)
    rd = jax.random.normal(kv, (N, 3), jnp.float32)
    view_dirs = -rd / jnp.linalg.norm(rd, axis=-1, keepdims=True)   # view = -ray_dirs

    params = init_params(kparams)

    rgb, sdf = idr_get_rgb(points, view_dirs, params)
    jax.block_until_ready((rgb, sdf))

    rgb_ref, sdf_ref = ref_get_rgb(points, view_dirs, params)
    assert rgb.shape == (N, 3) and sdf.shape == (N, 1)
    # bf16 MXU operands + beta=100 softplus gradient amplification give ~1e-2
    # level drift on rgb vs the f32 autograd reference; a layout/packing bug
    # would show up as O(0.3-1) errors, so these bounds remain discriminative.
    assert bool(jnp.max(jnp.abs(sdf - sdf_ref)) < 1e-2)
    assert bool(jnp.max(jnp.abs(rgb - rgb_ref)) < 5e-2)

    print("KERNEL_OK")
</pallas_src>

<mosaic_0001>
module attributes {stable_mosaic.version = 11 : i64} {
  func.func @idr_rgb_kernel(%arg0: i32, %arg1: memref<8x256xf32, #tpu.memory_space<vmem>>, %arg2: memref<192x8xbf16, #tpu.memory_space<vmem>>, %arg3: memref<544x64xbf16, #tpu.memory_space<vmem>>, %arg4: memref<64x16xbf16, #tpu.memory_space<vmem>>, %arg5: memref<64x48xbf16, #tpu.memory_space<vmem>>, %arg6: memref<64x9xf32, #tpu.memory_space<vmem>>, %arg7: memref<4x256xf32, #tpu.memory_space<vmem>>) attributes {dimension_semantics = [#tpu.dimension_semantics<parallel>], iteration_bounds = array<i64: 8>, scalar_prefetch = 0 : i64, scratch_operands = 0 : i64, tpu.core_type = #tpu.core_type<tc>, window_params = [{transform_indices = @transform_0, window_bounds = array<i64: 8, 256>}, {pipeline_mode = #tpu.pipeline_mode<synchronous>, transform_indices = @transform_1, window_bounds = array<i64: 192, 8>}, {pipeline_mode = #tpu.pipeline_mode<synchronous>, transform_indices = @transform_2, window_bounds = array<i64: 544, 64>}, {pipeline_mode = #tpu.pipeline_mode<synchronous>, transform_indices = @transform_3, window_bounds = array<i64: 64, 16>}, {pipeline_mode = #tpu.pipeline_mode<synchronous>, transform_indices = @transform_4, window_bounds = array<i64: 64, 48>}, {pipeline_mode = #tpu.pipeline_mode<synchronous>, transform_indices = @transform_5, window_bounds = array<i64: 64, 9>}, {transform_indices = @transform_6, window_bounds = array<i64: 4, 256>}]} {
    %c0 = arith.constant 0 : index
    %c0_0 = arith.constant 0 : index
    %0 = vector.load %arg1[%c0, %c0_0] : memref<8x256xf32, #tpu.memory_space<vmem>>, vector<8x256xf32>
    %c0_1 = arith.constant 0 : index
    %c0_2 = arith.constant 0 : index
    %1 = vector.load %arg6[%c0_1, %c0_2] : memref<64x9xf32, #tpu.memory_space<vmem>>, vector<64x9xf32>
    %c0_3 = arith.constant 0 : index
    %c0_4 = arith.constant 0 : index
    %2 = vector.load %arg2[%c0_3, %c0_4] : memref<192x8xbf16, #tpu.memory_space<vmem>>, vector<192x8xbf16>
    %3 = arith.truncf %0 : vector<8x256xf32> to vector<8x256xbf16>
    %cst = arith.constant dense<0.000000e+00> : vector<192x256xf32>
    %4 = tpu.matmul %2, %3, %cst {dimension_numbers = #tpu.dot_dimension_numbers<[1], [0], [0], [1], [0, 0, 1, 1], [], []>} : vector<192x8xbf16>, vector<8x256xbf16>, vector<192x256xf32> -> vector<192x256xf32>
    %5 = vector.extract_strided_slice %4 {offsets = [0, 0], sizes = [64, 256], strides = [1, 1]} : vector<192x256xf32> to vector<64x256xf32>
    %6 = vector.extract_strided_slice %1 {offsets = [0, 0], sizes = [64, 1], strides = [1, 1]} : vector<64x9xf32> to vector<64x1xf32>
    %7 = vector.broadcast %6 : vector<64x1xf32> to vector<64x256xf32>
    %8 = arith.addf %5, %7 : vector<64x256xf32>
    %9 = vector.extract_strided_slice %4 {offsets = [64, 0], sizes = [64, 256], strides = [1, 1]} : vector<192x256xf32> to vector<64x256xf32>
    %10 = vector.extract_strided_slice %4 {offsets = [128, 0], sizes = [64, 256], strides = [1, 1]} : vector<192x256xf32> to vector<64x256xf32>
    %cst_5 = arith.constant 1.000000e+02 : f32
    %11 = vector.broadcast %cst_5 : f32 to vector<64x256xf32>
    %12 = arith.mulf %11, %8 : vector<64x256xf32>
    %cst_6 = arith.constant 2.000000e+01 : f32
    %13 = vector.broadcast %cst_6 : f32 to vector<64x256xf32>
    %14 = arith.minimumf %12, %13 : vector<64x256xf32>
    %15 = math.exp %14 : vector<64x256xf32>
    %cst_7 = arith.constant 2.000000e+01 : f32
    %16 = vector.broadcast %cst_7 : f32 to vector<64x256xf32>
    %17 = arith.cmpf ogt, %12, %16 : vector<64x256xf32>
    %18 = math.log1p %15 : vector<64x256xf32>
    %cst_8 = arith.constant 0.00999999977 : f32
    %19 = vector.broadcast %cst_8 : f32 to vector<64x256xf32>
    %20 = arith.mulf %18, %19 : vector<64x256xf32>
    %21 = arith.select %17, %8, %20 : vector<64x256xi1>, vector<64x256xf32>
    %cst_9 = arith.constant 1.000000e+00 : f32
    %22 = vector.broadcast %cst_9 : f32 to vector<64x256xf32>
    %23 = arith.addf %22, %15 : vector<64x256xf32>
    %24 = tpu.reciprocal %23 {approx = true} : vector<64x256xf32> -> vector<64x256xf32>
    %25 = arith.mulf %15, %24 : vector<64x256xf32>
    %c0_10 = arith.constant 0 : index
    %c0_11 = arith.constant 0 : index
    %26 = vector.load %arg3[%c0_10, %c0_11] : memref<544x64xbf16, #tpu.memory_space<vmem>>, vector<64x64xbf16>
    %27 = arith.truncf %21 : vector<64x256xf32> to vector<64x256xbf16>
    %cst_12 = arith.constant dense<0.000000e+00> : vector<64x256xf32>
    %28 = tpu.matmul %26, %27, %cst_12 {dimension_numbers = #tpu.dot_dimension_numbers<[1], [0], [0], [1], [0, 0, 1, 1], [], []>} : vector<64x64xbf16>, vector<64x256xbf16>, vector<64x256xf32> -> vector<64x256xf32>
    %29 = vector.extract_strided_slice %1 {offsets = [0, 1], sizes = [64, 1], strides = [1, 1]} : vector<64x9xf32> to vector<64x1xf32>
    %30 = vector.broadcast %29 : vector<64x1xf32> to vector<64x256xf32>
    %31 = arith.addf %28, %30 : vector<64x256xf32>
    %cst_13 = arith.constant 1.000000e+02 : f32
    %32 = vector.broadcast %cst_13 : f32 to vector<64x256xf32>
    %33 = arith.mulf %32, %31 : vector<64x256xf32>
    %cst_14 = arith.constant 2.000000e+01 : f32
    %34 = vector.broadcast %cst_14 : f32 to vector<64x256xf32>
    %35 = arith.minimumf %33, %34 : vector<64x256xf32>
    %36 = math.exp %35 : vector<64x256xf32>
    %cst_15 = arith.constant 2.000000e+01 : f32
    %37 = vector.broadcast %cst_15 : f32 to vector<64x256xf32>
    %38 = arith.cmpf ogt, %33, %37 : vector<64x256xf32>
    %39 = math.log1p %36 : vector<64x256xf32>
    %cst_16 = arith.constant 0.00999999977 : f32
    %40 = vector.broadcast %cst_16 : f32 to vector<64x256xf32>
    %41 = arith.mulf %39, %40 : vector<64x256xf32>
    %42 = arith.select %38, %31, %41 : vector<64x256xi1>, vector<64x256xf32>
    %cst_17 = arith.constant 1.000000e+00 : f32
    %43 = vector.broadcast %cst_17 : f32 to vector<64x256xf32>
    %44 = arith.addf %43, %36 : vector<64x256xf32>
    %45 = tpu.reciprocal %44 {approx = true} : vector<64x256xf32> -> vector<64x256xf32>
    %46 = arith.mulf %36, %45 : vector<64x256xf32>
    %c64 = arith.constant 64 : index
    %c0_18 = arith.constant 0 : index
    %47 = vector.load %arg3[%c64, %c0_18] : memref<544x64xbf16, #tpu.memory_space<vmem>>, vector<64x64xbf16>
    %48 = arith.truncf %42 : vector<64x256xf32> to vector<64x256xbf16>
    %cst_19 = arith.constant dense<0.000000e+00> : vector<64x256xf32>
    %49 = tpu.matmul %47, %48, %cst_19 {dimension_numbers = #tpu.dot_dimension_numbers<[1], [0], [0], [1], [0, 0, 1, 1], [], []>} : vector<64x64xbf16>, vector<64x256xbf16>, vector<64x256xf32> -> vector<64x256xf32>
    %50 = arith.addf %49, %10 : vector<64x256xf32>
    %51 = vector.extract_strided_slice %1 {offsets = [0, 2], sizes = [64, 1], strides = [1, 1]} : vector<64x9xf32> to vector<64x1xf32>
    %52 = vector.broadcast %51 : vector<64x1xf32> to vector<64x256xf32>
    %53 = arith.addf %50, %52 : vector<64x256xf32>
    %cst_20 = arith.constant 1.000000e+02 : f32
    %54 = vector.broadcast %cst_20 : f32 to vector<64x256xf32>
    %55 = arith.mulf %54, %53 : vector<64x256xf32>
    %cst_21 = arith.constant 2.000000e+01 : f32
    %56 = vector.broadcast %cst_21 : f32 to vector<64x256xf32>
    %57 = arith.minimumf %55, %56 : vector<64x256xf32>
    %58 = math.exp %57 : vector<64x256xf32>
    %cst_22 = arith.constant 2.000000e+01 : f32
    %59 = vector.broadcast %cst_22 : f32 to vector<64x256xf32>
    %60 = arith.cmpf ogt, %55, %59 : vector<64x256xf32>
    %61 = math.log1p %58 : vector<64x256xf32>
    %cst_23 = arith.constant 0.00999999977 : f32
    %62 = vector.broadcast %cst_23 : f32 to vector<64x256xf32>
    %63 = arith.mulf %61, %62 : vector<64x256xf32>
    %64 = arith.select %60, %53, %63 : vector<64x256xi1>, vector<64x256xf32>
    %cst_24 = arith.constant 1.000000e+00 : f32
    %65 = vector.broadcast %cst_24 : f32 to vector<64x256xf32>
    %66 = arith.addf %65, %58 : vector<64x256xf32>
    %67 = tpu.reciprocal %66 {approx = true} : vector<64x256xf32> -> vector<64x256xf32>
    %68 = arith.mulf %58, %67 : vector<64x256xf32>
    %c128 = arith.constant 128 : index
    %c0_25 = arith.constant 0 : index
    %69 = vector.load %arg3[%c128, %c0_25] : memref<544x64xbf16, #tpu.memory_space<vmem>>, vector<64x64xbf16>
    %70 = arith.truncf %64 : vector<64x256xf32> to vector<64x256xbf16>
    %cst_26 = arith.constant dense<0.000000e+00> : vector<64x256xf32>
    %71 = tpu.matmul %69, %70, %cst_26 {dimension_numbers = #tpu.dot_dimension_numbers<[1], [0], [0], [1], [0, 0, 1, 1], [], []>} : vector<64x64xbf16>, vector<64x256xbf16>, vector<64x256xf32> -> vector<64x256xf32>
    %72 = vector.extract_strided_slice %1 {offsets = [0, 3], sizes = [64, 1], strides = [1, 1]} : vector<64x9xf32> to vector<64x1xf32>
    %73 = vector.broadcast %72 : vector<64x1xf32> to vector<64x256xf32>
    %74 = arith.addf %71, %73 : vector<64x256xf32>
    %cst_27 = arith.constant 1.000000e+02 : f32
    %75 = vector.broadcast %cst_27 : f32 to vector<64x256xf32>
    %76 = arith.mulf %75, %74 : vector<64x256xf32>
    %cst_28 = arith.constant 2.000000e+01 : f32
    %77 = vector.broadcast %cst_28 : f32 to vector<64x256xf32>
    %78 = arith.minimumf %76, %77 : vector<64x256xf32>
    %79 = math.exp %78 : vector<64x256xf32>
    %cst_29 = arith.constant 2.000000e+01 : f32
    %80 = vector.broadcast %cst_29 : f32 to vector<64x256xf32>
    %81 = arith.cmpf ogt, %76, %80 : vector<64x256xf32>
    %82 = math.log1p %79 : vector<64x256xf32>
    %cst_30 = arith.constant 0.00999999977 : f32
    %83 = vector.broadcast %cst_30 : f32 to vector<64x256xf32>
    %84 = arith.mulf %82, %83 : vector<64x256xf32>
    %85 = arith.select %81, %74, %84 : vector<64x256xi1>, vector<64x256xf32>
    %cst_31 = arith.constant 1.000000e+00 : f32
    %86 = vector.broadcast %cst_31 : f32 to vector<64x256xf32>
    %87 = arith.addf %86, %79 : vector<64x256xf32>
    %88 = tpu.reciprocal %87 {approx = true} : vector<64x256xf32> -> vector<64x256xf32>
    %89 = arith.mulf %79, %88 : vector<64x256xf32>
    %c192 = arith.constant 192 : index
    %c0_32 = arith.constant 0 : index
    %90 = vector.load %arg3[%c192, %c0_32] : memref<544x64xbf16, #tpu.memory_space<vmem>>, vector<48x64xbf16>
    %91 = arith.truncf %85 : vector<64x256xf32> to vector<64x256xbf16>
    %cst_33 = arith.constant dense<0.000000e+00> : vector<48x256xf32>
    %92 = tpu.matmul %90, %91, %cst_33 {dimension_numbers = #tpu.dot_dimension_numbers<[1], [0], [0], [1], [0, 0, 1, 1], [], []>} : vector<48x64xbf16>, vector<64x256xbf16>, vector<48x256xf32> -> vector<48x256xf32>
    %93 = vector.extract_strided_slice %1 {offsets = [0, 4], sizes = [48, 1], strides = [1, 1]} : vector<64x9xf32> to vector<48x1xf32>
    %94 = vector.broadcast %93 : vector<48x1xf32> to vector<48x256xf32>
    %95 = arith.addf %92, %94 : vector<48x256xf32>
    %96 = vector.extract_strided_slice %95 {offsets = [0, 0], sizes = [1, 256], strides = [1, 1]} : vector<48x256xf32> to vector<1x256xf32>
    %97 = vector.extract_strided_slice %1 {offsets = [0, 8], sizes = [64, 1], strides = [1, 1]} : vector<64x9xf32> to vector<64x1xf32>
    %98 = vector.broadcast %97 : vector<64x1xf32> to vector<64x256xf32>
    %99 = arith.mulf %98, %89 : vector<64x256xf32>
    %c240 = arith.constant 240 : index
    %c0_34 = arith.constant 0 : index
    %100 = vector.load %arg3[%c240, %c0_34] : memref<544x64xbf16, #tpu.memory_space<vmem>>, vector<64x64xbf16>
    %101 = arith.truncf %99 : vector<64x256xf32> to vector<64x256xbf16>
    %cst_35 = arith.constant dense<0.000000e+00> : vector<64x256xf32>
    %102 = tpu.matmul %100, %101, %cst_35 {dimension_numbers = #tpu.dot_dimension_numbers<[1], [0], [0], [1], [0, 0, 1, 1], [], []>} : vector<64x64xbf16>, vector<64x256xbf16>, vector<64x256xf32> -> vector<64x256xf32>
    %103 = arith.mulf %102, %68 : vector<64x256xf32>
    %c304 = arith.constant 304 : index
    %c0_36 = arith.constant 0 : index
    %104 = vector.load %arg3[%c304, %c0_36] : memref<544x64xbf16, #tpu.memory_space<vmem>>, vector<80x64xbf16>
    %105 = arith.truncf %103 : vector<64x256xf32> to vector<64x256xbf16>
    %cst_37 = arith.constant dense<0.000000e+00> : vector<80x256xf32>
    %106 = tpu.matmul %104, %105, %cst_37 {dimension_numbers = #tpu.dot_dimension_numbers<[1], [0], [0], [1], [0, 0, 1, 1], [], []>} : vector<80x64xbf16>, vector<64x256xbf16>, vector<80x256xf32> -> vector<80x256xf32>
    %107 = vector.extract_strided_slice %106 {offsets = [0, 0], sizes = [64, 256], strides = [1, 1]} : vector<80x256xf32> to vector<64x256xf32>
    %108 = arith.mulf %107, %46 : vector<64x256xf32>
    %c384 = arith.constant 384 : index
    %c0_38 = arith.constant 0 : index
    %109 = vector.load %arg3[%c384, %c0_38] : memref<544x64xbf16, #tpu.memory_space<vmem>>, vector<64x64xbf16>
    %110 = arith.truncf %108 : vector<64x256xf32> to vector<64x256xbf16>
    %cst_39 = arith.constant dense<0.000000e+00> : vector<64x256xf32>
    %111 = tpu.matmul %109, %110, %cst_39 {dimension_numbers = #tpu.dot_dimension_numbers<[1], [0], [0], [1], [0, 0, 1, 1], [], []>} : vector<64x64xbf16>, vector<64x256xbf16>, vector<64x256xf32> -> vector<64x256xf32>
    %112 = arith.mulf %111, %25 : vector<64x256xf32>
    %c448 = arith.constant 448 : index
    %c0_40 = arith.constant 0 : index
    %113 = vector.load %arg3[%c448, %c0_40] : memref<544x64xbf16, #tpu.memory_space<vmem>>, vector<16x64xbf16>
    %114 = arith.truncf %112 : vector<64x256xf32> to vector<64x256xbf16>
    %cst_41 = arith.constant dense<0.000000e+00> : vector<16x256xf32>
    %115 = tpu.matmul %113, %114, %cst_41 {dimension_numbers = #tpu.dot_dimension_numbers<[1], [0], [0], [1], [0, 0, 1, 1], [], []>} : vector<16x64xbf16>, vector<64x256xbf16>, vector<16x256xf32> -> vector<16x256xf32>
    %116 = vector.extract_strided_slice %106 {offsets = [64, 0], sizes = [16, 256], strides = [1, 1]} : vector<80x256xf32> to vector<16x256xf32>
    %117 = arith.addf %115, %116 : vector<16x256xf32>
    %c0_42 = arith.constant 0 : index
    %c0_43 = arith.constant 0 : index
    %118 = vector.load %arg4[%c0_42, %c0_43] : memref<64x16xbf16, #tpu.memory_space<vmem>>, vector<64x16xbf16>
    %119 = arith.truncf %117 : vector<16x256xf32> to vector<16x256xbf16>
    %cst_44 = arith.constant dense<0.000000e+00> : vector<64x256xf32>
    %120 = tpu.matmul %118, %119, %cst_44 {dimension_numbers = #tpu.dot_dimension_numbers<[1], [0], [0], [1], [0, 0, 1, 1], [], []>} : vector<64x16xbf16>, vector<16x256xbf16>, vector<64x256xf32> -> vector<64x256xf32>
    %121 = arith.addf %9, %120 : vector<64x256xf32>
    %c0_45 = arith.constant 0 : index
    %c0_46 = arith.constant 0 : index
    %122 = vector.load %arg5[%c0_45, %c0_46] : memref<64x48xbf16, #tpu.memory_space<vmem>>, vector<64x48xbf16>
    %123 = arith.truncf %95 : vector<48x256xf32> to vector<48x256xbf16>
    %cst_47 = arith.constant dense<0.000000e+00> : vector<64x256xf32>
    %124 = tpu.matmul %122, %123, %cst_47 {dimension_numbers = #tpu.dot_dimension_numbers<[1], [0], [0], [1], [0, 0, 1, 1], [], []>} : vector<64x48xbf16>, vector<48x256xbf16>, vector<64x256xf32> -> vector<64x256xf32>
    %125 = arith.addf %121, %124 : vector<64x256xf32>
    %126 = vector.extract_strided_slice %1 {offsets = [0, 5], sizes = [64, 1], strides = [1, 1]} : vector<64x9xf32> to vector<64x1xf32>
    %127 = vector.broadcast %126 : vector<64x1xf32> to vector<64x256xf32>
    %128 = arith.addf %125, %127 : vector<64x256xf32>
    %cst_48 = arith.constant 0.000000e+00 : f32
    %129 = vector.broadcast %cst_48 : f32 to vector<64x256xf32>
    %130 = arith.maximumf %128, %129 : vector<64x256xf32>
    %c464 = arith.constant 464 : index
    %c0_49 = arith.constant 0 : index
    %131 = vector.load %arg3[%c464, %c0_49] : memref<544x64xbf16, #tpu.memory_space<vmem>>, vector<64x64xbf16>
    %132 = arith.truncf %130 : vector<64x256xf32> to vector<64x256xbf16>
    %cst_50 = arith.constant dense<0.000000e+00> : vector<64x256xf32>
    %133 = tpu.matmul %131, %132, %cst_50 {dimension_numbers = #tpu.dot_dimension_numbers<[1], [0], [0], [1], [0, 0, 1, 1], [], []>} : vector<64x64xbf16>, vector<64x256xbf16>, vector<64x256xf32> -> vector<64x256xf32>
    %134 = vector.extract_strided_slice %1 {offsets = [0, 6], sizes = [64, 1], strides = [1, 1]} : vector<64x9xf32> to vector<64x1xf32>
    %135 = vector.broadcast %134 : vector<64x1xf32> to vector<64x256xf32>
    %136 = arith.addf %133, %135 : vector<64x256xf32>
    %cst_51 = arith.constant 0.000000e+00 : f32
    %137 = vector.broadcast %cst_51 : f32 to vector<64x256xf32>
    %138 = arith.maximumf %136, %137 : vector<64x256xf32>
    %c528 = arith.constant 528 : index
    %c0_52 = arith.constant 0 : index
    %139 = vector.load %arg3[%c528, %c0_52] : memref<544x64xbf16, #tpu.memory_space<vmem>>, vector<16x64xbf16>
    %140 = arith.truncf %138 : vector<64x256xf32> to vector<64x256xbf16>
    %cst_53 = arith.constant dense<0.000000e+00> : vector<16x256xf32>
    %141 = tpu.matmul %139, %140, %cst_53 {dimension_numbers = #tpu.dot_dimension_numbers<[1], [0], [0], [1], [0, 0, 1, 1], [], []>} : vector<16x64xbf16>, vector<64x256xbf16>, vector<16x256xf32> -> vector<16x256xf32>
    %142 = vector.extract_strided_slice %1 {offsets = [0, 7], sizes = [16, 1], strides = [1, 1]} : vector<64x9xf32> to vector<16x1xf32>
    %143 = vector.broadcast %142 : vector<16x1xf32> to vector<16x256xf32>
    %144 = arith.addf %141, %143 : vector<16x256xf32>
    %145 = math.tanh %144 : vector<16x256xf32>
    %146 = vector.extract_strided_slice %145 {offsets = [0, 0], sizes = [3, 256], strides = [1, 1]} : vector<16x256xf32> to vector<3x256xf32>
    %147 = tpu.concatenate %146, %96 in 0 : vector<3x256xf32>, vector<1x256xf32> -> vector<4x256xf32>
    %c0_54 = arith.constant 0 : index
    %c0_55 = arith.constant 0 : index
    %148 = vector.load %arg7[%c0_54, %c0_55] : memref<4x256xf32, #tpu.memory_space<vmem>>, vector<4x256xf32>
    tpu.vector_store %arg7[%c0_54, %c0_55], %147 {strides = array<i32>} : memref<4x256xf32, #tpu.memory_space<vmem>>, vector<4x256xf32>,
    return
  }
  func.func @transform_0(%arg0: i32) -> (i32, i32) {
    %c0_i32 = arith.constant 0 : i32
    %c0_i32_0 = arith.constant 0 : i32
    return %c0_i32, %arg0 : i32, i32
  }
  func.func @transform_1(%arg0: i32) -> (i32, i32) {
    %c0_i32 = arith.constant 0 : i32
    %c0_i32_0 = arith.constant 0 : i32
    %c0_i32_1 = arith.constant 0 : i32
    return %c0_i32, %c0_i32_0 : i32, i32
  }
  func.func @transform_2(%arg0: i32) -> (i32, i32) {
    %c0_i32 = arith.constant 0 : i32
    %c0_i32_0 = arith.constant 0 : i32
    %c0_i32_1 = arith.constant 0 : i32
    return %c0_i32, %c0_i32_0 : i32, i32
  }
  func.func @transform_3(%arg0: i32) -> (i32, i32) {
    %c0_i32 = arith.constant 0 : i32
    %c0_i32_0 = arith.constant 0 : i32
    %c0_i32_1 = arith.constant 0 : i32
    return %c0_i32, %c0_i32_0 : i32, i32
  }
  func.func @transform_4(%arg0: i32) -> (i32, i32) {
    %c0_i32 = arith.constant 0 : i32
    %c0_i32_0 = arith.constant 0 : i32
    %c0_i32_1 = arith.constant 0 : i32
    return %c0_i32, %c0_i32_0 : i32, i32
  }
  func.func @transform_5(%arg0: i32) -> (i32, i32) {
    %c0_i32 = arith.constant 0 : i32
    %c0_i32_0 = arith.constant 0 : i32
    %c0_i32_1 = arith.constant 0 : i32
    return %c0_i32, %c0_i32_0 : i32, i32
  }
  func.func @transform_6(%arg0: i32) -> (i32, i32) {
    %c0_i32 = arith.constant 0 : i32
    %c0_i32_0 = arith.constant 0 : i32
    return %c0_i32, %arg0 : i32, i32
  }
}

</mosaic_0001>

<llo_original>
// kernel: tpu_custom_call.1
$region0: #{tpu_custom_call.1}
  #allocation0 [shape = 'u32[]', space=smem, size = 0x4, offset = 0x4, fixed_abs, tag = 'smem constant byte address 0x4 - core index']
  #allocation1 [shape = 'u32[144,128]{1,0:T(1,128)}', space=vmem, size = 0x12000, scoped, tag = 'internal scratch']
  %s0 = inlined_call_operand.vmem [shape: f32[8,2048], index: 0, kind: input, shape index: {}]
  %s1 = inlined_call_operand.vmem [shape: bf16[192,8], index: 1, kind: input, shape index: {}]
  %s2 = inlined_call_operand.vmem [shape: bf16[544,64], index: 2, kind: input, shape index: {}]
  %s3 = inlined_call_operand.vmem [shape: bf16[64,16], index: 3, kind: input, shape index: {}]
  %s4 = inlined_call_operand.vmem [shape: bf16[64,48], index: 4, kind: input, shape index: {}]
  %s5 = inlined_call_operand.vmem [shape: f32[64,9], index: 5, kind: input, shape index: {}]
  %s6 = inlined_call_operand.hbm [shape: f32[4,2048], index: 6, kind: output, shape index: {}]
  %s7 = sld [smem:[#allocation0]]
  $region57: #{tpu_custom_call.1} parent=0
    _
  %s9 = ssub.s32 1, %s7
  %s10 = scalar_select 0, %s9, %s7
  $region1: #{tpu_custom_call.1} parent=0
    #allocation2 [shape = 'u8[8192]{0}', space=vmem, size = 0x2000, scoped, tag = 'output window, operand 0']
    #allocation3 [shape = 's32[2]{0}', space=sflag, size = 0x8, scoped, tag = 'scoped memory for tpu_custom_call.1']
    %11 = vsyncpa [#allocation3], 0
    %s12 = scalar_lea.sflag [#allocation3], 1
    %13 = vsyncpa %s12, 0
    loop: start=0, step=1, limit=10
    $region2: #{tpu_custom_call.1} parent=1 // loop_pre_header
      _
    $region3: #{tpu_custom_call.1} parent=1 // loop_header
      %s15 = sphi 0, %s19
      %p16 = scmp.ge.s32.totalorder %s15, 10
      %s25 = sphi 0, %s27
      %s28 = sphi 0, %s25
      %s29 = sphi 0, %s28
      %s45 = sphi 0, %s29
      %s49 = sphi 0, %s49
      %s51 = sphi 0, %s49
      %s52 = sphi 0, %s51
      %s66 = sphi 0, %s52
      %s70 = sphi 0, %s70
      %s72 = sphi 0, %s70
      %s73 = sphi 0, %s72
      %s87 = sphi 0, %s73
      %s91 = sphi 0, %s91
      %s93 = sphi 0, %s91
      %s94 = sphi 0, %s93
      %s108 = sphi 0, %s94
      %s112 = sphi 0, %s112
      %s114 = sphi 0, %s112
      %s115 = sphi 0, %s114
      %s129 = sphi 0, %s115
      %s133 = sphi 0, %s133
      %s135 = sphi 0, %s133
      %s136 = sphi 0, %s135
      %s150 = sphi 0, %s136
      %s156 = sphi 0, %s158
      %s159 = sphi 0, %s156
      %s160 = sphi 0, %s159
      %s176 = sphi 0, %s160
    $region4: #{tpu_custom_call.1} parent=1 // loop_header_branch
      %18 = sbr.rel (%p16) target = $region8
    $region5: #{tpu_custom_call.1} parent=1 // loop_body
      %s20 = ssub.s32 %s15, 1
      %s21 = ssub.s32 %s15, 2
      %s22 = sadd.s32 %s15, 1
      %s23 = ssub.s32 %s15, %s22
      %p24 = scmp.eq.s32.totalorder %s23, 0
      %s26 = sadd.s32 %s25, 1
      %s27 = scalar_select %p24, %s25, %s26
      %p30 = pneg %p24
      %p31 = scmp.eq.s32.totalorder %s15, 7
      %p32 = por %p30, %p31
      %p33 = scmp.ne.s32.totalorder %s25, %s28
      %p34 = scmp.eq.s32.totalorder %s15, 0
      %p35 = por %p33, %p34
      %p36 = scmp.ne.s32.totalorder %s25, %s28
      %p37 = scmp.eq.s32.totalorder %s20, 7
      %p38 = por %p36, %p37
      %p39 = scmp.ne.s32.totalorder %s28, %s29
      %p40 = scmp.eq.s32.totalorder %s20, 0
      %p41 = por %p39, %p40
      %p42 = scmp.ne.s32.totalorder %s28, %s29
      %p43 = scmp.eq.s32.totalorder %s21, 7
      %p44 = por %p42, %p43
      %p46 = scmp.ne.s32.totalorder %s29, %s45
      %p47 = scmp.eq.s32.totalorder %s21, 0
      %p48 = por %p46, %p47
      %s50 = sadd.s32 %s49, 1
      %p53 = scmp.eq.s32.totalorder %s15, 7
      %p54 = scmp.ne.s32.totalorder %s49, %s51
      %p55 = scmp.eq.s32.totalorder %s15, 0
      %p56 = por %p54, %p55
      %p57 = scmp.ne.s32.totalorder %s49, %s51
      %p58 = scmp.eq.s32.totalorder %s20, 7
      %p59 = por %p57, %p58
      %p60 = scmp.ne.s32.totalorder %s51, %s52
      %p61 = scmp.eq.s32.totalorder %s20, 0
      %p62 = por %p60, %p61
      %p63 = scmp.ne.s32.totalorder %s51, %s52
      %p64 = scmp.eq.s32.totalorder %s21, 7
      %p65 = por %p63, %p64
      %p67 = scmp.ne.s32.totalorder %s52, %s66
      %p68 = scmp.eq.s32.totalorder %s21, 0
      %p69 = por %p67, %p68
      %s71 = sadd.s32 %s70, 1
      %p74 = scmp.eq.s32.totalorder %s15, 7
      %p75 = scmp.ne.s32.totalorder %s70, %s72
      %p76 = scmp.eq.s32.totalorder %s15, 0
      %p77 = por %p75, %p76
      %p78 = scmp.ne.s32.totalorder %s70, %s72
      %p79 = scmp.eq.s32.totalorder %s20, 7
      %p80 = por %p78, %p79
      %p81 = scmp.ne.s32.totalorder %s72, %s73
      %p82 = scmp.eq.s32.totalorder %s20, 0
      %p83 = por %p81, %p82
      %p84 = scmp.ne.s32.totalorder %s72, %s73
      %p85 = scmp.eq.s32.totalorder %s21, 7
      %p86 = por %p84, %p85
      %p88 = scmp.ne.s32.totalorder %s73, %s87
      %p89 = scmp.eq.s32.totalorder %s21, 0
      %p90 = por %p88, %p89
      %s92 = sadd.s32 %s91, 1
      %p95 = scmp.eq.s32.totalorder %s15, 7
      %p96 = scmp.ne.s32.totalorder %s91, %s93
      %p97 = scmp.eq.s32.totalorder %s15, 0
      %p98 = por %p96, %p97
      %p99 = scmp.ne.s32.totalorder %s91, %s93
      %p100 = scmp.eq.s32.totalorder %s20, 7
      %p101 = por %p99, %p100
      %p102 = scmp.ne.s32.totalorder %s93, %s94
      %p103 = scmp.eq.s32.totalorder %s20, 0
      %p104 = por %p102, %p103
      %p105 = scmp.ne.s32.totalorder %s93, %s94
      %p106 = scmp.eq.s32.totalorder %s21, 7
      %p107 = por %p105, %p106
      %p109 = scmp.ne.s32.totalorder %s94, %s108
      %p110 = scmp.eq.s32.totalorder %s21, 0
      %p111 = por %p109, %p110
      %s113 = sadd.s32 %s112, 1
      %p116 = scmp.eq.s32.totalorder %s15, 7
      %p117 = scmp.ne.s32.totalorder %s112, %s114
      %p118 = scmp.eq.s32.totalorder %s15, 0
      %p119 = por %p117, %p118
      %p120 = scmp.ne.s32.totalorder %s112, %s114
      %p121 = scmp.eq.s32.totalorder %s20, 7
      %p122 = por %p120, %p121
      %p123 = scmp.ne.s32.totalorder %s114, %s115
      %p124 = scmp.eq.s32.totalorder %s20, 0
      %p125 = por %p123, %p124
      %p126 = scmp.ne.s32.totalorder %s114, %s115
      %p127 = scmp.eq.s32.totalorder %s21, 7
      %p128 = por %p126, %p127
      %p130 = scmp.ne.s32.totalorder %s115, %s129
      %p131 = scmp.eq.s32.totalorder %s21, 0
      %p132 = por %p130, %p131
      %s134 = sadd.s32 %s133, 1
      %p137 = scmp.eq.s32.totalorder %s15, 7
      %p138 = scmp.ne.s32.totalorder %s133, %s135
      %p139 = scmp.eq.s32.totalorder %s15, 0
      %p140 = por %p138, %p139
      %p141 = scmp.ne.s32.totalorder %s133, %s135
      %p142 = scmp.eq.s32.totalorder %s20, 7
      %p143 = por %p141, %p142
      %p144 = scmp.ne.s32.totalorder %s135, %s136
      %p145 = scmp.eq.s32.totalorder %s20, 0
      %p146 = por %p144, %p145
      %p147 = scmp.ne.s32.totalorder %s135, %s136
      %p148 = scmp.eq.s32.totalorder %s21, 7
      %p149 = por %p147, %p148
      %p151 = scmp.ne.s32.totalorder %s136, %s150
      %p152 = scmp.eq.s32.totalorder %s21, 0
      %p153 = por %p151, %p152
      %s154 = ssub.s32 %s15, %s22
      %p155 = scmp.eq.s32.totalorder %s154, 0
      %s157 = sadd.s32 %s156, 1
      %s158 = scalar_select %p155, %s156, %s157
      %p161 = pneg %p155
      %p162 = scmp.eq.s32.totalorder %s15, 7
      %p163 = por %p161, %p162
      %p164 = scmp.ne.s32.totalorder %s156, %s159
      %p165 = scmp.eq.s32.totalorder %s15, 0
      %p166 = por %p164, %p165
      %p167 = scmp.ne.s32.totalorder %s156, %s159
      %p168 = scmp.eq.s32.totalorder %s20, 7
      %p169 = por %p167, %p168
      %p170 = scmp.ne.s32.totalorder %s159, %s160
      %p171 = scmp.eq.s32.totalorder %s20, 0
      %p172 = por %p170, %p171
      %p173 = scmp.ne.s32.totalorder %s159, %s160
      %p174 = scmp.eq.s32.totalorder %s21, 7
      %p175 = por %p173, %p174
      %p177 = scmp.ne.s32.totalorder %s160, %s176
      %p178 = scmp.eq.s32.totalorder %s21, 0
      %p179 = por %p177, %p178
      %p180 = scmp.le.s32.totalorder 1, %s15
      %p181 = scmp.lt.s32.totalorder %s15, 9
      %p182 = pnand %p180, %p181
      %p183 = pneg %p182
      // Predicated region
      $region9: #{tpu_custom_call.1} parent=5 // pred_check
        _
      $region10: #{tpu_custom_call.1} parent=5 // pred_check_branch
        %185 = sbr.rel (%p182) target = $region12
      $region11: #{tpu_custom_call.1} parent=5 // pred_region
        %s186 = ssub.s32 %s15, 1
        // Predicated region
        $region13: #{tpu_custom_call.1} parent=11 // pred_check
          %p187 = pneg %p62
        $region14: #{tpu_custom_call.1} parent=11 // pred_check_branch
          %189 = sbr.rel (%p187) target = $region16
        $region15: #{tpu_custom_call.1} parent=11 // pred_region
          _
        $region16: #{tpu_custom_call.1} parent=11 // pred_fallthru
          _
        // Predicated region
        $region17: #{tpu_custom_call.1} parent=11 // pred_check
          %p190 = pneg %p83
        $region18: #{tpu_custom_call.1} parent=11 // pred_check_branch
          %192 = sbr.rel (%p190) target = $region20
        $region19: #{tpu_custom_call.1} parent=11 // pred_region
          _
        $region20: #{tpu_custom_call.1} parent=11 // pred_fallthru
          _
        // Predicated region
        $region21: #{tpu_custom_call.1} parent=11 // pred_check
          %p193 = pneg %p104
        $region22: #{tpu_custom_call.1} parent=11 // pred_check_branch
          %195 = sbr.rel (%p193) target = $region24
        $region23: #{tpu_custom_call.1} parent=11 // pred_region
          _
        $region24: #{tpu_custom_call.1} parent=11 // pred_fallthru
          _
        // Predicated region
        $region25: #{tpu_custom_call.1} parent=11 // pred_check
          %p196 = pneg %p125
        $region26: #{tpu_custom_call.1} parent=11 // pred_check_branch
          %198 = sbr.rel (%p196) target = $region28
        $region27: #{tpu_custom_call.1} parent=11 // pred_region
          _
        $region28: #{tpu_custom_call.1} parent=11 // pred_fallthru
          _
        // Predicated region
        $region29: #{tpu_custom_call.1} parent=11 // pred_check
          %p199 = pneg %p146
        $region30: #{tpu_custom_call.1} parent=11 // pred_check_branch
          %201 = sbr.rel (%p199) target = $region32
        $region31: #{tpu_custom_call.1} parent=11 // pred_region
          _
        $region32: #{tpu_custom_call.1} parent=11 // pred_fallthru
          _
      $region12: #{tpu_custom_call.1} parent=5 // pred_fallthru
        _
      %p202 = scmp.lt.s32.totalorder %s15, 8
      // Predicated region
      $region33: #{tpu_custom_call.1} parent=5 // pred_check
        %p203 = pneg %p202
      $region34: #{tpu_custom_call.1} parent=5 // pred_check_branch
        %205 = sbr.rel (%p203) target = $region36
      $region35: #{tpu_custom_call.1} parent=5 // pred_region
        // Predicated region
        $region37: #{tpu_custom_call.1} parent=35 // pred_check
          %p206 = pneg %p35
        $region38: #{tpu_custom_call.1} parent=35 // pred_check_branch
          %208 = sbr.rel (%p206) target = $region40
        $region39: #{tpu_custom_call.1} parent=35 // pred_region
          %s209 = smul.u32 2, %s15
          %p210 = scmp.lt.s32.totalorder %s209, 15
          %s211 = scalar_select %p210, %s209, 15
          %s212 = smul.addr %s211, 8
          %s213 = scalar_lea.vmem %s0, %s212
          %s214 = smul.u32 2, %s15
        $region40: #{tpu_custom_call.1} parent=35 // pred_fallthru
          _
      $region36: #{tpu_custom_call.1} parent=5 // pred_fallthru
        _
      %p215 = scmp.le.s32.totalorder 1, %s15
      %p216 = scmp.lt.s32.totalorder %s15, 9
      %p217 = pnand %p215, %p216
      %p218 = pneg %p217
      // Predicated region
      $region41: #{tpu_custom_call.1} parent=5 // pred_check
        _
      $region42: #{tpu_custom_call.1} parent=5 // pred_check_branch
        %220 = sbr.rel (%p217) target = $region44
      $region43: #{tpu_custom_call.1} parent=5 // pred_region
        %s221 = ssub.s32 %s15, 1
        %s222 = smul.u32 2, %s20
        %p223 = scmp.lt.s32.totalorder %s222, 15
        %s224 = scalar_select %p223, %s222, 15
        %s225 = smul.addr %s224, 8
        %s226 = scalar_lea.vmem %s0, %s225
        %p227 = pneg %p41
        %p228 = pneg %p38
        %p229 = pneg %p62
        %p230 = pneg %p59
        %p231 = pneg %p83
        %p232 = pneg %p80
        %p233 = pneg %p104
        %p234 = pneg %p101
        %p235 = pneg %p125
        %p236 = pneg %p122
        %p237 = pneg %p146
        %p238 = pneg %p143
        %p239 = pneg %p172
        %p240 = pneg %p169
        %s241 = sand.u32 %s159, 1
        %s242 = scalar_lea.sflag [#allocation3], %s241
        %s243 = sand.u32 %s159, 1
        %s244 = smul.addr %s243, 8
        %s245 = scalar_lea.vmem [#allocation2], %s244
        %s246 = smul.u32 2, %s20
        %p247 = scmp.lt.s32.totalorder %s246, 15
        %s248 = scalar_select %p247, %s246, 15
        %s249 = smul.addr %s248, 8
        %s250 = scalar_lea.vmem %s0, %s249
        %s251 = smul.u32 2, %s20
        %s252 = smul.u32 2, %s20
        %v254 = vld [vmem:[%s250] sm:$0xff]
        %v255 = vld [vmem:[%s250 + $0x8] sm:$0xff]
        %v256 = vld [vmem:[%s5] sm:$0xff]
        %v257 = vld [vmem:[%s5 + $0x8] sm:$0xff]
        %v258 = vld [vmem:[%s5 + $0x10] sm:$0xff]
        %v259 = vld [vmem:[%s5 + $0x18] sm:$0xff]
        %v260 = vld [vmem:[%s5 + $0x20] sm:$0xff]
        %v261 = vld [vmem:[%s5 + $0x28] sm:$0xff]
        %v262 = vld [vmem:[%s5 + $0x30] sm:$0xff]
        %v263 = vld [vmem:[%s5 + $0x38] sm:$0xff]
        %v264 = vld [vmem:[%s1] sm:$0xf]
        %v265 = vld [vmem:[%s1 + $0x4] sm:$0xf]
        %v266 = vld [vmem:[%s1 + $0x8] sm:$0xf]
        %v267 = vld [vmem:[%s1 + $0xc] sm:$0xf]
        %v268 = vld [vmem:[%s1 + $0x10] sm:$0xf]
        %v269 = vld [vmem:[%s1 + $0x14] sm:$0xf]
        %v270 = vld [vmem:[%s1 + $0x18] sm:$0xf]
        %v271 = vld [vmem:[%s1 + $0x1c] sm:$0xf]
        %v272 = vld [vmem:[%s1 + $0x20] sm:$0xf]
        %v273 = vld [vmem:[%s1 + $0x24] sm:$0xf]
        %v274 = vld [vmem:[%s1 + $0x28] sm:$0xf]
        %v275 = vld [vmem:[%s1 + $0x2c] sm:$0xf]
        %v276 = vld [vmem:[%s1 + $0x30] sm:$0xf]
        %v277 = vld [vmem:[%s1 + $0x34] sm:$0xf]
        %v278 = vld [vmem:[%s1 + $0x38] sm:$0xf]
        %v279 = vld [vmem:[%s1 + $0x3c] sm:$0xf]
        %v280 = vld [vmem:[%s1 + $0x40] sm:$0xf]
        %v281 = vld [vmem:[%s1 + $0x44] sm:$0xf]
        %v282 = vld [vmem:[%s1 + $0x48] sm:$0xf]
        %v283 = vld [vmem:[%s1 + $0x4c] sm:$0xf]
        %v284 = vld [vmem:[%s1 + $0x50] sm:$0xf]
        %v285 = vld [vmem:[%s1 + $0x54] sm:$0xf]
        %v286 = vld [vmem:[%s1 + $0x58] sm:$0xf]
        %v287 = vld [vmem:[%s1 + $0x5c] sm:$0xf]
        %v288 = vpack.c.bf16 %v254, %v254
        %v289 = vpack.c.bf16 %v255, %v255
        %v314 = vunpack.c.l.b16 %v264
        %v315 = vunpack.c.l.b16 %v265
        %v316 = vunpack.c.l.b16 %v266
        %v317 = vunpack.c.l.b16 %v267
        %v318 = vunpack.c.l.b16 %v268
        %v319 = vunpack.c.l.b16 %v269
        %v320 = vunpack.c.l.b16 %v270
        %v321 = vunpack.c.l.b16 %v271
        %v322 = vunpack.c.l.b16 %v272
        %v323 = vunpack.c.l.b16 %v273
        %v324 = vunpack.c.l.b16 %v274
        %v325 = vunpack.c.l.b16 %v275
        %v326 = vunpack.c.l.b16 %v276
        %v327 = vunpack.c.l.b16 %v277
        %v328 = vunpack.c.l.b16 %v278
        %v329 = vunpack.c.l.b16 %v279
        %v330 = vunpack.c.l.b16 %v280
        %v331 = vunpack.c.l.b16 %v281
        %v332 = vunpack.c.l.b16 %v282
        %v333 = vunpack.c.l.b16 %v283
        %v334 = vunpack.c.l.b16 %v284
        %v335 = vunpack.c.l.b16 %v285
        %v336 = vunpack.c.l.b16 %v286
        %v337 = vunpack.c.l.b16 %v287
        %v338 = vpack.c.b16 %v315, %v314
        %v339 = vpack.c.b16 %v317, %v316
        %v340 = vpack.c.b16 %v319, %v318
        %v341 = vpack.c.b16 %v321, %v320
        %v342 = vpack.c.b16 %v323, %v322
        %v343 = vpack.c.b16 %v325, %v324
        %v344 = vpack.c.b16 %v327, %v326
        %v345 = vpack.c.b16 %v329, %v328
        %v346 = vpack.c.b16 %v331, %v330
        %v347 = vpack.c.b16 %v333, %v332
        %v348 = vpack.c.b16 %v335, %v334
        %v349 = vpack.c.b16 %v337, %v336
        %vm350 = vcmask 64512
        %v352 = vsel %vm350, %v338, 0
        %v355 = vsel %vm350, %v339, 0
        %v358 = vsel %vm350, %v340, 0
        %v361 = vsel %vm350, %v341, 0
        %v364 = vsel %vm350, %v342, 0
        %v367 = vsel %vm350, %v343, 0
        %v370 = vsel %vm350, %v344, 0
        %v373 = vsel %vm350, %v345, 0
        %v376 = vsel %vm350, %v346, 0
        %v379 = vsel %vm350, %v347, 0
        %v382 = vsel %vm350, %v348, 0
        %v385 = vsel %vm350, %v349, 0
        %vm387 = vcmask 1043456
        %v389 = vsel %vm387, %v288, 0
        %v392 = vsel %vm387, %v289, 0
        %394 = vmatprep.subr.bf16.mxu0 %v392
        %395 = vmatpush1.bf16.msra.mxu0 %v389
        %396 = vmatprep.subr.bf16.mxu0 0
        %397 = vmatpush1.bf16.msra.mxu0 0
        %398 = vmatprep.subr.bf16.mxu0 0
        %399 = vmatpush1.bf16.msra.mxu0 0
        %400 = vmatprep.subr.bf16.mxu0 0
        %401 = vmatpush1.bf16.msra.mxu0 0
        %402 = vmatprep.subr.bf16.mxu0 0
        %403 = vmatpush1.bf16.msra.mxu0 0
        %404 = vmatprep.subr.bf16.mxu0 0
        %405 = vmatpush1.bf16.msra.mxu0 0
        %406 = vmatprep.subr.bf16.mxu0 0
        %407 = vmatpush1.bf16.msra.mxu0 0
        %408 = vmatprep.subr.bf16.mxu0 0
        %409 = vmatpush1.bf16.msra.mxu0 0
        %410 = vmatprep.subr.bf16.mxu0 0
        %411 = vmatpush1.bf16.msra.mxu0 0
        %412 = vmatprep.subr.bf16.mxu0 0
        %413 = vmatpush1.bf16.msra.mxu0 0
        %414 = vmatprep.subr.bf16.mxu0 0
        %415 = vmatpush1.bf16.msra.mxu0 0
        %416 = vmatprep.subr.bf16.mxu0 0
        %417 = vmatpush1.bf16.msra.mxu0 0
        %418 = vmatprep.subr.bf16.mxu0 0
        %419 = vmatpush1.bf16.msra.mxu0 0
        %420 = vmatprep.subr.bf16.mxu0 0
        %421 = vmatpush1.bf16.msra.mxu0 0
        %422 = vmatprep.subr.bf16.mxu0 0
        %423 = vmatpush1.bf16.msra.mxu0 0
        %424 = vmatprep.subr.bf16.mxu0 0
        %425 = vmatpush1.bf16.msra.mxu0 0
        %426 = vmatprep.mubr.bf16.mxu0 0
        %427 = vmatmul.mubr.bf16.gmra.mrb[0].mxu0 %v352
        %v428 = vpop.f32.mrb[0].mxu0
        %v429 = vadd.f32 0.0, %v428
        %v430 = vpop.f32.mrb[0].mxu0
        %v431 = vadd.f32 0.0, %v430
        %v432 = vpop.f32.mrb[0].mxu0
        %v433 = vadd.f32 0.0, %v432
        %v434 = vpop.f32.mrb[0].mxu0
        %v435 = vadd.f32 0.0, %v434
        %436 = vmatprep.mubr.bf16.mxu0 0
        %437 = vmatmul.mubr.bf16.gmra.mrb[0].mxu0 %v355
        %v438 = vpop.f32.mrb[0].mxu0
        %v439 = vadd.f32 0.0, %v438
        %v440 = vpop.f32.mrb[0].mxu0
        %v441 = vadd.f32 0.0, %v440
        %v442 = vpop.f32.mrb[0].mxu0
        %v443 = vadd.f32 0.0, %v442
        %v444 = vpop.f32.mrb[0].mxu0
        %v445 = vadd.f32 0.0, %v444
        %446 = vmatprep.mubr.bf16.mxu0 0
        %447 = vmatmul.mubr.bf16.gmra.mrb[0].mxu0 %v358
        %v448 = vpop.f32.mrb[0].mxu0
        %v449 = vadd.f32 0.0, %v448
        %v450 = vpop.f32.mrb[0].mxu0
        %v451 = vadd.f32 0.0, %v450
        %v452 = vpop.f32.mrb[0].mxu0
        %v453 = vadd.f32 0.0, %v452
        %v454 = vpop.f32.mrb[0].mxu0
        %v455 = vadd.f32 0.0, %v454
        %456 = vmatprep.mubr.bf16.mxu0 0
        %457 = vmatmul.mubr.bf16.gmra.mrb[0].mxu0 %v361
        %v458 = vpop.f32.mrb[0].mxu0
        %v459 = vadd.f32 0.0, %v458
        %v460 = vpop.f32.mrb[0].mxu0
        %v461 = vadd.f32 0.0, %v460
        %v462 = vpop.f32.mrb[0].mxu0
        %v463 = vadd.f32 0.0, %v462
        %v464 = vpop.f32.mrb[0].mxu0
        %v465 = vadd.f32 0.0, %v464
        %466 = vmatprep.mubr.bf16.mxu0 0
        %467 = vmatmul.mubr.bf16.gmra.mrb[0].mxu0 %v364
        %v468 = vpop.f32.mrb[0].mxu0
        %v469 = vadd.f32 0.0, %v468
        %v470 = vpop.f32.mrb[0].mxu0
        %v471 = vadd.f32 0.0, %v470
        %v472 = vpop.f32.mrb[0].mxu0
        %v473 = vadd.f32 0.0, %v472
        %v474 = vpop.f32.mrb[0].mxu0
        %v475 = vadd.f32 0.0, %v474
        %476 = vmatprep.mubr.bf16.mxu0 0
        %477 = vmatmul.mubr.bf16.gmra.mrb[0].mxu0 %v367
        %v478 = vpop.f32.mrb[0].mxu0
        %v479 = vadd.f32 0.0, %v478
        %v480 = vpop.f32.mrb[0].mxu0
        %v481 = vadd.f32 0.0, %v480
        %v482 = vpop.f32.mrb[0].mxu0
        %v483 = vadd.f32 0.0, %v482
        %v484 = vpop.f32.mrb[0].mxu0
        %v485 = vadd.f32 0.0, %v484
        %486 = vmatprep.mubr.bf16.mxu0 0
        %487 = vmatmul.mubr.bf16.gmra.mrb[0].mxu0 %v370
        %v488 = vpop.f32.mrb[0].mxu0
        %v489 = vadd.f32 0.0, %v488
        %v490 = vpop.f32.mrb[0].mxu0
        %v491 = vadd.f32 0.0, %v490
        %v492 = vpop.f32.mrb[0].mxu0
        %v493 = vadd.f32 0.0, %v492
        %v494 = vpop.f32.mrb[0].mxu0
        %v495 = vadd.f32 0.0, %v494
        %496 = vmatprep.mubr.bf16.mxu0 0
        %497 = vmatmul.mubr.bf16.gmra.mrb[0].mxu0 %v373
        %v498 = vpop.f32.mrb[0].mxu0
        %v499 = vadd.f32 0.0, %v498
        %v500 = vpop.f32.mrb[0].mxu0
        %v501 = vadd.f32 0.0, %v500
        %v502 = vpop.f32.mrb[0].mxu0
        %v503 = vadd.f32 0.0, %v502
        %v504 = vpop.f32.mrb[0].mxu0
        %v505 = vadd.f32 0.0, %v504
        %506 = vmatprep.mubr.bf16.mxu0 0
        %507 = vmatmul.mubr.bf16.gmra.mrb[0].mxu0 %v376
        %v508 = vpop.f32.mrb[0].mxu0
        %v509 = vadd.f32 0.0, %v508
        %v510 = vpop.f32.mrb[0].mxu0
        %v511 = vadd.f32 0.0, %v510
        %v512 = vpop.f32.mrb[0].mxu0
        %v513 = vadd.f32 0.0, %v512
        %v514 = vpop.f32.mrb[0].mxu0
        %v515 = vadd.f32 0.0, %v514
        %516 = vmatprep.mubr.bf16.mxu0 0
        %517 = vmatmul.mubr.bf16.gmra.mrb[0].mxu0 %v379
        %v518 = vpop.f32.mrb[0].mxu0
        %v519 = vadd.f32 0.0, %v518
        %v520 = vpop.f32.mrb[0].mxu0
        %v521 = vadd.f32 0.0, %v520
        %v522 = vpop.f32.mrb[0].mxu0
        %v523 = vadd.f32 0.0, %v522
        %v524 = vpop.f32.mrb[0].mxu0
        %v525 = vadd.f32 0.0, %v524
        %526 = vmatprep.mubr.bf16.mxu0 0
        %527 = vmatmul.mubr.bf16.gmra.mrb[0].mxu0 %v382
        %v528 = vpop.f32.mrb[0].mxu0
        %v529 = vadd.f32 0.0, %v528
        %v530 = vpop.f32.mrb[0].mxu0
        %v531 = vadd.f32 0.0, %v530
        %v532 = vpop.f32.mrb[0].mxu0
        %v533 = vadd.f32 0.0, %v532
        %v534 = vpop.f32.mrb[0].mxu0
        %v535 = vadd.f32 0.0, %v534
        %536 = vmatprep.mubr.bf16.mxu0 0
        %537 = vmatmul.mubr.bf16.gmra.mrb[0].mxu0 %v385
        %v538 = vpop.f32.mrb[0].mxu0
        %v539 = vadd.f32 0.0, %v538
        %v540 = vpop.f32.mrb[0].mxu0
        %v541 = vadd.f32 0.0, %v540
        %v542 = vpop.f32.mrb[0].mxu0
        %v543 = vadd.f32 0.0, %v542
        %v544 = vpop.f32.mrb[0].mxu0
        %v545 = vadd.f32 0.0, %v544
        %546 = vdwg.mxu0
        %548 = vset.pattern.permute.xlu0 0
        %549 = vperm.xlu0 %548, %v256
        %v550 = vpop.permute.xlu0 %549
        %553 = vset.pattern.permute.xlu0 0
        %554 = vperm.xlu0 %553, %v257
        %v555 = vpop.permute.xlu0 %554
        %558 = vset.pattern.permute.xlu0 0
        %559 = vperm.xlu0 %558, %v258
        %v560 = vpop.permute.xlu0 %559
        %563 = vset.pattern.permute.xlu0 0
        %564 = vperm.xlu0 %563, %v259
        %v565 = vpop.permute.xlu0 %564
        %568 = vset.pattern.permute.xlu0 0
        %569 = vperm.xlu0 %568, %v260
        %v570 = vpop.permute.xlu0 %569
        %573 = vset.pattern.permute.xlu0 0
        %574 = vperm.xlu0 %573, %v261
        %v575 = vpop.permute.xlu0 %574
        %578 = vset.pattern.permute.xlu0 0
        %579 = vperm.xlu0 %578, %v262
        %v580 = vpop.permute.xlu0 %579
        %583 = vset.pattern.permute.xlu0 0
        %584 = vperm.xlu0 %583, %v263
        %v585 = vpop.permute.xlu0 %584
        %v587 = vadd.f32 %v429, %v550
        %v588 = vadd.f32 %v431, %v550
        %v589 = vadd.f32 %v433, %v555
        %v590 = vadd.f32 %v435, %v555
        %v591 = vadd.f32 %v439, %v560
        %v592 = vadd.f32 %v441, %v560
        %v593 = vadd.f32 %v443, %v565
        %v594 = vadd.f32 %v445, %v565
        %v595 = vadd.f32 %v449, %v570
        %v596 = vadd.f32 %v451, %v570
        %v597 = vadd.f32 %v453, %v575
        %v598 = vadd.f32 %v455, %v575
        %v599 = vadd.f32 %v459, %v580
        %v600 = vadd.f32 %v461, %v580
        %v601 = vadd.f32 %v463, %v585
        %v602 = vadd.f32 %v465, %v585
        %v603 = vmul.f32 %v587, 100.0
        %v604 = vmul.f32 %v588, 100.0
        %v605 = vmul.f32 %v589, 100.0
        %v606 = vmul.f32 %v590, 100.0
        %v607 = vmul.f32 %v591, 100.0
        %v608 = vmul.f32 %v592, 100.0
        %v609 = vmul.f32 %v593, 100.0
        %v610 = vmul.f32 %v594, 100.0
        %v611 = vmul.f32 %v595, 100.0
        %v612 = vmul.f32 %v596, 100.0
        %v613 = vmul.f32 %v597, 100.0
        %v614 = vmul.f32 %v598, 100.0
        %v615 = vmul.f32 %v599, 100.0
        %v616 = vmul.f32 %v600, 100.0
        %v617 = vmul.f32 %v601, 100.0
        %v618 = vmul.f32 %v602, 100.0
        %v619 = vmin.f32 %v603, 20.0
        %v620 = vmin.f32 %v604, 20.0
        %v621 = vmin.f32 %v605, 20.0
        %v622 = vmin.f32 %v606, 20.0
        %v623 = vmin.f32 %v607, 20.0
        %v624 = vmin.f32 %v608, 20.0
        %v625 = vmin.f32 %v609, 20.0
        %v626 = vmin.f32 %v610, 20.0
        %v627 = vmin.f32 %v611, 20.0
        %v628 = vmin.f32 %v612, 20.0
        %v629 = vmin.f32 %v613, 20.0
        %v630 = vmin.f32 %v614, 20.0
        %v631 = vmin.f32 %v615, 20.0
        %v632 = vmin.f32 %v616, 20.0
        %v633 = vmin.f32 %v617, 20.0
        %v634 = vmin.f32 %v618, 20.0
        %v635 = vmul.f32 %v619, 1.442695
        %v636 = vpow.pop %v635
        %v637 = vmul.f32 %v620, 1.442695
        %v638 = vpow.pop %v637
        %v639 = vmul.f32 %v621, 1.442695
        %v640 = vpow.pop %v639
        %v641 = vmul.f32 %v622, 1.442695
        %v642 = vpow.pop %v641
        %v643 = vmul.f32 %v623, 1.442695
        %v644 = vpow.pop %v643
        %v645 = vmul.f32 %v624, 1.442695
        %v646 = vpow.pop %v645
        %v647 = vmul.f32 %v625, 1.442695
        %v648 = vpow.pop %v647
        %v649 = vmul.f32 %v626, 1.442695
        %v650 = vpow.pop %v649
        %v651 = vmul.f32 %v627, 1.442695
        %v652 = vpow.pop %v651
        %v653 = vmul.f32 %v628, 1.442695
        %v654 = vpow.pop %v653
        %v655 = vmul.f32 %v629, 1.442695
        %v656 = vpow.pop %v655
        %v657 = vmul.f32 %v630, 1.442695
        %v658 = vpow.pop %v657
        %v659 = vmul.f32 %v631, 1.442695
        %v660 = vpow.pop %v659
        %v661 = vmul.f32 %v632, 1.442695
        %v662 = vpow.pop %v661
        %v663 = vmul.f32 %v633, 1.442695
        %v664 = vpow.pop %v663
        %v665 = vmul.f32 %v634, 1.442695
        %v666 = vpow.pop %v665
        %vm667 = vcmp.gt.f32.partialorder %v603, 20.0
        %vm668 = vcmp.gt.f32.partialorder %v604, 20.0
        %vm669 = vcmp.gt.f32.partialorder %v605, 20.0
        %vm670 = vcmp.gt.f32.partialorder %v606, 20.0
        %vm671 = vcmp.gt.f32.partialorder %v607, 20.0
        %vm672 = vcmp.gt.f32.partialorder %v608, 20.0
        %vm673 = vcmp.gt.f32.partialorder %v609, 20.0
        %vm674 = vcmp.gt.f32.partialorder %v610, 20.0
        %vm675 = vcmp.gt.f32.partialorder %v611, 20.0
        %vm676 = vcmp.gt.f32.partialorder %v612, 20.0
        %vm677 = vcmp.gt.f32.partialorder %v613, 20.0
        %vm678 = vcmp.gt.f32.partialorder %v614, 20.0
        %vm679 = vcmp.gt.f32.partialorder %v615, 20.0
        %vm680 = vcmp.gt.f32.partialorder %v616, 20.0
        %vm681 = vcmp.gt.f32.partialorder %v617, 20.0
        %vm682 = vcmp.gt.f32.partialorder %v618, 20.0
        %v683 = vadd.f32 %v636, 1.0
        %v684 = vlog2.pop %v683
        %v685 = vmul.f32 %v684, 0.6931472
        %v686 = vmul.f32 -0.5, %v636
        %v687 = vadd.f32 %v686, 1.0
        %v688 = vmul.f32 %v687, %v636
        %v689 = vand.u32 2147483647, %v636
        %vm690 = vcmp.lt.f32.partialorder %v689, 0.0004427343
        %v691 = vsel %vm690, %v688, %v685
        %v692 = vadd.f32 %v638, 1.0
        %v693 = vlog2.pop %v692
        %v694 = vmul.f32 %v693, 0.6931472
        %v695 = vmul.f32 -0.5, %v638
        %v696 = vadd.f32 %v695, 1.0
        %v697 = vmul.f32 %v696, %v638
        %v698 = vand.u32 2147483647, %v638
        %vm699 = vcmp.lt.f32.partialorder %v698, 0.0004427343
        %v700 = vsel %vm699, %v697, %v694
        %v701 = vadd.f32 %v640, 1.0
        %v702 = vlog2.pop %v701
        %v703 = vmul.f32 %v702, 0.6931472
        %v704 = vmul.f32 -0.5, %v640
        %v705 = vadd.f32 %v704, 1.0
        %v706 = vmul.f32 %v705, %v640
        %v707 = vand.u32 2147483647, %v640
        %vm708 = vcmp.lt.f32.partialorder %v707, 0.0004427343
        %v709 = vsel %vm708, %v706, %v703
        %v710 = vadd.f32 %v642, 1.0
        %v711 = vlog2.pop %v710
        %v712 = vmul.f32 %v711, 0.6931472
        %v713 = vmul.f32 -0.5, %v642
        %v714 = vadd.f32 %v713, 1.0
        %v715 = vmul.f32 %v714, %v642
        %v716 = vand.u32 2147483647, %v642
        %vm717 = vcmp.lt.f32.partialorder %v716, 0.0004427343
        %v718 = vsel %vm717, %v715, %v712
        %v719 = vadd.f32 %v644, 1.0
        %v720 = vlog2.pop %v719
        %v721 = vmul.f32 %v720, 0.6931472
        %v722 = vmul.f32 -0.5, %v644
        %v723 = vadd.f32 %v722, 1.0
        %v724 = vmul.f32 %v723, %v644
        %v725 = vand.u32 2147483647, %v644
        %vm726 = vcmp.lt.f32.partialorder %v725, 0.0004427343
        %v727 = vsel %vm726, %v724, %v721
        %v728 = vadd.f32 %v646, 1.0
        %v729 = vlog2.pop %v728
        %v730 = vmul.f32 %v729, 0.6931472
        %v731 = vmul.f32 -0.5, %v646
        %v732 = vadd.f32 %v731, 1.0
        %v733 = vmul.f32 %v732, %v646
        %v734 = vand.u32 2147483647, %v646
        %vm735 = vcmp.lt.f32.partialorder %v734, 0.0004427343
        %v736 = vsel %vm735, %v733, %v730
        %v737 = vadd.f32 %v648, 1.0
        %v738 = vlog2.pop %v737
        %v739 = vmul.f32 %v738, 0.6931472
        %v740 = vmul.f32 -0.5, %v648
        %v741 = vadd.f32 %v740, 1.0
        %v742 = vmul.f32 %v741, %v648
        %v743 = vand.u32 2147483647, %v648
        %vm744 = vcmp.lt.f32.partialorder %v743, 0.0004427343
        %v745 = vsel %vm744, %v742, %v739
        %v746 = vadd.f32 %v650, 1.0
        %v747 = vlog2.pop %v746
        %v748 = vmul.f32 %v747, 0.6931472
        %v749 = vmul.f32 -0.5, %v650
        %v750 = vadd.f32 %v749, 1.0
        %v751 = vmul.f32 %v750, %v650
        %v752 = vand.u32 2147483647, %v650
        %vm753 = vcmp.lt.f32.partialorder %v752, 0.0004427343
        %v754 = vsel %vm753, %v751, %v748
        %v755 = vadd.f32 %v652, 1.0
        %v756 = vlog2.pop %v755
        %v757 = vmul.f32 %v756, 0.6931472
        %v758 = vmul.f32 -0.5, %v652
        %v759 = vadd.f32 %v758, 1.0
        %v760 = vmul.f32 %v759, %v652
        %v761 = vand.u32 2147483647, %v652
        %vm762 = vcmp.lt.f32.partialorder %v761, 0.0004427343
        %v763 = vsel %vm762, %v760, %v757
        %v764 = vadd.f32 %v654, 1.0
        %v765 = vlog2.pop %v764
        %v766 = vmul.f32 %v765, 0.6931472
        %v767 = vmul.f32 -0.5, %v654
        %v768 = vadd.f32 %v767, 1.0
        %v769 = vmul.f32 %v768, %v654
        %v770 = vand.u32 2147483647, %v654
        %vm771 = vcmp.lt.f32.partialorder %v770, 0.0004427343
        %v772 = vsel %vm771, %v769, %v766
        %v773 = vadd.f32 %v656, 1.0
        %v774 = vlog2.pop %v773
        %v775 = vmul.f32 %v774, 0.6931472
        %v776 = vmul.f32 -0.5, %v656
        %v777 = vadd.f32 %v776, 1.0
        %v778 = vmul.f32 %v777, %v656
        %v779 = vand.u32 2147483647, %v656
        %vm780 = vcmp.lt.f32.partialorder %v779, 0.0004427343
        %v781 = vsel %vm780, %v778, %v775
        %v782 = vadd.f32 %v658, 1.0
        %v783 = vlog2.pop %v782
        %v784 = vmul.f32 %v783, 0.6931472
        %v785 = vmul.f32 -0.5, %v658
        %v786 = vadd.f32 %v785, 1.0
        %v787 = vmul.f32 %v786, %v658
        %v788 = vand.u32 2147483647, %v658
        %vm789 = vcmp.lt.f32.partialorder %v788, 0.0004427343
        %v790 = vsel %vm789, %v787, %v784
        %v791 = vadd.f32 %v660, 1.0
        %v792 = vlog2.pop %v791
        %v793 = vmul.f32 %v792, 0.6931472
        %v794 = vmul.f32 -0.5, %v660
        %v795 = vadd.f32 %v794, 1.0
        %v796 = vmul.f32 %v795, %v660
        %v797 = vand.u32 2147483647, %v660
        %vm798 = vcmp.lt.f32.partialorder %v797, 0.0004427343
        %v799 = vsel %vm798, %v796, %v793
        %v800 = vadd.f32 %v662, 1.0
        %v801 = vlog2.pop %v800
        %v802 = vmul.f32 %v801, 0.6931472
        %v803 = vmul.f32 -0.5, %v662
        %v804 = vadd.f32 %v803, 1.0
        %v805 = vmul.f32 %v804, %v662
        %v806 = vand.u32 2147483647, %v662
        %vm807 = vcmp.lt.f32.partialorder %v806, 0.0004427343
        %v808 = vsel %vm807, %v805, %v802
        %v809 = vadd.f32 %v664, 1.0
        %v810 = vlog2.pop %v809
        %v811 = vmul.f32 %v810, 0.6931472
        %v812 = vmul.f32 -0.5, %v664
        %v813 = vadd.f32 %v812, 1.0
        %v814 = vmul.f32 %v813, %v664
        %v815 = vand.u32 2147483647, %v664
        %vm816 = vcmp.lt.f32.partialorder %v815, 0.0004427343
        %v817 = vsel %vm816, %v814, %v811
        %v818 = vadd.f32 %v666, 1.0
        %v819 = vlog2.pop %v818
        %v820 = vmul.f32 %v819, 0.6931472
        %v821 = vmul.f32 -0.5, %v666
        %v822 = vadd.f32 %v821, 1.0
        %v823 = vmul.f32 %v822, %v666
        %v824 = vand.u32 2147483647, %v666
        %vm825 = vcmp.lt.f32.partialorder %v824, 0.0004427343
        %v826 = vsel %vm825, %v823, %v820
        %v827 = vmul.f32 %v691, 0.01
        %v828 = vmul.f32 %v700, 0.01
        %v829 = vmul.f32 %v709, 0.01
        %v830 = vmul.f32 %v718, 0.01
        %v831 = vmul.f32 %v727, 0.01
        %v832 = vmul.f32 %v736, 0.01
        %v833 = vmul.f32 %v745, 0.01
        %v834 = vmul.f32 %v754, 0.01
        %v835 = vmul.f32 %v763, 0.01
        %v836 = vmul.f32 %v772, 0.01
        %v837 = vmul.f32 %v781, 0.01
        %v838 = vmul.f32 %v790, 0.01
        %v839 = vmul.f32 %v799, 0.01
        %v840 = vmul.f32 %v808, 0.01
        %v841 = vmul.f32 %v817, 0.01
        %v842 = vmul.f32 %v826, 0.01
        %v843 = vsel %vm667, %v587, %v827
        %v844 = vsel %vm668, %v588, %v828
        %v845 = vsel %vm669, %v589, %v829
        %v846 = vsel %vm670, %v590, %v830
        %v847 = vsel %vm671, %v591, %v831
        %v848 = vsel %vm672, %v592, %v832
        %v849 = vsel %vm673, %v593, %v833
        %v850 = vsel %vm674, %v594, %v834
        %v851 = vsel %vm675, %v595, %v835
        %v852 = vsel %vm676, %v596, %v836
        %v853 = vsel %vm677, %v597, %v837
        %v854 = vsel %vm678, %v598, %v838
        %v855 = vsel %vm679, %v599, %v839
        %v856 = vsel %vm680, %v600, %v840
        %v857 = vsel %vm681, %v601, %v841
        %v858 = vsel %vm682, %v602, %v842
        %v859 = vadd.f32 %v636, 1.0
        %v860 = vadd.f32 %v638, 1.0
        %v861 = vadd.f32 %v640, 1.0
        %v862 = vadd.f32 %v642, 1.0
        %v863 = vadd.f32 %v644, 1.0
        %v864 = vadd.f32 %v646, 1.0
        %v865 = vadd.f32 %v648, 1.0
        %v866 = vadd.f32 %v650, 1.0
        %v867 = vadd.f32 %v652, 1.0
        %v868 = vadd.f32 %v654, 1.0
        %v869 = vadd.f32 %v656, 1.0
        %v870 = vadd.f32 %v658, 1.0
        %v871 = vadd.f32 %v660, 1.0
        %v872 = vadd.f32 %v662, 1.0
        %v873 = vadd.f32 %v664, 1.0
        %v874 = vadd.f32 %v666, 1.0
        %v875 = vrcp.pop %v859
        %v876 = vrcp.pop %v860
        %v877 = vrcp.pop %v861
        %v878 = vrcp.pop %v862
        %v879 = vrcp.pop %v863
        %v880 = vrcp.pop %v864
        %v881 = vrcp.pop %v865
        %v882 = vrcp.pop %v866
        %v883 = vrcp.pop %v867
        %v884 = vrcp.pop %v868
        %v885 = vrcp.pop %v869
        %v886 = vrcp.pop %v870
        %v887 = vrcp.pop %v871
        %v888 = vrcp.pop %v872
        %v889 = vrcp.pop %v873
        %v890 = vrcp.pop %v874
        %v891 = vmul.f32 %v636, %v875
        %v892 = vmul.f32 %v638, %v876
        %v893 = vmul.f32 %v640, %v877
        %v894 = vmul.f32 %v642, %v878
        %v895 = vmul.f32 %v644, %v879
        %v896 = vmul.f32 %v646, %v880
        %v897 = vmul.f32 %v648, %v881
        %v898 = vmul.f32 %v650, %v882
        %v899 = vmul.f32 %v652, %v883
        %v900 = vmul.f32 %v654, %v884
        %v901 = vmul.f32 %v656, %v885
        %v902 = vmul.f32 %v658, %v886
        %v903 = vmul.f32 %v660, %v887
        %v904 = vmul.f32 %v662, %v888
        %v905 = vmul.f32 %v664, %v889
        %v906 = vmul.f32 %v666, %v890
        %v907 = vld [vmem:[%s2] sm:$0xf]
        %v908 = vld [vmem:[%s2 + $0x4] sm:$0xf]
        %v909 = vld [vmem:[%s2 + $0x8] sm:$0xf]
        %v910 = vld [vmem:[%s2 + $0xc] sm:$0xf]
        %v911 = vld [vmem:[%s2 + $0x10] sm:$0xf]
        %v912 = vld [vmem:[%s2 + $0x14] sm:$0xf]
        %v913 = vld [vmem:[%s2 + $0x18] sm:$0xf]
        %v914 = vld [vmem:[%s2 + $0x1c] sm:$0xf]
        %v915 = vpack.c.bf16 %v845, %v843
        %v916 = vpack.c.bf16 %v846, %v844
        %v917 = vpack.c.bf16 %v849, %v847
        %v918 = vpack.c.bf16 %v850, %v848
        %v919 = vpack.c.bf16 %v853, %v851
        %v920 = vpack.c.bf16 %v854, %v852
        %v921 = vpack.c.bf16 %v857, %v855
        %v922 = vpack.c.bf16 %v858, %v856
        %923 = vset.pattern.permute.xlu0 1
        %924 = vperm.xlu0 %923, %v256
        %v925 = vpop.permute.xlu0 %924
        %927 = vset.pattern.permute.xlu0 1
        %928 = vperm.xlu0 %927, %v257
        %v929 = vpop.permute.xlu0 %928
        %931 = vset.pattern.permute.xlu0 1
        %932 = vperm.xlu0 %931, %v258
        %v933 = vpop.permute.xlu0 %932
        %935 = vset.pattern.permute.xlu0 1
        %936 = vperm.xlu0 %935, %v259
        %v937 = vpop.permute.xlu0 %936
        %939 = vset.pattern.permute.xlu0 1
        %940 = vperm.xlu0 %939, %v260
        %v941 = vpop.permute.xlu0 %940
        %943 = vset.pattern.permute.xlu0 1
        %944 = vperm.xlu0 %943, %v261
        %v945 = vpop.permute.xlu0 %944
        %947 = vset.pattern.permute.xlu0 1
        %948 = vperm.xlu0 %947, %v262
        %v949 = vpop.permute.xlu0 %948
        %951 = vset.pattern.permute.xlu0 1
        %952 = vperm.xlu0 %951, %v263
        %v953 = vpop.permute.xlu0 %952
        %v963 = vunpack.c.l.b16 %v907
        %v964 = vunpack.c.l.b16 %v908
        %v965 = vunpack.c.l.b16 %v909
        %v966 = vunpack.c.l.b16 %v910
        %v967 = vunpack.c.l.b16 %v911
        %v968 = vunpack.c.l.b16 %v912
        %v969 = vunpack.c.l.b16 %v913
        %v970 = vunpack.c.l.b16 %v914
        %v971 = vpack.c.b16 %v964, %v963
        %v972 = vpack.c.b16 %v966, %v965
        %v973 = vpack.c.b16 %v968, %v967
        %v974 = vpack.c.b16 %v970, %v969
        %vm975 = vcmask 523264
        %v977 = vsel %vm975, %v971, 0
        %v980 = vsel %vm975, %v972, 0
        %v983 = vsel %vm975, %v973, 0
        %v986 = vsel %vm975, %v974, 0
        %988 = vmatprep.subr.bf16.mxu0 %v916
        %989 = vmatpush1.bf16.msra.mxu0 %v915
        %990 = vmatprep.subr.bf16.mxu0 %v918
        %991 = vmatpush1.bf16.msra.mxu0 %v917
        %992 = vmatprep.subr.bf16.mxu0 %v920
        %993 = vmatpush1.bf16.msra.mxu0 %v919
        %994 = vmatprep.subr.bf16.mxu0 %v922
        %995 = vmatpush1.bf16.msra.mxu0 %v921
        %996 = vmatprep.subr.bf16.mxu0 0
        %997 = vmatpush1.bf16.msra.mxu0 0
        %998 = vmatprep.subr.bf16.mxu0 0
        %999 = vmatpush1.bf16.msra.mxu0 0
        %1000 = vmatprep.subr.bf16.mxu0 0
        %1001 = vmatpush1.bf16.msra.mxu0 0
        %1002 = vmatprep.subr.bf16.mxu0 0
        %1003 = vmatpush1.bf16.msra.mxu0 0
        %1004 = vmatprep.subr.bf16.mxu0 0
        %1005 = vmatpush1.bf16.msra.mxu0 0
        %1006 = vmatprep.subr.bf16.mxu0 0
        %1007 = vmatpush1.bf16.msra.mxu0 0
        %1008 = vmatprep.subr.bf16.mxu0 0
        %1009 = vmatpush1.bf16.msra.mxu0 0
        %1010 = vmatprep.subr.bf16.mxu0 0
        %1011 = vmatpush1.bf16.msra.mxu0 0
        %1012 = vmatprep.subr.bf16.mxu0 0
        %1013 = vmatpush1.bf16.msra.mxu0 0
        %1014 = vmatprep.subr.bf16.mxu0 0
        %1015 = vmatpush1.bf16.msra.mxu0 0
        %1016 = vmatprep.subr.bf16.mxu0 0
        %1017 = vmatpush1.bf16.msra.mxu0 0
        %1018 = vmatprep.subr.bf16.mxu0 0
        %1019 = vmatpush1.bf16.msra.mxu0 0
        %1020 = vmatprep.mubr.bf16.mxu0 0
        %1021 = vmatmul.mubr.bf16.gmra.mrb[0].mxu0 %v977
        %v1022 = vpop.f32.mrb[0].mxu0
        %v1023 = vadd.f32 %v925, %v1022
        %v1024 = vpop.f32.mrb[0].mxu0
        %v1025 = vadd.f32 %v925, %v1024
        %v1026 = vpop.f32.mrb[0].mxu0
        %v1027 = vadd.f32 %v929, %v1026
        %v1028 = vpop.f32.mrb[0].mxu0
        %v1029 = vadd.f32 %v929, %v1028
        %1030 = vmatprep.mubr.bf16.mxu0 0
        %1031 = vmatmul.mubr.bf16.gmra.mrb[0].mxu0 %v980
        %v1032 = vpop.f32.mrb[0].mxu0
        %v1033 = vadd.f32 %v933, %v1032
        %v1034 = vpop.f32.mrb[0].mxu0
        %v1035 = vadd.f32 %v933, %v1034
        %v1036 = vpop.f32.mrb[0].mxu0
        %v1037 = vadd.f32 %v937, %v1036
        %v1038 = vpop.f32.mrb[0].mxu0
        %v1039 = vadd.f32 %v937, %v1038
        %1040 = vmatprep.mubr.bf16.mxu0 0
        %1041 = vmatmul.mubr.bf16.gmra.mrb[0].mxu0 %v983
        %v1042 = vpop.f32.mrb[0].mxu0
        %v1043 = vadd.f32 %v941, %v1042
        %v1044 = vpop.f32.mrb[0].mxu0
        %v1045 = vadd.f32 %v941, %v1044
        %v1046 = vpop.f32.mrb[0].mxu0
        %v1047 = vadd.f32 %v945, %v1046
        %v1048 = vpop.f32.mrb[0].mxu0
        %v1049 = vadd.f32 %v945, %v1048
        %1050 = vmatprep.mubr.bf16.mxu0 0
        %1051 = vmatmul.mubr.bf16.gmra.mrb[0].mxu0 %v986
        %v1052 = vpop.f32.mrb[0].mxu0
        %v1053 = vadd.f32 %v949, %v1052
        %v1054 = vpop.f32.mrb[0].mxu0
        %v1055 = vadd.f32 %v949, %v1054
        %v1056 = vpop.f32.mrb[0].mxu0
        %v1057 = vadd.f32 %v953, %v1056
        %v1058 = vpop.f32.mrb[0].mxu0
        %v1059 = vadd.f32 %v953, %v1058
        %1060 = vdwg.mxu0
        %v1061 = vmul.f32 %v1023, 100.0
        %v1062 = vmul.f32 %v1025, 100.0
        %v1063 = vmul.f32 %v1027, 100.0
        %v1064 = vmul.f32 %v1029, 100.0
        %v1065 = vmul.f32 %v1033, 100.0
        %v1066 = vmul.f32 %v1035, 100.0
        %v1067 = vmul.f32 %v1037, 100.0
        %v1068 = vmul.f32 %v1039, 100.0
        %v1069 = vmul.f32 %v1043, 100.0
        %v1070 = vmul.f32 %v1045, 100.0
        %v1071 = vmul.f32 %v1047, 100.0
        %v1072 = vmul.f32 %v1049, 100.0
        %v1073 = vmul.f32 %v1053, 100.0
        %v1074 = vmul.f32 %v1055, 100.0
        %v1075 = vmul.f32 %v1057, 100.0
        %v1076 = vmul.f32 %v1059, 100.0
        %v1077 = vmin.f32 %v1061, 20.0
        %v1078 = vmin.f32 %v1062, 20.0
        %v1079 = vmin.f32 %v1063, 20.0
        %v1080 = vmin.f32 %v1064, 20.0
        %v1081 = vmin.f32 %v1065, 20.0
        %v1082 = vmin.f32 %v1066, 20.0
        %v1083 = vmin.f32 %v1067, 20.0
        %v1084 = vmin.f32 %v1068, 20.0
        %v1085 = vmin.f32 %v1069, 20.0
        %v1086 = vmin.f32 %v1070, 20.0
        %v1087 = vmin.f32 %v1071, 20.0
        %v1088 = vmin.f32 %v1072, 20.0
        %v1089 = vmin.f32 %v1073, 20.0
        %v1090 = vmin.f32 %v1074, 20.0
        %v1091 = vmin.f32 %v1075, 20.0
        %v1092 = vmin.f32 %v1076, 20.0
        %v1093 = vmul.f32 %v1077, 1.442695
        %v1094 = vpow.pop %v1093
        %v1095 = vmul.f32 %v1078, 1.442695
        %v1096 = vpow.pop %v1095
        %v1097 = vmul.f32 %v1079, 1.442695
        %v1098 = vpow.pop %v1097
        %v1099 = vmul.f32 %v1080, 1.442695
        %v1100 = vpow.pop %v1099
        %v1101 = vmul.f32 %v1081, 1.442695
        %v1102 = vpow.pop %v1101
        %v1103 = vmul.f32 %v1082, 1.442695
        %v1104 = vpow.pop %v1103
        %v1105 = vmul.f32 %v1083, 1.442695
        %v1106 = vpow.pop %v1105
        %v1107 = vmul.f32 %v1084, 1.442695
        %v1108 = vpow.pop %v1107
        %v1109 = vmul.f32 %v1085, 1.442695
        %v1110 = vpow.pop %v1109
        %v1111 = vmul.f32 %v1086, 1.442695
        %v1112 = vpow.pop %v1111
        %v1113 = vmul.f32 %v1087, 1.442695
        %v1114 = vpow.pop %v1113
        %v1115 = vmul.f32 %v1088, 1.442695
        %v1116 = vpow.pop %v1115
        %v1117 = vmul.f32 %v1089, 1.442695
        %v1118 = vpow.pop %v1117
        %v1119 = vmul.f32 %v1090, 1.442695
        %v1120 = vpow.pop %v1119
        %v1121 = vmul.f32 %v1091, 1.442695
        %v1122 = vpow.pop %v1121
        %v1123 = vmul.f32 %v1092, 1.442695
        %v1124 = vpow.pop %v1123
        %vm1125 = vcmp.gt.f32.partialorder %v1061, 20.0
        %vm1126 = vcmp.gt.f32.partialorder %v1062, 20.0
        %vm1127 = vcmp.gt.f32.partialorder %v1063, 20.0
        %vm1128 = vcmp.gt.f32.partialorder %v1064, 20.0
        %vm1129 = vcmp.gt.f32.partialorder %v1065, 20.0
        %vm1130 = vcmp.gt.f32.partialorder %v1066, 20.0
        %vm1131 = vcmp.gt.f32.partialorder %v1067, 20.0
        %vm1132 = vcmp.gt.f32.partialorder %v1068, 20.0
        %vm1133 = vcmp.gt.f32.partialorder %v1069, 20.0
        %vm1134 = vcmp.gt.f32.partialorder %v1070, 20.0
        %vm1135 = vcmp.gt.f32.partialorder %v1071, 20.0
        %vm1136 = vcmp.gt.f32.partialorder %v1072, 20.0
        %vm1137 = vcmp.gt.f32.partialorder %v1073, 20.0
        %vm1138 = vcmp.gt.f32.partialorder %v1074, 20.0
        %vm1139 = vcmp.gt.f32.partialorder %v1075, 20.0
        %vm1140 = vcmp.gt.f32.partialorder %v1076, 20.0
        %v1141 = vadd.f32 %v1094, 1.0
        %v1142 = vlog2.pop %v1141
        %v1143 = vmul.f32 %v1142, 0.6931472
        %v1144 = vmul.f32 -0.5, %v1094
        %v1145 = vadd.f32 %v1144, 1.0
        %v1146 = vmul.f32 %v1145, %v1094
        %v1147 = vand.u32 2147483647, %v1094
        %vm1148 = vcmp.lt.f32.partialorder %v1147, 0.0004427343
        %v1149 = vsel %vm1148, %v1146, %v1143
        %v1150 = vadd.f32 %v1096, 1.0
        %v1151 = vlog2.pop %v1150
        %v1152 = vmul.f32 %v1151, 0.6931472
        %v1153 = vmul.f32 -0.5, %v1096
        %v1154 = vadd.f32 %v1153, 1.0
        %v1155 = vmul.f32 %v1154, %v1096
        %v1156 = vand.u32 2147483647, %v1096
        %vm1157 = vcmp.lt.f32.partialorder %v1156, 0.0004427343
        %v1158 = vsel %vm1157, %v1155, %v1152
        %v1159 = vadd.f32 %v1098, 1.0
        %v1160 = vlog2.pop %v1159
        %v1161 = vmul.f32 %v1160, 0.6931472
        %v1162 = vmul.f32 -0.5, %v1098
        %v1163 = vadd.f32 %v1162, 1.0
        %v1164 = vmul.f32 %v1163, %v1098
        %v1165 = vand.u32 2147483647, %v1098
        %vm1166 = vcmp.lt.f32.partialorder %v1165, 0.0004427343
        %v1167 = vsel %vm1166, %v1164, %v1161
        %v1168 = vadd.f32 %v1100, 1.0
        %v1169 = vlog2.pop %v1168
        %v1170 = vmul.f32 %v1169, 0.6931472
        %v1171 = vmul.f32 -0.5, %v1100
        %v1172 = vadd.f32 %v1171, 1.0
        %v1173 = vmul.f32 %v1172, %v1100
        %v1174 = vand.u32 2147483647, %v1100
        %vm1175 = vcmp.lt.f32.partialorder %v1174, 0.0004427343
        %v1176 = vsel %vm1175, %v1173, %v1170
        %v1177 = vadd.f32 %v1102, 1.0
        %v1178 = vlog2.pop %v1177
        %v1179 = vmul.f32 %v1178, 0.6931472
        %v1180 = vmul.f32 -0.5, %v1102
        %v1181 = vadd.f32 %v1180, 1.0
        %v1182 = vmul.f32 %v1181, %v1102
        %v1183 = vand.u32 2147483647, %v1102
        %vm1184 = vcmp.lt.f32.partialorder %v1183, 0.0004427343
        %v1185 = vsel %vm1184, %v1182, %v1179
        %v1186 = vadd.f32 %v1104, 1.0
        %v1187 = vlog2.pop %v1186
        %v1188 = vmul.f32 %v1187, 0.6931472
        %v1189 = vmul.f32 -0.5, %v1104
        %v1190 = vadd.f32 %v1189, 1.0
        %v1191 = vmul.f32 %v1190, %v1104
        %v1192 = vand.u32 2147483647, %v1104
        %vm1193 = vcmp.lt.f32.partialorder %v1192, 0.0004427343
        %v1194 = vsel %vm1193, %v1191, %v1188
        %v1195 = vadd.f32 %v1106, 1.0
        %v1196 = vlog2.pop %v1195
        %v1197 = vmul.f32 %v1196, 0.6931472
        %v1198 = vmul.f32 -0.5, %v1106
        %v1199 = vadd.f32 %v1198, 1.0
        %v1200 = vmul.f32 %v1199, %v1106
        %v1201 = vand.u32 2147483647, %v1106
        %vm1202 = vcmp.lt.f32.partialorder %v1201, 0.0004427343
        %v1203 = vsel %vm1202, %v1200, %v1197
        %v1204 = vadd.f32 %v1108, 1.0
        %v1205 = vlog2.pop %v1204
        %v1206 = vmul.f32 %v1205, 0.6931472
        %v1207 = vmul.f32 -0.5, %v1108
        %v1208 = vadd.f32 %v1207, 1.0
        %v1209 = vmul.f32 %v1208, %v1108
        %v1210 = vand.u32 2147483647, %v1108
        %vm1211 = vcmp.lt.f32.partialorder %v1210, 0.0004427343
        %v1212 = vsel %vm1211, %v1209, %v1206
        %v1213 = vadd.f32 %v1110, 1.0
        %v1214 = vlog2.pop %v1213
        %v1215 = vmul.f32 %v1214, 0.6931472
        %v1216 = vmul.f32 -0.5, %v1110
        %v1217 = vadd.f32 %v1216, 1.0
        %v1218 = vmul.f32 %v1217, %v1110
        %v1219 = vand.u32 2147483647, %v1110
        %vm1220 = vcmp.lt.f32.partialorder %v1219, 0.0004427343
        %v1221 = vsel %vm1220, %v1218, %v1215
        %v1222 = vadd.f32 %v1112, 1.0
        %v1223 = vlog2.pop %v1222
        %v1224 = vmul.f32 %v1223, 0.6931472
        %v1225 = vmul.f32 -0.5, %v1112
        %v1226 = vadd.f32 %v1225, 1.0
        %v1227 = vmul.f32 %v1226, %v1112
        %v1228 = vand.u32 2147483647, %v1112
        %vm1229 = vcmp.lt.f32.partialorder %v1228, 0.0004427343
        %v1230 = vsel %vm1229, %v1227, %v1224
        %v1231 = vadd.f32 %v1114, 1.0
        %v1232 = vlog2.pop %v1231
        %v1233 = vmul.f32 %v1232, 0.6931472
        %v1234 = vmul.f32 -0.5, %v1114
        %v1235 = vadd.f32 %v1234, 1.0
        %v1236 = vmul.f32 %v1235, %v1114
        %v1237 = vand.u32 2147483647, %v1114
        %vm1238 = vcmp.lt.f32.partialorder %v1237, 0.0004427343
        %v1239 = vsel %vm1238, %v1236, %v1233
        %v1240 = vadd.f32 %v1116, 1.0
        %v1241 = vlog2.pop %v1240
        %v1242 = vmul.f32 %v1241, 0.6931472
        %v1243 = vmul.f32 -0.5, %v1116
        %v1244 = vadd.f32 %v1243, 1.0
        %v1245 = vmul.f32 %v1244, %v1116
        %v1246 = vand.u32 2147483647, %v1116
        %vm1247 = vcmp.lt.f32.partialorder %v1246, 0.0004427343
        %v1248 = vsel %vm1247, %v1245, %v1242
        %v1249 = vadd.f32 %v1118, 1.0
        %v1250 = vlog2.pop %v1249
        %v1251 = vmul.f32 %v1250, 0.6931472
        %v1252 = vmul.f32 -0.5, %v1118
        %v1253 = vadd.f32 %v1252, 1.0
        %v1254 = vmul.f32 %v1253, %v1118
        %v1255 = vand.u32 2147483647, %v1118
        %vm1256 = vcmp.lt.f32.partialorder %v1255, 0.0004427343
        %v1257 = vsel %vm1256, %v1254, %v1251
        %v1258 = vadd.f32 %v1120, 1.0
        %v1259 = vlog2.pop %v1258
        %v1260 = vmul.f32 %v1259, 0.6931472
        %v1261 = vmul.f32 -0.5, %v1120
        %v1262 = vadd.f32 %v1261, 1.0
        %v1263 = vmul.f32 %v1262, %v1120
        %v1264 = vand.u32 2147483647, %v1120
        %vm1265 = vcmp.lt.f32.partialorder %v1264, 0.0004427343
        %v1266 = vsel %vm1265, %v1263, %v1260
        %v1267 = vadd.f32 %v1122, 1.0
        %v1268 = vlog2.pop %v1267
        %v1269 = vmul.f32 %v1268, 0.6931472
        %v1270 = vmul.f32 -0.5, %v1122
        %v1271 = vadd.f32 %v1270, 1.0
        %v1272 = vmul.f32 %v1271, %v1122
        %v1273 = vand.u32 2147483647, %v1122
        %vm1274 = vcmp.lt.f32.partialorder %v1273, 0.0004427343
        %v1275 = vsel %vm1274, %v1272, %v1269
        %v1276 = vadd.f32 %v1124, 1.0
        %v1277 = vlog2.pop %v1276
        %v1278 = vmul.f32 %v1277, 0.6931472
        %v1279 = vmul.f32 -0.5, %v1124
        %v1280 = vadd.f32 %v1279, 1.0
        %v1281 = vmul.f32 %v1280, %v1124
        %v1282 = vand.u32 2147483647, %v1124
        %vm1283 = vcmp.lt.f32.partialorder %v1282, 0.0004427343
        %v1284 = vsel %vm1283, %v1281, %v1278
        %v1285 = vmul.f32 %v1149, 0.01
        %v1286 = vmul.f32 %v1158, 0.01
        %v1287 = vmul.f32 %v1167, 0.01
        %v1288 = vmul.f32 %v1176, 0.01
        %v1289 = vmul.f32 %v1185, 0.01
        %v1290 = vmul.f32 %v1194, 0.01
        %v1291 = vmul.f32 %v1203, 0.01
        %v1292 = vmul.f32 %v1212, 0.01
        %v1293 = vmul.f32 %v1221, 0.01
        %v1294 = vmul.f32 %v1230, 0.01
        %v1295 = vmul.f32 %v1239, 0.01
        %v1296 = vmul.f32 %v1248, 0.01
        %v1297 = vmul.f32 %v1257, 0.01
        %v1298 = vmul.f32 %v1266, 0.01
        %v1299 = vmul.f32 %v1275, 0.01
        %v1300 = vmul.f32 %v1284, 0.01
        %v1301 = vsel %vm1125, %v1023, %v1285
        %v1302 = vsel %vm1126, %v1025, %v1286
        %v1303 = vsel %vm1127, %v1027, %v1287
        %v1304 = vsel %vm1128, %v1029, %v1288
        %v1305 = vsel %vm1129, %v1033, %v1289
        %v1306 = vsel %vm1130, %v1035, %v1290
        %v1307 = vsel %vm1131, %v1037, %v1291
        %v1308 = vsel %vm1132, %v1039, %v1292
        %v1309 = vsel %vm1133, %v1043, %v1293
        %v1310 = vsel %vm1134, %v1045, %v1294
        %v1311 = vsel %vm1135, %v1047, %v1295
        %v1312 = vsel %vm1136, %v1049, %v1296
        %v1313 = vsel %vm1137, %v1053, %v1297
        %v1314 = vsel %vm1138, %v1055, %v1298
        %v1315 = vsel %vm1139, %v1057, %v1299
        %v1316 = vsel %vm1140, %v1059, %v1300
        %v1317 = vadd.f32 %v1094, 1.0
        %v1318 = vadd.f32 %v1096, 1.0
        %v1319 = vadd.f32 %v1098, 1.0
        %v1320 = vadd.f32 %v1100, 1.0
        %v1321 = vadd.f32 %v1102, 1.0
        %v1322 = vadd.f32 %v1104, 1.0
        %v1323 = vadd.f32 %v1106, 1.0
        %v1324 = vadd.f32 %v1108, 1.0
        %v1325 = vadd.f32 %v1110, 1.0
        %v1326 = vadd.f32 %v1112, 1.0
        %v1327 = vadd.f32 %v1114, 1.0
        %v1328 = vadd.f32 %v1116, 1.0
        %v1329 = vadd.f32 %v1118, 1.0
        %v1330 = vadd.f32 %v1120, 1.0
        %v1331 = vadd.f32 %v1122, 1.0
        %v1332 = vadd.f32 %v1124, 1.0
        %v1333 = vrcp.pop %v1317
        %v1334 = vrcp.pop %v1318
        %v1335 = vrcp.pop %v1319
        %v1336 = vrcp.pop %v1320
        %v1337 = vrcp.pop %v1321
        %v1338 = vrcp.pop %v1322
        %v1339 = vrcp.pop %v1323
        %v1340 = vrcp.pop %v1324
        %v1341 = vrcp.pop %v1325
        %v1342 = vrcp.pop %v1326
        %v1343 = vrcp.pop %v1327
        %v1344 = vrcp.pop %v1328
        %v1345 = vrcp.pop %v1329
        %v1346 = vrcp.pop %v1330
        %v1347 = vrcp.pop %v1331
        %v1348 = vrcp.pop %v1332
        %v1349 = vmul.f32 %v1094, %v1333
        %v1350 = vmul.f32 %v1096, %v1334
        %v1351 = vmul.f32 %v1098, %v1335
        %v1352 = vmul.f32 %v1100, %v1336
        %v1353 = vmul.f32 %v1102, %v1337
        %v1354 = vmul.f32 %v1104, %v1338
        %v1355 = vmul.f32 %v1106, %v1339
        %v1356 = vmul.f32 %v1108, %v1340
        %v1357 = vmul.f32 %v1110, %v1341
        %v1358 = vmul.f32 %v1112, %v1342
        %v1359 = vmul.f32 %v1114, %v1343
        %v1360 = vmul.f32 %v1116, %v1344
        %v1361 = vmul.f32 %v1118, %v1345
        %v1362 = vmul.f32 %v1120, %v1346
        %v1363 = vmul.f32 %v1122, %v1347
        %v1364 = vmul.f32 %v1124, %v1348
        %v1365 = vld [vmem:[%s2 + $0x20] sm:$0xf]
        %v1366 = vld [vmem:[%s2 + $0x24] sm:$0xf]
        %v1367 = vld [vmem:[%s2 + $0x28] sm:$0xf]
        %v1368 = vld [vmem:[%s2 + $0x2c] sm:$0xf]
        %v1369 = vld [vmem:[%s2 + $0x30] sm:$0xf]
        %v1370 = vld [vmem:[%s2 + $0x34] sm:$0xf]
        %v1371 = vld [vmem:[%s2 + $0x38] sm:$0xf]
        %v1372 = vld [vmem:[%s2 + $0x3c] sm:$0xf]
        %v1373 = vpack.c.bf16 %v1303, %v1301
        %v1374 = vpack.c.bf16 %v1304, %v1302
        %v1375 = vpack.c.bf16 %v1307, %v1305
        %v1376 = vpack.c.bf16 %v1308, %v1306
        %v1377 = vpack.c.bf16 %v1311, %v1309
        %v1378 = vpack.c.bf16 %v1312, %v1310
        %v1379 = vpack.c.bf16 %v1315, %v1313
        %v1380 = vpack.c.bf16 %v1316, %v1314
        %v1389 = vunpack.c.l.b16 %v1365
        %v1390 = vunpack.c.l.b16 %v1366
        %v1391 = vunpack.c.l.b16 %v1367
        %v1392 = vunpack.c.l.b16 %v1368
        %v1393 = vunpack.c.l.b16 %v1369
        %v1394 = vunpack.c.l.b16 %v1370
        %v1395 = vunpack.c.l.b16 %v1371
        %v1396 = vunpack.c.l.b16 %v1372
        %v1397 = vpack.c.b16 %v1390, %v1389
        %v1398 = vpack.c.b16 %v1392, %v1391
        %v1399 = vpack.c.b16 %v1394, %v1393
        %v1400 = vpack.c.b16 %v1396, %v1395
        %v1402 = vsel %vm975, %v1397, 0
        %v1405 = vsel %vm975, %v1398, 0
        %v1408 = vsel %vm975, %v1399, 0
        %v1411 = vsel %vm975, %v1400, 0
        %1413 = vmatprep.subr.bf16.mxu0 %v1374
        %1414 = vmatpush1.bf16.msra.mxu0 %v1373
        %1415 = vmatprep.subr.bf16.mxu0 %v1376
        %1416 = vmatpush1.bf16.msra.mxu0 %v1375
        %1417 = vmatprep.subr.bf16.mxu0 %v1378
        %1418 = vmatpush1.bf16.msra.mxu0 %v1377
        %1419 = vmatprep.subr.bf16.mxu0 %v1380
        %1420 = vmatpush1.bf16.msra.mxu0 %v1379
        %1421 = vmatprep.subr.bf16.mxu0 0
        %1422 = vmatpush1.bf16.msra.mxu0 0
        %1423 = vmatprep.subr.bf16.mxu0 0
        %1424 = vmatpush1.bf16.msra.mxu0 0
        %1425 = vmatprep.subr.bf16.mxu0 0
        %1426 = vmatpush1.bf16.msra.mxu0 0
        %1427 = vmatprep.subr.bf16.mxu0 0
        %1428 = vmatpush1.bf16.msra.mxu0 0
        %1429 = vmatprep.subr.bf16.mxu0 0
        %1430 = vmatpush1.bf16.msra.mxu0 0
        %1431 = vmatprep.subr.bf16.mxu0 0
        %1432 = vmatpush1.bf16.msra.mxu0 0
        %1433 = vmatprep.subr.bf16.mxu0 0
        %1434 = vmatpush1.bf16.msra.mxu0 0
        %1435 = vmatprep.subr.bf16.mxu0 0
        %1436 = vmatpush1.bf16.msra.mxu0 0
        %1437 = vmatprep.subr.bf16.mxu0 0
        %1438 = vmatpush1.bf16.msra.mxu0 0
        %1439 = vmatprep.subr.bf16.mxu0 0
        %1440 = vmatpush1.bf16.msra.mxu0 0
        %1441 = vmatprep.subr.bf16.mxu0 0
        %1442 = vmatpush1.bf16.msra.mxu0 0
        %1443 = vmatprep.subr.bf16.mxu0 0
        %1444 = vmatpush1.bf16.msra.mxu0 0
        %1445 = vmatprep.mubr.bf16.mxu0 0
        %1446 = vmatmul.mubr.bf16.gmra.mrb[0].mxu0 %v1402
        %v1447 = vpop.f32.mrb[0].mxu0
        %v1448 = vadd.f32 %v509, %v1447
        %v1449 = vpop.f32.mrb[0].mxu0
        %v1450 = vadd.f32 %v511, %v1449
        %v1451 = vpop.f32.mrb[0].mxu0
        %v1452 = vadd.f32 %v513, %v1451
        %v1453 = vpop.f32.mrb[0].mxu0
        %v1454 = vadd.f32 %v515, %v1453
        %1455 = vmatprep.mubr.bf16.mxu0 0
        %1456 = vmatmul.mubr.bf16.gmra.mrb[0].mxu0 %v1405
        %v1457 = vpop.f32.mrb[0].mxu0
        %v1458 = vadd.f32 %v519, %v1457
        %v1459 = vpop.f32.mrb[0].mxu0
        %v1460 = vadd.f32 %v521, %v1459
        %v1461 = vpop.f32.mrb[0].mxu0
        %v1462 = vadd.f32 %v523, %v1461
        %v1463 = vpop.f32.mrb[0].mxu0
        %v1464 = vadd.f32 %v525, %v1463
        %1465 = vmatprep.mubr.bf16.mxu0 0
        %1466 = vmatmul.mubr.bf16.gmra.mrb[0].mxu0 %v1408
        %v1467 = vpop.f32.mrb[0].mxu0
        %v1468 = vadd.f32 %v529, %v1467
        %v1469 = vpop.f32.mrb[0].mxu0
        %v1470 = vadd.f32 %v531, %v1469
        %v1471 = vpop.f32.mrb[0].mxu0
        %v1472 = vadd.f32 %v533, %v1471
        %v1473 = vpop.f32.mrb[0].mxu0
        %v1474 = vadd.f32 %v535, %v1473
        %1475 = vmatprep.mubr.bf16.mxu0 0
        %1476 = vmatmul.mubr.bf16.gmra.mrb[0].mxu0 %v1411
        %v1477 = vpop.f32.mrb[0].mxu0
        %v1478 = vadd.f32 %v539, %v1477
        %v1479 = vpop.f32.mrb[0].mxu0
        %v1480 = vadd.f32 %v541, %v1479
        %v1481 = vpop.f32.mrb[0].mxu0
        %v1482 = vadd.f32 %v543, %v1481
        %v1483 = vpop.f32.mrb[0].mxu0
        %v1484 = vadd.f32 %v545, %v1483
        %1485 = vdwg.mxu0
        %1486 = vset.pattern.permute.xlu0 2
        %1487 = vperm.xlu0 %1486, %v256
        %v1488 = vpop.permute.xlu0 %1487
        %1490 = vset.pattern.permute.xlu0 2
        %1491 = vperm.xlu0 %1490, %v257
        %v1492 = vpop.permute.xlu0 %1491
        %1494 = vset.pattern.permute.xlu0 2
        %1495 = vperm.xlu0 %1494, %v258
        %v1496 = vpop.permute.xlu0 %1495
        %1498 = vset.pattern.permute.xlu0 2
        %1499 = vperm.xlu0 %1498, %v259
        %v1500 = vpop.permute.xlu0 %1499
        %1502 = vset.pattern.permute.xlu0 2
        %1503 = vperm.xlu0 %1502, %v260
        %v1504 = vpop.permute.xlu0 %1503
        %1506 = vset.pattern.permute.xlu0 2
        %1507 = vperm.xlu0 %1506, %v261
        %v1508 = vpop.permute.xlu0 %1507
        %1510 = vset.pattern.permute.xlu0 2
        %1511 = vperm.xlu0 %1510, %v262
        %v1512 = vpop.permute.xlu0 %1511
        %1514 = vset.pattern.permute.xlu0 2
        %1515 = vperm.xlu0 %1514, %v263
        %v1516 = vpop.permute.xlu0 %1515
        %v1518 = vadd.f32 %v1448, %v1488
        %v1519 = vadd.f32 %v1450, %v1488
        %v1520 = vadd.f32 %v1452, %v1492
        %v1521 = vadd.f32 %v1454, %v1492
        %v1522 = vadd.f32 %v1458, %v1496
        %v1523 = vadd.f32 %v1460, %v1496
        %v1524 = vadd.f32 %v1462, %v1500
        %v1525 = vadd.f32 %v1464, %v1500
        %v1526 = vadd.f32 %v1468, %v1504
        %v1527 = vadd.f32 %v1470, %v1504
        %v1528 = vadd.f32 %v1472, %v1508
        %v1529 = vadd.f32 %v1474, %v1508
        %v1530 = vadd.f32 %v1478, %v1512
        %v1531 = vadd.f32 %v1480, %v1512
        %v1532 = vadd.f32 %v1482, %v1516
        %v1533 = vadd.f32 %v1484, %v1516
        %v1534 = vmul.f32 %v1518, 100.0
        %v1535 = vmul.f32 %v1519, 100.0
        %v1536 = vmul.f32 %v1520, 100.0
        %v1537 = vmul.f32 %v1521, 100.0
        %v1538 = vmul.f32 %v1522, 100.0
        %v1539 = vmul.f32 %v1523, 100.0
        %v1540 = vmul.f32 %v1524, 100.0
        %v1541 = vmul.f32 %v1525, 100.0
        %v1542 = vmul.f32 %v1526, 100.0
        %v1543 = vmul.f32 %v1527, 100.0
        %v1544 = vmul.f32 %v1528, 100.0
        %v1545 = vmul.f32 %v1529, 100.0
        %v1546 = vmul.f32 %v1530, 100.0
        %v1547 = vmul.f32 %v1531, 100.0
        %v1548 = vmul.f32 %v1532, 100.0
        %v1549 = vmul.f32 %v1533, 100.0
        %v1550 = vmin.f32 %v1534, 20.0
        %v1551 = vmin.f32 %v1535, 20.0
        %v1552 = vmin.f32 %v1536, 20.0
        %v1553 = vmin.f32 %v1537, 20.0
        %v1554 = vmin.f32 %v1538, 20.0
        %v1555 = vmin.f32 %v1539, 20.0
        %v1556 = vmin.f32 %v1540, 20.0
        %v1557 = vmin.f32 %v1541, 20.0
        %v1558 = vmin.f32 %v1542, 20.0
        %v1559 = vmin.f32 %v1543, 20.0
        %v1560 = vmin.f32 %v1544, 20.0
        %v1561 = vmin.f32 %v1545, 20.0
        %v1562 = vmin.f32 %v1546, 20.0
        %v1563 = vmin.f32 %v1547, 20.0
        %v1564 = vmin.f32 %v1548, 20.0
        %v1565 = vmin.f32 %v1549, 20.0
        %v1566 = vmul.f32 %v1550, 1.442695
        %v1567 = vpow.pop %v1566
        %v1568 = vmul.f32 %v1551, 1.442695
        %v1569 = vpow.pop %v1568
        %v1570 = vmul.f32 %v1552, 1.442695
        %v1571 = vpow.pop %v1570
        %v1572 = vmul.f32 %v1553, 1.442695
        %v1573 = vpow.pop %v1572
        %v1574 = vmul.f32 %v1554, 1.442695
        %v1575 = vpow.pop %v1574
        %v1576 = vmul.f32 %v1555, 1.442695
        %v1577 = vpow.pop %v1576
        %v1578 = vmul.f32 %v1556, 1.442695
        %v1579 = vpow.pop %v1578
        %v1580 = vmul.f32 %v1557, 1.442695
        %v1581 = vpow.pop %v1580
        %v1582 = vmul.f32 %v1558, 1.442695
        %v1583 = vpow.pop %v1582
        %v1584 = vmul.f32 %v1559, 1.442695
        %v1585 = vpow.pop %v1584
        %v1586 = vmul.f32 %v1560, 1.442695
        %v1587 = vpow.pop %v1586
        %v1588 = vmul.f32 %v1561, 1.442695
        %v1589 = vpow.pop %v1588
        %v1590 = vmul.f32 %v1562, 1.442695
        %v1591 = vpow.pop %v1590
        %v1592 = vmul.f32 %v1563, 1.442695
        %v1593 = vpow.pop %v1592
        %v1594 = vmul.f32 %v1564, 1.442695
        %v1595 = vpow.pop %v1594
        %v1596 = vmul.f32 %v1565, 1.442695
        %v1597 = vpow.pop %v1596
        %vm1598 = vcmp.gt.f32.partialorder %v1534, 20.0
        %vm1599 = vcmp.gt.f32.partialorder %v1535, 20.0
        %vm1600 = vcmp.gt.f32.partialorder %v1536, 20.0
        %vm1601 = vcmp.gt.f32.partialorder %v1537, 20.0
        %vm1602 = vcmp.gt.f32.partialorder %v1538, 20.0
        %vm1603 = vcmp.gt.f32.partialorder %v1539, 20.0
        %vm1604 = vcmp.gt.f32.partialorder %v1540, 20.0
        %vm1605 = vcmp.gt.f32.partialorder %v1541, 20.0
        %vm1606 = vcmp.gt.f32.partialorder %v1542, 20.0
        %vm1607 = vcmp.gt.f32.partialorder %v1543, 20.0
        %vm1608 = vcmp.gt.f32.partialorder %v1544, 20.0
        %vm1609 = vcmp.gt.f32.partialorder %v1545, 20.0
        %vm1610 = vcmp.gt.f32.partialorder %v1546, 20.0
        %vm1611 = vcmp.gt.f32.partialorder %v1547, 20.0
        %vm1612 = vcmp.gt.f32.partialorder %v1548, 20.0
        %vm1613 = vcmp.gt.f32.partialorder %v1549, 20.0
        %v1614 = vadd.f32 %v1567, 1.0
        %v1615 = vlog2.pop %v1614
        %v1616 = vmul.f32 %v1615, 0.6931472
        %v1617 = vmul.f32 -0.5, %v1567
        %v1618 = vadd.f32 %v1617, 1.0
        %v1619 = vmul.f32 %v1618, %v1567
        %v1620 = vand.u32 2147483647, %v1567
        %vm1621 = vcmp.lt.f32.partialorder %v1620, 0.0004427343
        %v1622 = vsel %vm1621, %v1619, %v1616
        %v1623 = vadd.f32 %v1569, 1.0
        %v1624 = vlog2.pop %v1623
        %v1625 = vmul.f32 %v1624, 0.6931472
        %v1626 = vmul.f32 -0.5, %v1569
        %v1627 = vadd.f32 %v1626, 1.0
        %v1628 = vmul.f32 %v1627, %v1569
        %v1629 = vand.u32 2147483647, %v1569
        %vm1630 = vcmp.lt.f32.partialorder %v1629, 0.0004427343
        %v1631 = vsel %vm1630, %v1628, %v1625
        %v1632 = vadd.f32 %v1571, 1.0
        %v1633 = vlog2.pop %v1632
        %v1634 = vmul.f32 %v1633, 0.6931472
        %v1635 = vmul.f32 -0.5, %v1571
        %v1636 = vadd.f32 %v1635, 1.0
        %v1637 = vmul.f32 %v1636, %v1571
        %v1638 = vand.u32 2147483647, %v1571
        %vm1639 = vcmp.lt.f32.partialorder %v1638, 0.0004427343
        %v1640 = vsel %vm1639, %v1637, %v1634
        %v1641 = vadd.f32 %v1573, 1.0
        %v1642 = vlog2.pop %v1641
        %v1643 = vmul.f32 %v1642, 0.6931472
        %v1644 = vmul.f32 -0.5, %v1573
        %v1645 = vadd.f32 %v1644, 1.0
        %v1646 = vmul.f32 %v1645, %v1573
        %v1647 = vand.u32 2147483647, %v1573
        %vm1648 = vcmp.lt.f32.partialorder %v1647, 0.0004427343
        %v1649 = vsel %vm1648, %v1646, %v1643
        %v1650 = vadd.f32 %v1575, 1.0
        %v1651 = vlog2.pop %v1650
        %v1652 = vmul.f32 %v1651, 0.6931472
        %v1653 = vmul.f32 -0.5, %v1575
        %v1654 = vadd.f32 %v1653, 1.0
        %v1655 = vmul.f32 %v1654, %v1575
        %v1656 = vand.u32 2147483647, %v1575
        %vm1657 = vcmp.lt.f32.partialorder %v1656, 0.0004427343
        %v1658 = vsel %vm1657, %v1655, %v1652
        %v1659 = vadd.f32 %v1577, 1.0
        %v1660 = vlog2.pop %v1659
        %v1661 = vmul.f32 %v1660, 0.6931472
        %v1662 = vmul.f32 -0.5, %v1577
        %v1663 = vadd.f32 %v1662, 1.0
        %v1664 = vmul.f32 %v1663, %v1577
        %v1665 = vand.u32 2147483647, %v1577
        %vm1666 = vcmp.lt.f32.partialorder %v1665, 0.0004427343
        %v1667 = vsel %vm1666, %v1664, %v1661
        %v1668 = vadd.f32 %v1579, 1.0
        %v1669 = vlog2.pop %v1668
        %v1670 = vmul.f32 %v1669, 0.6931472
        %v1671 = vmul.f32 -0.5, %v1579
        %v1672 = vadd.f32 %v1671, 1.0
        %v1673 = vmul.f32 %v1672, %v1579
        %v1674 = vand.u32 2147483647, %v1579
        %vm1675 = vcmp.lt.f32.partialorder %v1674, 0.0004427343
        %v1676 = vsel %vm1675, %v1673, %v1670
        %v1677 = vadd.f32 %v1581, 1.0
        %v1678 = vlog2.pop %v1677
        %v1679 = vmul.f32 %v1678, 0.6931472
        %v1680 = vmul.f32 -0.5, %v1581
        %v1681 = vadd.f32 %v1680, 1.0
        %v1682 = vmul.f32 %v1681, %v1581
        %v1683 = vand.u32 2147483647, %v1581
        %vm1684 = vcmp.lt.f32.partialorder %v1683, 0.0004427343
        %v1685 = vsel %vm1684, %v1682, %v1679
        %v1686 = vadd.f32 %v1583, 1.0
        %v1687 = vlog2.pop %v1686
        %v1688 = vmul.f32 %v1687, 0.6931472
        %v1689 = vmul.f32 -0.5, %v1583
        %v1690 = vadd.f32 %v1689, 1.0
        %v1691 = vmul.f32 %v1690, %v1583
        %v1692 = vand.u32 2147483647, %v1583
        %vm1693 = vcmp.lt.f32.partialorder %v1692, 0.0004427343
        %v1694 = vsel %vm1693, %v1691, %v1688
        %v1695 = vadd.f32 %v1585, 1.0
        %v1696 = vlog2.pop %v1695
        %v1697 = vmul.f32 %v1696, 0.6931472
        %v1698 = vmul.f32 -0.5, %v1585
        %v1699 = vadd.f32 %v1698, 1.0
        %v1700 = vmul.f32 %v1699, %v1585
        %v1701 = vand.u32 2147483647, %v1585
        %vm1702 = vcmp.lt.f32.partialorder %v1701, 0.0004427343
        %v1703 = vsel %vm1702, %v1700, %v1697
        %v1704 = vadd.f32 %v1587, 1.0
        %v1705 = vlog2.pop %v1704
        %v1706 = vmul.f32 %v1705, 0.6931472
        %v1707 = vmul.f32 -0.5, %v1587
        %v1708 = vadd.f32 %v1707, 1.0
        %v1709 = vmul.f32 %v1708, %v1587
        %v1710 = vand.u32 2147483647, %v1587
        %vm1711 = vcmp.lt.f32.partialorder %v1710, 0.0004427343
        %v1712 = vsel %vm1711, %v1709, %v1706
        %v1713 = vadd.f32 %v1589, 1.0
        %v1714 = vlog2.pop %v1713
        %v1715 = vmul.f32 %v1714, 0.6931472
        %v1716 = vmul.f32 -0.5, %v1589
        %v1717 = vadd.f32 %v1716, 1.0
        %v1718 = vmul.f32 %v1717, %v1589
        %v1719 = vand.u32 2147483647, %v1589
        %vm1720 = vcmp.lt.f32.partialorder %v1719, 0.0004427343
        %v1721 = vsel %vm1720, %v1718, %v1715
        %v1722 = vadd.f32 %v1591, 1.0
        %v1723 = vlog2.pop %v1722
        %v1724 = vmul.f32 %v1723, 0.6931472
        %v1725 = vmul.f32 -0.5, %v1591
        %v1726 = vadd.f32 %v1725, 1.0
        %v1727 = vmul.f32 %v1726, %v1591
        %v1728 = vand.u32 2147483647, %v1591
        %vm1729 = vcmp.lt.f32.partialorder %v1728, 0.0004427343
        %v1730 = vsel %vm1729, %v1727, %v1724
        %v1731 = vadd.f32 %v1593, 1.0
        %v1732 = vlog2.pop %v1731
        %v1733 = vmul.f32 %v1732, 0.6931472
        %v1734 = vmul.f32 -0.5, %v1593
        %v1735 = vadd.f32 %v1734, 1.0
        %v1736 = vmul.f32 %v1735, %v1593
        %v1737 = vand.u32 2147483647, %v1593
        %vm1738 = vcmp.lt.f32.partialorder %v1737, 0.0004427343
        %v1739 = vsel %vm1738, %v1736, %v1733
        %v1740 = vadd.f32 %v1595, 1.0
        %v1741 = vlog2.pop %v1740
        %v1742 = vmul.f32 %v1741, 0.6931472
        %v1743 = vmul.f32 -0.5, %v1595
        %v1744 = vadd.f32 %v1743, 1.0
        %v1745 = vmul.f32 %v1744, %v1595
        %v1746 = vand.u32 2147483647, %v1595
        %vm1747 = vcmp.lt.f32.partialorder %v1746, 0.0004427343
        %v1748 = vsel %vm1747, %v1745, %v1742
        %v1749 = vadd.f32 %v1597, 1.0
        %v1750 = vlog2.pop %v1749
        %v1751 = vmul.f32 %v1750, 0.6931472
        %v1752 = vmul.f32 -0.5, %v1597
        %v1753 = vadd.f32 %v1752, 1.0
        %v1754 = vmul.f32 %v1753, %v1597
        %v1755 = vand.u32 2147483647, %v1597
        %vm1756 = vcmp.lt.f32.partialorder %v1755, 0.0004427343
        %v1757 = vsel %vm1756, %v1754, %v1751
        %v1758 = vmul.f32 %v1622, 0.01
        %v1759 = vmul.f32 %v1631, 0.01
        %v1760 = vmul.f32 %v1640, 0.01
        %v1761 = vmul.f32 %v1649, 0.01
        %v1762 = vmul.f32 %v1658, 0.01
        %v1763 = vmul.f32 %v1667, 0.01
        %v1764 = vmul.f32 %v1676, 0.01
        %v1765 = vmul.f32 %v1685, 0.01
        %v1766 = vmul.f32 %v1694, 0.01
        %v1767 = vmul.f32 %v1703, 0.01
        %v1768 = vmul.f32 %v1712, 0.01
        %v1769 = vmul.f32 %v1721, 0.01
        %v1770 = vmul.f32 %v1730, 0.01
        %v1771 = vmul.f32 %v1739, 0.01
        %v1772 = vmul.f32 %v1748, 0.01
        %v1773 = vmul.f32 %v1757, 0.01
        %v1774 = vsel %vm1598, %v1518, %v1758
        %v1775 = vsel %vm1599, %v1519, %v1759
        %v1776 = vsel %vm1600, %v1520, %v1760
        %v1777 = vsel %vm1601, %v1521, %v1761
        %v1778 = vsel %vm1602, %v1522, %v1762
        %v1779 = vsel %vm1603, %v1523, %v1763
        %v1780 = vsel %vm1604, %v1524, %v1764
        %v1781 = vsel %vm1605, %v1525, %v1765
        %v1782 = vsel %vm1606, %v1526, %v1766
        %v1783 = vsel %vm1607, %v1527, %v1767
        %v1784 = vsel %vm1608, %v1528, %v1768
        %v1785 = vsel %vm1609, %v1529, %v1769
        %v1786 = vsel %vm1610, %v1530, %v1770
        %v1787 = vsel %vm1611, %v1531, %v1771
        %v1788 = vsel %vm1612, %v1532, %v1772
        %v1789 = vsel %vm1613, %v1533, %v1773
        %v1790 = vadd.f32 %v1567, 1.0
        %v1791 = vadd.f32 %v1569, 1.0
        %v1792 = vadd.f32 %v1571, 1.0
        %v1793 = vadd.f32 %v1573, 1.0
        %v1794 = vadd.f32 %v1575, 1.0
        %v1795 = vadd.f32 %v1577, 1.0
        %v1796 = vadd.f32 %v1579, 1.0
        %v1797 = vadd.f32 %v1581, 1.0
        %v1798 = vadd.f32 %v1583, 1.0
        %v1799 = vadd.f32 %v1585, 1.0
        %v1800 = vadd.f32 %v1587, 1.0
        %v1801 = vadd.f32 %v1589, 1.0
        %v1802 = vadd.f32 %v1591, 1.0
        %v1803 = vadd.f32 %v1593, 1.0
        %v1804 = vadd.f32 %v1595, 1.0
        %v1805 = vadd.f32 %v1597, 1.0
        %v1806 = vrcp.pop %v1790
        %v1807 = vrcp.pop %v1791
        %v1808 = vrcp.pop %v1792
        %v1809 = vrcp.pop %v1793
        %v1810 = vrcp.pop %v1794
        %v1811 = vrcp.pop %v1795
        %v1812 = vrcp.pop %v1796
        %v1813 = vrcp.pop %v1797
        %v1814 = vrcp.pop %v1798
        %v1815 = vrcp.pop %v1799
        %v1816 = vrcp.pop %v1800
        %v1817 = vrcp.pop %v1801
        %v1818 = vrcp.pop %v1802
        %v1819 = vrcp.pop %v1803
        %v1820 = vrcp.pop %v1804
        %v1821 = vrcp.pop %v1805
        %v1822 = vmul.f32 %v1567, %v1806
        %v1823 = vmul.f32 %v1569, %v1807
        %v1824 = vmul.f32 %v1571, %v1808
        %v1825 = vmul.f32 %v1573, %v1809
        %v1826 = vmul.f32 %v1575, %v1810
        %v1827 = vmul.f32 %v1577, %v1811
        %v1828 = vmul.f32 %v1579, %v1812
        %v1829 = vmul.f32 %v1581, %v1813
        %v1830 = vmul.f32 %v1583, %v1814
        %v1831 = vmul.f32 %v1585, %v1815
        %v1832 = vmul.f32 %v1587, %v1816
        %v1833 = vmul.f32 %v1589, %v1817
        %v1834 = vmul.f32 %v1591, %v1818
        %v1835 = vmul.f32 %v1593, %v1819
        %v1836 = vmul.f32 %v1595, %v1820
        %v1837 = vmul.f32 %v1597, %v1821
        %v1838 = vld [vmem:[%s2 + $0x40] sm:$0xf]
        %v1839 = vld [vmem:[%s2 + $0x44] sm:$0xf]
        %v1840 = vld [vmem:[%s2 + $0x48] sm:$0xf]
        %v1841 = vld [vmem:[%s2 + $0x4c] sm:$0xf]
        %v1842 = vld [vmem:[%s2 + $0x50] sm:$0xf]
        %v1843 = vld [vmem:[%s2 + $0x54] sm:$0xf]
        %v1844 = vld [vmem:[%s2 + $0x58] sm:$0xf]
        %v1845 = vld [vmem:[%s2 + $0x5c] sm:$0xf]
        %v1846 = vpack.c.bf16 %v1776, %v1774
        %v1847 = vpack.c.bf16 %v1777, %v1775
        %v1848 = vpack.c.bf16 %v1780, %v1778
        %v1849 = vpack.c.bf16 %v1781, %v1779
        %v1850 = vpack.c.bf16 %v1784, %v1782
        %v1851 = vpack.c.bf16 %v1785, %v1783
        %v1852 = vpack.c.bf16 %v1788, %v1786
        %v1853 = vpack.c.bf16 %v1789, %v1787
        %1854 = vset.pattern.permute.xlu0 3
        %1855 = vperm.xlu0 %1854, %v256
        %v1856 = vpop.permute.xlu0 %1855
        %1858 = vset.pattern.permute.xlu0 3
        %1859 = vperm.xlu0 %1858, %v257
        %v1860 = vpop.permute.xlu0 %1859
        %1862 = vset.pattern.permute.xlu0 3
        %1863 = vperm.xlu0 %1862, %v258
        %v1864 = vpop.permute.xlu0 %1863
        %1866 = vset.pattern.permute.xlu0 3
        %1867 = vperm.xlu0 %1866, %v259
        %v1868 = vpop.permute.xlu0 %1867
        %1870 = vset.pattern.permute.xlu0 3
        %1871 = vperm.xlu0 %1870, %v260
        %v1872 = vpop.permute.xlu0 %1871
        %1874 = vset.pattern.permute.xlu0 3
        %1875 = vperm.xlu0 %1874, %v261
        %v1876 = vpop.permute.xlu0 %1875
        %1878 = vset.pattern.permute.xlu0 3
        %1879 = vperm.xlu0 %1878, %v262
        %v1880 = vpop.permute.xlu0 %1879
        %1882 = vset.pattern.permute.xlu0 3
        %1883 = vperm.xlu0 %1882, %v263
        %v1884 = vpop.permute.xlu0 %1883
        %v1894 = vunpack.c.l.b16 %v1838
        %v1895 = vunpack.c.l.b16 %v1839
        %v1896 = vunpack.c.l.b16 %v1840
        %v1897 = vunpack.c.l.b16 %v1841
        %v1898 = vunpack.c.l.b16 %v1842
        %v1899 = vunpack.c.l.b16 %v1843
        %v1900 = vunpack.c.l.b16 %v1844
        %v1901 = vunpack.c.l.b16 %v1845
        %v1902 = vpack.c.b16 %v1895, %v1894
        %v1903 = vpack.c.b16 %v1897, %v1896
        %v1904 = vpack.c.b16 %v1899, %v1898
        %v1905 = vpack.c.b16 %v1901, %v1900
        %v1907 = vsel %vm975, %v1902, 0
        %v1910 = vsel %vm975, %v1903, 0
        %v1913 = vsel %vm975, %v1904, 0
        %v1916 = vsel %vm975, %v1905, 0
        %1918 = vmatprep.subr.bf16.mxu0 %v1847
        %1919 = vmatpush1.bf16.msra.mxu0 %v1846
        %1920 = vmatprep.subr.bf16.mxu0 %v1849
        %1921 = vmatpush1.bf16.msra.mxu0 %v1848
        %1922 = vmatprep.subr.bf16.mxu0 %v1851
        %1923 = vmatpush1.bf16.msra.mxu0 %v1850
        %1924 = vmatprep.subr.bf16.mxu0 %v1853
        %1925 = vmatpush1.bf16.msra.mxu0 %v1852
        %1926 = vmatprep.subr.bf16.mxu0 0
        %1927 = vmatpush1.bf16.msra.mxu0 0
        %1928 = vmatprep.subr.bf16.mxu0 0
        %1929 = vmatpush1.bf16.msra.mxu0 0
        %1930 = vmatprep.subr.bf16.mxu0 0
        %1931 = vmatpush1.bf16.msra.mxu0 0
        %1932 = vmatprep.subr.bf16.mxu0 0
        %1933 = vmatpush1.bf16.msra.mxu0 0
        %1934 = vmatprep.subr.bf16.mxu0 0
        %1935 = vmatpush1.bf16.msra.mxu0 0
        %1936 = vmatprep.subr.bf16.mxu0 0
        %1937 = vmatpush1.bf16.msra.mxu0 0
        %1938 = vmatprep.subr.bf16.mxu0 0
        %1939 = vmatpush1.bf16.msra.mxu0 0
        %1940 = vmatprep.subr.bf16.mxu0 0
        %1941 = vmatpush1.bf16.msra.mxu0 0
        %1942 = vmatprep.subr.bf16.mxu0 0
        %1943 = vmatpush1.bf16.msra.mxu0 0
        %1944 = vmatprep.subr.bf16.mxu0 0
        %1945 = vmatpush1.bf16.msra.mxu0 0
        %1946 = vmatprep.subr.bf16.mxu0 0
        %1947 = vmatpush1.bf16.msra.mxu0 0
        %1948 = vmatprep.subr.bf16.mxu0 0
        %1949 = vmatpush1.bf16.msra.mxu0 0
        %1950 = vmatprep.mubr.bf16.mxu0 0
        %1951 = vmatmul.mubr.bf16.gmra.mrb[0].mxu0 %v1907
        %v1952 = vpop.f32.mrb[0].mxu0
        %v1953 = vadd.f32 %v1856, %v1952
        %v1954 = vpop.f32.mrb[0].mxu0
        %v1955 = vadd.f32 %v1856, %v1954
        %v1956 = vpop.f32.mrb[0].mxu0
        %v1957 = vadd.f32 %v1860, %v1956
        %v1958 = vpop.f32.mrb[0].mxu0
        %v1959 = vadd.f32 %v1860, %v1958
        %1960 = vmatprep.mubr.bf16.mxu0 0
        %1961 = vmatmul.mubr.bf16.gmra.mrb[0].mxu0 %v1910
        %v1962 = vpop.f32.mrb[0].mxu0
        %v1963 = vadd.f32 %v1864, %v1962
        %v1964 = vpop.f32.mrb[0].mxu0
        %v1965 = vadd.f32 %v1864, %v1964
        %v1966 = vpop.f32.mrb[0].mxu0
        %v1967 = vadd.f32 %v1868, %v1966
        %v1968 = vpop.f32.mrb[0].mxu0
        %v1969 = vadd.f32 %v1868, %v1968
        %1970 = vmatprep.mubr.bf16.mxu0 0
        %1971 = vmatmul.mubr.bf16.gmra.mrb[0].mxu0 %v1913
        %v1972 = vpop.f32.mrb[0].mxu0
        %v1973 = vadd.f32 %v1872, %v1972
        %v1974 = vpop.f32.mrb[0].mxu0
        %v1975 = vadd.f32 %v1872, %v1974
        %v1976 = vpop.f32.mrb[0].mxu0
        %v1977 = vadd.f32 %v1876, %v1976
        %v1978 = vpop.f32.mrb[0].mxu0
        %v1979 = vadd.f32 %v1876, %v1978
        %1980 = vmatprep.mubr.bf16.mxu0 0
        %1981 = vmatmul.mubr.bf16.gmra.mrb[0].mxu0 %v1916
        %v1982 = vpop.f32.mrb[0].mxu0
        %v1983 = vadd.f32 %v1880, %v1982
        %v1984 = vpop.f32.mrb[0].mxu0
        %v1985 = vadd.f32 %v1880, %v1984
        %v1986 = vpop.f32.mrb[0].mxu0
        %v1987 = vadd.f32 %v1884, %v1986
        %v1988 = vpop.f32.mrb[0].mxu0
        %v1989 = vadd.f32 %v1884, %v1988
        %1990 = vdwg.mxu0
        %v1991 = vmul.f32 %v1953, 100.0
        %v1992 = vmul.f32 %v1955, 100.0
        %v1993 = vmul.f32 %v1957, 100.0
        %v1994 = vmul.f32 %v1959, 100.0
        %v1995 = vmul.f32 %v1963, 100.0
        %v1996 = vmul.f32 %v1965, 100.0
        %v1997 = vmul.f32 %v1967, 100.0
        %v1998 = vmul.f32 %v1969, 100.0
        %v1999 = vmul.f32 %v1973, 100.0
        %v2000 = vmul.f32 %v1975, 100.0
        %v2001 = vmul.f32 %v1977, 100.0
        %v2002 = vmul.f32 %v1979, 100.0
        %v2003 = vmul.f32 %v1983, 100.0
        %v2004 = vmul.f32 %v1985, 100.0
        %v2005 = vmul.f32 %v1987, 100.0
        %v2006 = vmul.f32 %v1989, 100.0
        %v2007 = vmin.f32 %v1991, 20.0
        %v2008 = vmin.f32 %v1992, 20.0
        %v2009 = vmin.f32 %v1993, 20.0
        %v2010 = vmin.f32 %v1994, 20.0
        %v2011 = vmin.f32 %v1995, 20.0
        %v2012 = vmin.f32 %v1996, 20.0
        %v2013 = vmin.f32 %v1997, 20.0
        %v2014 = vmin.f32 %v1998, 20.0
        %v2015 = vmin.f32 %v1999, 20.0
        %v2016 = vmin.f32 %v2000, 20.0
        %v2017 = vmin.f32 %v2001, 20.0
        %v2018 = vmin.f32 %v2002, 20.0
        %v2019 = vmin.f32 %v2003, 20.0
        %v2020 = vmin.f32 %v2004, 20.0
        %v2021 = vmin.f32 %v2005, 20.0
        %v2022 = vmin.f32 %v2006, 20.0
        %v2023 = vmul.f32 %v2007, 1.442695
        %v2024 = vpow.pop %v2023
        %v2025 = vmul.f32 %v2008, 1.442695
        %v2026 = vpow.pop %v2025
        %v2027 = vmul.f32 %v2009, 1.442695
        %v2028 = vpow.pop %v2027
        %v2029 = vmul.f32 %v2010, 1.442695
        %v2030 = vpow.pop %v2029
        %v2031 = vmul.f32 %v2011, 1.442695
        %v2032 = vpow.pop %v2031
        %v2033 = vmul.f32 %v2012, 1.442695
        %v2034 = vpow.pop %v2033
        %v2035 = vmul.f32 %v2013, 1.442695
        %v2036 = vpow.pop %v2035
        %v2037 = vmul.f32 %v2014, 1.442695
        %v2038 = vpow.pop %v2037
        %v2039 = vmul.f32 %v2015, 1.442695
        %v2040 = vpow.pop %v2039
        %v2041 = vmul.f32 %v2016, 1.442695
        %v2042 = vpow.pop %v2041
        %v2043 = vmul.f32 %v2017, 1.442695
        %v2044 = vpow.pop %v2043
        %v2045 = vmul.f32 %v2018, 1.442695
        %v2046 = vpow.pop %v2045
        %v2047 = vmul.f32 %v2019, 1.442695
        %v2048 = vpow.pop %v2047
        %v2049 = vmul.f32 %v2020, 1.442695
        %v2050 = vpow.pop %v2049
        %v2051 = vmul.f32 %v2021, 1.442695
        %v2052 = vpow.pop %v2051
        %v2053 = vmul.f32 %v2022, 1.442695
        %v2054 = vpow.pop %v2053
        %vm2055 = vcmp.gt.f32.partialorder %v1991, 20.0
        %vm2056 = vcmp.gt.f32.partialorder %v1992, 20.0
        %vm2057 = vcmp.gt.f32.partialorder %v1993, 20.0
        %vm2058 = vcmp.gt.f32.partialorder %v1994, 20.0
        %vm2059 = vcmp.gt.f32.partialorder %v1995, 20.0
        %vm2060 = vcmp.gt.f32.partialorder %v1996, 20.0
        %vm2061 = vcmp.gt.f32.partialorder %v1997, 20.0
        %vm2062 = vcmp.gt.f32.partialorder %v1998, 20.0
        %vm2063 = vcmp.gt.f32.partialorder %v1999, 20.0
        %vm2064 = vcmp.gt.f32.partialorder %v2000, 20.0
        %vm2065 = vcmp.gt.f32.partialorder %v2001, 20.0
        %vm2066 = vcmp.gt.f32.partialorder %v2002, 20.0
        %vm2067 = vcmp.gt.f32.partialorder %v2003, 20.0
        %vm2068 = vcmp.gt.f32.partialorder %v2004, 20.0
        %vm2069 = vcmp.gt.f32.partialorder %v2005, 20.0
        %vm2070 = vcmp.gt.f32.partialorder %v2006, 20.0
        %v2071 = vadd.f32 %v2024, 1.0
        %v2072 = vlog2.pop %v2071
        %v2073 = vmul.f32 %v2072, 0.6931472
        %v2074 = vmul.f32 -0.5, %v2024
        %v2075 = vadd.f32 %v2074, 1.0
        %v2076 = vmul.f32 %v2075, %v2024
        %v2077 = vand.u32 2147483647, %v2024
        %vm2078 = vcmp.lt.f32.partialorder %v2077, 0.0004427343
        %v2079 = vsel %vm2078, %v2076, %v2073
        %v2080 = vadd.f32 %v2026, 1.0
        %v2081 = vlog2.pop %v2080
        %v2082 = vmul.f32 %v2081, 0.6931472
        %v2083 = vmul.f32 -0.5, %v2026
        %v2084 = vadd.f32 %v2083, 1.0
        %v2085 = vmul.f32 %v2084, %v2026
        %v2086 = vand.u32 2147483647, %v2026
        %vm2087 = vcmp.lt.f32.partialorder %v2086, 0.0004427343
        %v2088 = vsel %vm2087, %v2085, %v2082
        %v2089 = vadd.f32 %v2028, 1.0
        %v2090 = vlog2.pop %v2089
        %v2091 = vmul.f32 %v2090, 0.6931472
        %v2092 = vmul.f32 -0.5, %v2028
        %v2093 = vadd.f32 %v2092, 1.0
        %v2094 = vmul.f32 %v2093, %v2028
        %v2095 = vand.u32 2147483647, %v2028
        %vm2096 = vcmp.lt.f32.partialorder %v2095, 0.0004427343
        %v2097 = vsel %vm2096, %v2094, %v2091
        %v2098 = vadd.f32 %v2030, 1.0
        %v2099 = vlog2.pop %v2098
        %v2100 = vmul.f32 %v2099, 0.6931472
        %v2101 = vmul.f32 -0.5, %v2030
        %v2102 = vadd.f32 %v2101, 1.0
        %v2103 = vmul.f32 %v2102, %v2030
        %v2104 = vand.u32 2147483647, %v2030
        %vm2105 = vcmp.lt.f32.partialorder %v2104, 0.0004427343
        %v2106 = vsel %vm2105, %v2103, %v2100
        %v2107 = vadd.f32 %v2032, 1.0
        %v2108 = vlog2.pop %v2107
        %v2109 = vmul.f32 %v2108, 0.6931472
        %v2110 = vmul.f32 -0.5, %v2032
        %v2111 = vadd.f32 %v2110, 1.0
        %v2112 = vmul.f32 %v2111, %v2032
        %v2113 = vand.u32 2147483647, %v2032
        %vm2114 = vcmp.lt.f32.partialorder %v2113, 0.0004427343
        %v2115 = vsel %vm2114, %v2112, %v2109
        %v2116 = vadd.f32 %v2034, 1.0
        %v2117 = vlog2.pop %v2116
        %v2118 = vmul.f32 %v2117, 0.6931472
        %v2119 = vmul.f32 -0.5, %v2034
        %v2120 = vadd.f32 %v2119, 1.0
        %v2121 = vmul.f32 %v2120, %v2034
        %v2122 = vand.u32 2147483647, %v2034
        %vm2123 = vcmp.lt.f32.partialorder %v2122, 0.0004427343
        %v2124 = vsel %vm2123, %v2121, %v2118
        %v2125 = vadd.f32 %v2036, 1.0
        %v2126 = vlog2.pop %v2125
        %v2127 = vmul.f32 %v2126, 0.6931472
        %v2128 = vmul.f32 -0.5, %v2036
        %v2129 = vadd.f32 %v2128, 1.0
        %v2130 = vmul.f32 %v2129, %v2036
        %v2131 = vand.u32 2147483647, %v2036
        %vm2132 = vcmp.lt.f32.partialorder %v2131, 0.0004427343
        %v2133 = vsel %vm2132, %v2130, %v2127
        %v2134 = vadd.f32 %v2038, 1.0
        %v2135 = vlog2.pop %v2134
        %v2136 = vmul.f32 %v2135, 0.6931472
        %v2137 = vmul.f32 -0.5, %v2038
        %v2138 = vadd.f32 %v2137, 1.0
        %v2139 = vmul.f32 %v2138, %v2038
        %v2140 = vand.u32 2147483647, %v2038
        %vm2141 = vcmp.lt.f32.partialorder %v2140, 0.0004427343
        %v2142 = vsel %vm2141, %v2139, %v2136
        %v2143 = vadd.f32 %v2040, 1.0
        %v2144 = vlog2.pop %v2143
        %v2145 = vmul.f32 %v2144, 0.6931472
        %v2146 = vmul.f32 -0.5, %v2040
        %v2147 = vadd.f32 %v2146, 1.0
        %v2148 = vmul.f32 %v2147, %v2040
        %v2149 = vand.u32 2147483647, %v2040
        %vm2150 = vcmp.lt.f32.partialorder %v2149, 0.0004427343
        %v2151 = vsel %vm2150, %v2148, %v2145
        %v2152 = vadd.f32 %v2042, 1.0
        %v2153 = vlog2.pop %v2152
        %v2154 = vmul.f32 %v2153, 0.6931472
        %v2155 = vmul.f32 -0.5, %v2042
        %v2156 = vadd.f32 %v2155, 1.0
        %v2157 = vmul.f32 %v2156, %v2042
        %v2158 = vand.u32 2147483647, %v2042
        %vm2159 = vcmp.lt.f32.partialorder %v2158, 0.0004427343
        %v2160 = vsel %vm2159, %v2157, %v2154
        %v2161 = vadd.f32 %v2044, 1.0
        %v2162 = vlog2.pop %v2161
        %v2163 = vmul.f32 %v2162, 0.6931472
        %v2164 = vmul.f32 -0.5, %v2044
        %v2165 = vadd.f32 %v2164, 1.0
        %v2166 = vmul.f32 %v2165, %v2044
        %v2167 = vand.u32 2147483647, %v2044
        %vm2168 = vcmp.lt.f32.partialorder %v2167, 0.0004427343
        %v2169 = vsel %vm2168, %v2166, %v2163
        %v2170 = vadd.f32 %v2046, 1.0
        %v2171 = vlog2.pop %v2170
        %v2172 = vmul.f32 %v2171, 0.6931472
        %v2173 = vmul.f32 -0.5, %v2046
        %v2174 = vadd.f32 %v2173, 1.0
        %v2175 = vmul.f32 %v2174, %v2046
        %v2176 = vand.u32 2147483647, %v2046
        %vm2177 = vcmp.lt.f32.partialorder %v2176, 0.0004427343
        %v2178 = vsel %vm2177, %v2175, %v2172
        %v2179 = vadd.f32 %v2048, 1.0
        %v2180 = vlog2.pop %v2179
        %v2181 = vmul.f32 %v2180, 0.6931472
        %v2182 = vmul.f32 -0.5, %v2048
        %v2183 = vadd.f32 %v2182, 1.0
        %v2184 = vmul.f32 %v2183, %v2048
        %v2185 = vand.u32 2147483647, %v2048
        %vm2186 = vcmp.lt.f32.partialorder %v2185, 0.0004427343
        %v2187 = vsel %vm2186, %v2184, %v2181
        %v2188 = vadd.f32 %v2050, 1.0
        %v2189 = vlog2.pop %v2188
        %v2190 = vmul.f32 %v2189, 0.6931472
        %v2191 = vmul.f32 -0.5, %v2050
        %v2192 = vadd.f32 %v2191, 1.0
        %v2193 = vmul.f32 %v2192, %v2050
        %v2194 = vand.u32 2147483647, %v2050
        %vm2195 = vcmp.lt.f32.partialorder %v2194, 0.0004427343
        %v2196 = vsel %vm2195, %v2193, %v2190
        %v2197 = vadd.f32 %v2052, 1.0
        %v2198 = vlog2.pop %v2197
        %v2199 = vmul.f32 %v2198, 0.6931472
        %v2200 = vmul.f32 -0.5, %v2052
        %v2201 = vadd.f32 %v2200, 1.0
        %v2202 = vmul.f32 %v2201, %v2052
        %v2203 = vand.u32 2147483647, %v2052
        %vm2204 = vcmp.lt.f32.partialorder %v2203, 0.0004427343
        %v2205 = vsel %vm2204, %v2202, %v2199
        %v2206 = vadd.f32 %v2054, 1.0
        %v2207 = vlog2.pop %v2206
        %v2208 = vmul.f32 %v2207, 0.6931472
        %v2209 = vmul.f32 -0.5, %v2054
        %v2210 = vadd.f32 %v2209, 1.0
        %v2211 = vmul.f32 %v2210, %v2054
        %v2212 = vand.u32 2147483647, %v2054
        %vm2213 = vcmp.lt.f32.partialorder %v2212, 0.0004427343
        %v2214 = vsel %vm2213, %v2211, %v2208
        %v2215 = vmul.f32 %v2079, 0.01
        %v2216 = vmul.f32 %v2088, 0.01
        %v2217 = vmul.f32 %v2097, 0.01
        %v2218 = vmul.f32 %v2106, 0.01
        %v2219 = vmul.f32 %v2115, 0.01
        %v2220 = vmul.f32 %v2124, 0.01
        %v2221 = vmul.f32 %v2133, 0.01
        %v2222 = vmul.f32 %v2142, 0.01
        %v2223 = vmul.f32 %v2151, 0.01
        %v2224 = vmul.f32 %v2160, 0.01
        %v2225 = vmul.f32 %v2169, 0.01
        %v2226 = vmul.f32 %v2178, 0.01
        %v2227 = vmul.f32 %v2187, 0.01
        %v2228 = vmul.f32 %v2196, 0.01
        %v2229 = vmul.f32 %v2205, 0.01
        %v2230 = vmul.f32 %v2214, 0.01
        %v2231 = vsel %vm2055, %v1953, %v2215
        %v2232 = vsel %vm2056, %v1955, %v2216
        %v2233 = vsel %vm2057, %v1957, %v2217
        %v2234 = vsel %vm2058, %v1959, %v2218
        %v2235 = vsel %vm2059, %v1963, %v2219
        %v2236 = vsel %vm2060, %v1965, %v2220
        %v2237 = vsel %vm2061, %v1967, %v2221
        %v2238 = vsel %vm2062, %v1969, %v2222
        %v2239 = vsel %vm2063, %v1973, %v2223
        %v2240 = vsel %vm2064, %v1975, %v2224
        %v2241 = vsel %vm2065, %v1977, %v2225
        %v2242 = vsel %vm2066, %v1979, %v2226
        %v2243 = vsel %vm2067, %v1983, %v2227
        %v2244 = vsel %vm2068, %v1985, %v2228
        %v2245 = vsel %vm2069, %v1987, %v2229
        %v2246 = vsel %vm2070, %v1989, %v2230
        %v2247 = vadd.f32 %v2024, 1.0
        %v2248 = vadd.f32 %v2026, 1.0
        %v2249 = vadd.f32 %v2028, 1.0
        %v2250 = vadd.f32 %v2030, 1.0
        %v2251 = vadd.f32 %v2032, 1.0
        %v2252 = vadd.f32 %v2034, 1.0
        %v2253 = vadd.f32 %v2036, 1.0
        %v2254 = vadd.f32 %v2038, 1.0
        %v2255 = vadd.f32 %v2040, 1.0
        %v2256 = vadd.f32 %v2042, 1.0
        %v2257 = vadd.f32 %v2044, 1.0
        %v2258 = vadd.f32 %v2046, 1.0
        %v2259 = vadd.f32 %v2048, 1.0
        %v2260 = vadd.f32 %v2050, 1.0
        %v2261 = vadd.f32 %v2052, 1.0
        %v2262 = vadd.f32 %v2054, 1.0
        %v2263 = vrcp.pop %v2247
        %v2264 = vrcp.pop %v2248
        %v2265 = vrcp.pop %v2249
        %v2266 = vrcp.pop %v2250
        %v2267 = vrcp.pop %v2251
        %v2268 = vrcp.pop %v2252
        %v2269 = vrcp.pop %v2253
        %v2270 = vrcp.pop %v2254
        %v2271 = vrcp.pop %v2255
        %v2272 = vrcp.pop %v2256
        %v2273 = vrcp.pop %v2257
        %v2274 = vrcp.pop %v2258
        %v2275 = vrcp.pop %v2259
        %v2276 = vrcp.pop %v2260
        %v2277 = vrcp.pop %v2261
        %v2278 = vrcp.pop %v2262
        %v2279 = vmul.f32 %v2024, %v2263
        %v2280 = vmul.f32 %v2026, %v2264
        %v2281 = vmul.f32 %v2028, %v2265
        %v2282 = vmul.f32 %v2030, %v2266
        %v2283 = vmul.f32 %v2032, %v2267
        %v2284 = vmul.f32 %v2034, %v2268
        %v2285 = vmul.f32 %v2036, %v2269
        %v2286 = vmul.f32 %v2038, %v2270
        %v2287 = vmul.f32 %v2040, %v2271
        %v2288 = vmul.f32 %v2042, %v2272
        %v2289 = vmul.f32 %v2044, %v2273
        %v2290 = vmul.f32 %v2046, %v2274
        %v2291 = vmul.f32 %v2048, %v2275
        %v2292 = vmul.f32 %v2050, %v2276
        %v2293 = vmul.f32 %v2052, %v2277
        %v2294 = vmul.f32 %v2054, %v2278
        %v2295 = vld [vmem:[%s2 + $0x60] sm:$0xf]
        %v2296 = vld [vmem:[%s2 + $0x64] sm:$0xf]
        %v2297 = vld [vmem:[%s2 + $0x68] sm:$0xf]
        %v2298 = vld [vmem:[%s2 + $0x6c] sm:$0xf]
        %v2299 = vld [vmem:[%s2 + $0x70] sm:$0xf]
        %v2300 = vld [vmem:[%s2 + $0x74] sm:$0xf]
        %v2301 = vpack.c.bf16 %v2233, %v2231
        %v2302 = vpack.c.bf16 %v2234, %v2232
        %v2303 = vpack.c.bf16 %v2237, %v2235
        %v2304 = vpack.c.bf16 %v2238, %v2236
        %v2305 = vpack.c.bf16 %v2241, %v2239
        %v2306 = vpack.c.bf16 %v2242, %v2240
        %v2307 = vpack.c.bf16 %v2245, %v2243
        %v2308 = vpack.c.bf16 %v2246, %v2244
        %2309 = vset.pattern.permute.xlu0 4
        %2310 = vperm.xlu0 %2309, %v256
        %v2311 = vpop.permute.xlu0 %2310
        %2313 = vset.pattern.permute.xlu0 4
        %2314 = vperm.xlu0 %2313, %v257
        %v2315 = vpop.permute.xlu0 %2314
        %2317 = vset.pattern.permute.xlu0 4
        %2318 = vperm.xlu0 %2317, %v258
        %v2319 = vpop.permute.xlu0 %2318
        %2321 = vset.pattern.permute.xlu0 4
        %2322 = vperm.xlu0 %2321, %v259
        %v2323 = vpop.permute.xlu0 %2322
        %2325 = vset.pattern.permute.xlu0 4
        %2326 = vperm.xlu0 %2325, %v260
        %v2327 = vpop.permute.xlu0 %2326
        %2329 = vset.pattern.permute.xlu0 4
        %2330 = vperm.xlu0 %2329, %v261
        %v2331 = vpop.permute.xlu0 %2330
        %v2339 = vunpack.c.l.b16 %v2295
        %v2340 = vunpack.c.l.b16 %v2296
        %v2341 = vunpack.c.l.b16 %v2297
        %v2342 = vunpack.c.l.b16 %v2298
        %v2343 = vunpack.c.l.b16 %v2299
        %v2344 = vunpack.c.l.b16 %v2300
        %v2345 = vpack.c.b16 %v2340, %v2339
        %v2346 = vpack.c.b16 %v2342, %v2341
        %v2347 = vpack.c.b16 %v2344, %v2343
        %v2349 = vsel %vm975, %v2345, 0
        %v2352 = vsel %vm975, %v2346, 0
        %v2355 = vsel %vm975, %v2347, 0
        %2357 = vmatprep.subr.bf16.mxu0 %v2302
        %2358 = vmatpush1.bf16.msra.mxu0 %v2301
        %2359 = vmatprep.subr.bf16.mxu0 %v2304
        %2360 = vmatpush1.bf16.msra.mxu0 %v2303
        %2361 = vmatprep.subr.bf16.mxu0 %v2306
        %2362 = vmatpush1.bf16.msra.mxu0 %v2305
        %2363 = vmatprep.subr.bf16.mxu0 %v2308
        %2364 = vmatpush1.bf16.msra.mxu0 %v2307
        %2365 = vmatprep.subr.bf16.mxu0 0
        %2366 = vmatpush1.bf16.msra.mxu0 0
        %2367 = vmatprep.subr.bf16.mxu0 0
        %2368 = vmatpush1.bf16.msra.mxu0 0
        %2369 = vmatprep.subr.bf16.mxu0 0
        %2370 = vmatpush1.bf16.msra.mxu0 0
        %2371 = vmatprep.subr.bf16.mxu0 0
        %2372 = vmatpush1.bf16.msra.mxu0 0
        %2373 = vmatprep.subr.bf16.mxu0 0
        %2374 = vmatpush1.bf16.msra.mxu0 0
        %2375 = vmatprep.subr.bf16.mxu0 0
        %2376 = vmatpush1.bf16.msra.mxu0 0
        %2377 = vmatprep.subr.bf16.mxu0 0
        %2378 = vmatpush1.bf16.msra.mxu0 0
        %2379 = vmatprep.subr.bf16.mxu0 0
        %2380 = vmatpush1.bf16.msra.mxu0 0
        %2381 = vmatprep.subr.bf16.mxu0 0
        %2382 = vmatpush1.bf16.msra.mxu0 0
        %2383 = vmatprep.subr.bf16.mxu0 0
        %2384 = vmatpush1.bf16.msra.mxu0 0
        %2385 = vmatprep.subr.bf16.mxu0 0
        %2386 = vmatpush1.bf16.msra.mxu0 0
        %2387 = vmatprep.subr.bf16.mxu0 0
        %2388 = vmatpush1.bf16.msra.mxu0 0
        %2389 = vmatprep.mubr.bf16.mxu0 0
        %2390 = vmatmul.mubr.bf16.gmra.mrb[0].mxu0 %v2349
        %v2391 = vpop.f32.mrb[0].mxu0
        %v2392 = vadd.f32 %v2311, %v2391
        %v2393 = vpop.f32.mrb[0].mxu0
        %v2394 = vadd.f32 %v2311, %v2393
        %v2395 = vpop.f32.mrb[0].mxu0
        %v2396 = vadd.f32 %v2315, %v2395
        %v2397 = vpop.f32.mrb[0].mxu0
        %v2398 = vadd.f32 %v2315, %v2397
        %2399 = vmatprep.mubr.bf16.mxu0 0
        %2400 = vmatmul.mubr.bf16.gmra.mrb[0].mxu0 %v2352
        %v2401 = vpop.f32.mrb[0].mxu0
        %v2402 = vadd.f32 %v2319, %v2401
        %v2403 = vpop.f32.mrb[0].mxu0
        %v2404 = vadd.f32 %v2319, %v2403
        %v2405 = vpop.f32.mrb[0].mxu0
        %v2406 = vadd.f32 %v2323, %v2405
        %v2407 = vpop.f32.mrb[0].mxu0
        %v2408 = vadd.f32 %v2323, %v2407
        %2409 = vmatprep.mubr.bf16.mxu0 0
        %2410 = vmatmul.mubr.bf16.gmra.mrb[0].mxu0 %v2355
        %v2411 = vpop.f32.mrb[0].mxu0
        %v2412 = vadd.f32 %v2327, %v2411
        %v2413 = vpop.f32.mrb[0].mxu0
        %v2414 = vadd.f32 %v2327, %v2413
        %v2415 = vpop.f32.mrb[0].mxu0
        %v2416 = vadd.f32 %v2331, %v2415
        %v2417 = vpop.f32.mrb[0].mxu0
        %v2418 = vadd.f32 %v2331, %v2417
        %2419 = vdwg.mxu0
        %2420 = vset.pattern.permute.xlu0 8
        %2421 = vperm.xlu0 %2420, %v256
        %v2422 = vpop.permute.xlu0 %2421
        %2424 = vset.pattern.permute.xlu0 8
        %2425 = vperm.xlu0 %2424, %v257
        %v2426 = vpop.permute.xlu0 %2425
        %2428 = vset.pattern.permute.xlu0 8
        %2429 = vperm.xlu0 %2428, %v258
        %v2430 = vpop.permute.xlu0 %2429
        %2432 = vset.pattern.permute.xlu0 8
        %2433 = vperm.xlu0 %2432, %v259
        %v2434 = vpop.permute.xlu0 %2433
        %2436 = vset.pattern.permute.xlu0 8
        %2437 = vperm.xlu0 %2436, %v260
        %v2438 = vpop.permute.xlu0 %2437
        %2440 = vset.pattern.permute.xlu0 8
        %2441 = vperm.xlu0 %2440, %v261
        %v2442 = vpop.permute.xlu0 %2441
        %2444 = vset.pattern.permute.xlu0 8
        %2445 = vperm.xlu0 %2444, %v262
        %v2446 = vpop.permute.xlu0 %2445
        %2448 = vset.pattern.permute.xlu0 8
        %2449 = vperm.xlu0 %2448, %v263
        %v2450 = vpop.permute.xlu0 %2449
        %v2452 = vmul.f32 %v2422, %v2279
        %v2453 = vmul.f32 %v2422, %v2280
        %v2454 = vmul.f32 %v2426, %v2281
        %v2455 = vmul.f32 %v2426, %v2282
        %v2456 = vmul.f32 %v2430, %v2283
        %v2457 = vmul.f32 %v2430, %v2284
        %v2458 = vmul.f32 %v2434, %v2285
        %v2459 = vmul.f32 %v2434, %v2286
        %v2460 = vmul.f32 %v2438, %v2287
        %v2461 = vmul.f32 %v2438, %v2288
        %v2462 = vmul.f32 %v2442, %v2289
        %v2463 = vmul.f32 %v2442, %v2290
        %v2464 = vmul.f32 %v2446, %v2291
        %v2465 = vmul.f32 %v2446, %v2292
        %v2466 = vmul.f32 %v2450, %v2293
        %v2467 = vmul.f32 %v2450, %v2294
        %v2468 = vld [vmem:[%s2 + $0x78] sm:$0xf]
        %v2469 = vld [vmem:[%s2 + $0x7c] sm:$0xf]
        %v2470 = vld [vmem:[%s2 + $0x80] sm:$0xf]
        %v2471 = vld [vmem:[%s2 + $0x84] sm:$0xf]
        %v2472 = vld [vmem:[%s2 + $0x88] sm:$0xf]
        %v2473 = vld [vmem:[%s2 + $0x8c] sm:$0xf]
        %v2474 = vld [vmem:[%s2 + $0x90] sm:$0xf]
        %v2475 = vld [vmem:[%s2 + $0x94] sm:$0xf]
        %v2476 = vpack.c.bf16 %v2454, %v2452
        %v2477 = vpack.c.bf16 %v2455, %v2453
        %v2478 = vpack.c.bf16 %v2458, %v2456
        %v2479 = vpack.c.bf16 %v2459, %v2457
        %v2480 = vpack.c.bf16 %v2462, %v2460
        %v2481 = vpack.c.bf16 %v2463, %v2461
        %v2482 = vpack.c.bf16 %v2466, %v2464
        %v2483 = vpack.c.bf16 %v2467, %v2465
        %v2492 = vunpack.c.l.b16 %v2468
        %v2493 = vunpack.c.l.b16 %v2469
        %v2494 = vunpack.c.l.b16 %v2470
        %v2495 = vunpack.c.l.b16 %v2471
        %v2496 = vunpack.c.l.b16 %v2472
        %v2497 = vunpack.c.l.b16 %v2473
        %v2498 = vunpack.c.l.b16 %v2474
        %v2499 = vunpack.c.l.b16 %v2475
        %v2500 = vpack.c.b16 %v2493, %v2492
        %v2501 = vpack.c.b16 %v2495, %v2494
        %v2502 = vpack.c.b16 %v2497, %v2496
        %v2503 = vpack.c.b16 %v2499, %v2498
        %v2505 = vsel %vm975, %v2500, 0
        %v2508 = vsel %vm975, %v2501, 0
        %v2511 = vsel %vm975, %v2502, 0
        %v2514 = vsel %vm975, %v2503, 0
        %2516 = vmatprep.subr.bf16.mxu0 %v2477
        %2517 = vmatpush1.bf16.msra.mxu0 %v2476
        %2518 = vmatprep.subr.bf16.mxu0 %v2479
        %2519 = vmatpush1.bf16.msra.mxu0 %v2478
        %2520 = vmatprep.subr.bf16.mxu0 %v2481
        %2521 = vmatpush1.bf16.msra.mxu0 %v2480
        %2522 = vmatprep.subr.bf16.mxu0 %v2483
        %2523 = vmatpush1.bf16.msra.mxu0 %v2482
        %2524 = vmatprep.subr.bf16.mxu0 0
        %2525 = vmatpush1.bf16.msra.mxu0 0
        %2526 = vmatprep.subr.bf16.mxu0 0
        %2527 = vmatpush1.bf16.msra.mxu0 0
        %2528 = vmatprep.subr.bf16.mxu0 0
        %2529 = vmatpush1.bf16.msra.mxu0 0
        %2530 = vmatprep.subr.bf16.mxu0 0
        %2531 = vmatpush1.bf16.msra.mxu0 0
        %2532 = vmatprep.subr.bf16.mxu0 0
        %2533 = vmatpush1.bf16.msra.mxu0 0
        %2534 = vmatprep.subr.bf16.mxu0 0
        %2535 = vmatpush1.bf16.msra.mxu0 0
        %2536 = vmatprep.subr.bf16.mxu0 0
        %2537 = vmatpush1.bf16.msra.mxu0 0
        %2538 = vmatprep.subr.bf16.mxu0 0
        %2539 = vmatpush1.bf16.msra.mxu0 0
        %2540 = vmatprep.subr.bf16.mxu0 0
        %2541 = vmatpush1.bf16.msra.mxu0 0
        %2542 = vmatprep.subr.bf16.mxu0 0
        %2543 = vmatpush1.bf16.msra.mxu0 0
        %2544 = vmatprep.subr.bf16.mxu0 0
        %2545 = vmatpush1.bf16.msra.mxu0 0
        %2546 = vmatprep.subr.bf16.mxu0 0
        %2547 = vmatpush1.bf16.msra.mxu0 0
        %2548 = vmatprep.mubr.bf16.mxu0 0
        %2549 = vmatmul.mubr.bf16.gmra.mrb[0].mxu0 %v2505
        %v2550 = vpop.f32.mrb[0].mxu0
        %v2551 = vadd.f32 0.0, %v2550
        %v2552 = vpop.f32.mrb[0].mxu0
        %v2553 = vadd.f32 0.0, %v2552
        %v2554 = vpop.f32.mrb[0].mxu0
        %v2555 = vadd.f32 0.0, %v2554
        %v2556 = vpop.f32.mrb[0].mxu0
        %v2557 = vadd.f32 0.0, %v2556
        %2558 = vmatprep.mubr.bf16.mxu0 0
        %2559 = vmatmul.mubr.bf16.gmra.mrb[0].mxu0 %v2508
        %v2560 = vpop.f32.mrb[0].mxu0
        %v2561 = vadd.f32 0.0, %v2560
        %v2562 = vpop.f32.mrb[0].mxu0
        %v2563 = vadd.f32 0.0, %v2562
        %v2564 = vpop.f32.mrb[0].mxu0
        %v2565 = vadd.f32 0.0, %v2564
        %v2566 = vpop.f32.mrb[0].mxu0
        %v2567 = vadd.f32 0.0, %v2566
        %2568 = vmatprep.mubr.bf16.mxu0 0
        %2569 = vmatmul.mubr.bf16.gmra.mrb[0].mxu0 %v2511
        %v2570 = vpop.f32.mrb[0].mxu0
        %v2571 = vadd.f32 0.0, %v2570
        %v2572 = vpop.f32.mrb[0].mxu0
        %v2573 = vadd.f32 0.0, %v2572
        %v2574 = vpop.f32.mrb[0].mxu0
        %v2575 = vadd.f32 0.0, %v2574
        %v2576 = vpop.f32.mrb[0].mxu0
        %v2577 = vadd.f32 0.0, %v2576
        %2578 = vmatprep.mubr.bf16.mxu0 0
        %2579 = vmatmul.mubr.bf16.gmra.mrb[0].mxu0 %v2514
        %v2580 = vpop.f32.mrb[0].mxu0
        %v2581 = vadd.f32 0.0, %v2580
        %v2582 = vpop.f32.mrb[0].mxu0
        %v2583 = vadd.f32 0.0, %v2582
        %v2584 = vpop.f32.mrb[0].mxu0
        %v2585 = vadd.f32 0.0, %v2584
        %v2586 = vpop.f32.mrb[0].mxu0
        %v2587 = vadd.f32 0.0, %v2586
        %2588 = vdwg.mxu0
        %v2589 = vmul.f32 %v2551, %v1822
        %v2590 = vmul.f32 %v2553, %v1823
        %v2591 = vmul.f32 %v2555, %v1824
        %v2592 = vmul.f32 %v2557, %v1825
        %v2593 = vmul.f32 %v2561, %v1826
        %v2594 = vmul.f32 %v2563, %v1827
        %v2595 = vmul.f32 %v2565, %v1828
        %v2596 = vmul.f32 %v2567, %v1829
        %v2597 = vmul.f32 %v2571, %v1830
        %v2598 = vmul.f32 %v2573, %v1831
        %v2599 = vmul.f32 %v2575, %v1832
        %v2600 = vmul.f32 %v2577, %v1833
        %v2601 = vmul.f32 %v2581, %v1834
        %v2602 = vmul.f32 %v2583, %v1835
        %v2603 = vmul.f32 %v2585, %v1836
        %v2604 = vmul.f32 %v2587, %v1837
        %v2605 = vld [vmem:[%s2 + $0x98] sm:$0xf]
        %v2606 = vld [vmem:[%s2 + $0x9c] sm:$0xf]
        %v2607 = vld [vmem:[%s2 + $0xa0] sm:$0xf]
        %v2608 = vld [vmem:[%s2 + $0xa4] sm:$0xf]
        %v2609 = vld [vmem:[%s2 + $0xa8] sm:$0xf]
        %v2610 = vld [vmem:[%s2 + $0xac] sm:$0xf]
        %v2611 = vld [vmem:[%s2 + $0xb0] sm:$0xf]
        %v2612 = vld [vmem:[%s2 + $0xb4] sm:$0xf]
        %v2613 = vld [vmem:[%s2 + $0xb8] sm:$0xf]
        %v2614 = vld [vmem:[%s2 + $0xbc] sm:$0xf]
        %v2615 = vpack.c.bf16 %v2591, %v2589
        %v2616 = vpack.c.bf16 %v2592, %v2590
        %v2617 = vpack.c.bf16 %v2595, %v2593
        %v2618 = vpack.c.bf16 %v2596, %v2594
        %v2619 = vpack.c.bf16 %v2599, %v2597
        %v2620 = vpack.c.bf16 %v2600, %v2598
        %v2621 = vpack.c.bf16 %v2603, %v2601
        %v2622 = vpack.c.bf16 %v2604, %v2602
        %v2633 = vunpack.c.l.b16 %v2605
        %v2634 = vunpack.c.l.b16 %v2606
        %v2635 = vunpack.c.l.b16 %v2607
        %v2636 = vunpack.c.l.b16 %v2608
        %v2637 = vunpack.c.l.b16 %v2609
        %v2638 = vunpack.c.l.b16 %v2610
        %v2639 = vunpack.c.l.b16 %v2611
        %v2640 = vunpack.c.l.b16 %v2612
        %v2641 = vunpack.c.l.b16 %v2613
        %v2642 = vunpack.c.l.b16 %v2614
        %v2643 = vpack.c.b16 %v2634, %v2633
        %v2644 = vpack.c.b16 %v2636, %v2635
        %v2645 = vpack.c.b16 %v2638, %v2637
        %v2646 = vpack.c.b16 %v2640, %v2639
        %v2647 = vpack.c.b16 %v2642, %v2641
        %v2649 = vsel %vm975, %v2643, 0
        %v2652 = vsel %vm975, %v2644, 0
        %v2655 = vsel %vm975, %v2645, 0
        %v2658 = vsel %vm975, %v2646, 0
        %v2661 = vsel %vm975, %v2647, 0
        %2663 = vmatprep.subr.bf16.mxu0 %v2616
        %2664 = vmatpush1.bf16.msra.mxu0 %v2615
        %2665 = vmatprep.subr.bf16.mxu0 %v2618
        %2666 = vmatpush1.bf16.msra.mxu0 %v2617
        %2667 = vmatprep.subr.bf16.mxu0 %v2620
        %2668 = vmatpush1.bf16.msra.mxu0 %v2619
        %2669 = vmatprep.subr.bf16.mxu0 %v2622
        %2670 = vmatpush1.bf16.msra.mxu0 %v2621
        %2671 = vmatprep.subr.bf16.mxu0 0
        %2672 = vmatpush1.bf16.msra.mxu0 0
        %2673 = vmatprep.subr.bf16.mxu0 0
        %2674 = vmatpush1.bf16.msra.mxu0 0
        %2675 = vmatprep.subr.bf16.mxu0 0
        %2676 = vmatpush1.bf16.msra.mxu0 0
        %2677 = vmatprep.subr.bf16.mxu0 0
        %2678 = vmatpush1.bf16.msra.mxu0 0
        %2679 = vmatprep.subr.bf16.mxu0 0
        %2680 = vmatpush1.bf16.msra.mxu0 0
        %2681 = vmatprep.subr.bf16.mxu0 0
        %2682 = vmatpush1.bf16.msra.mxu0 0
        %2683 = vmatprep.subr.bf16.mxu0 0
        %2684 = vmatpush1.bf16.msra.mxu0 0
        %2685 = vmatprep.subr.bf16.mxu0 0
        %2686 = vmatpush1.bf16.msra.mxu0 0
        %2687 = vmatprep.subr.bf16.mxu0 0
        %2688 = vmatpush1.bf16.msra.mxu0 0
        %2689 = vmatprep.subr.bf16.mxu0 0
        %2690 = vmatpush1.bf16.msra.mxu0 0
        %2691 = vmatprep.subr.bf16.mxu0 0
        %2692 = vmatpush1.bf16.msra.mxu0 0
        %2693 = vmatprep.subr.bf16.mxu0 0
        %2694 = vmatpush1.bf16.msra.mxu0 0
        %2695 = vmatprep.mubr.bf16.mxu0 0
        %2696 = vmatmul.mubr.bf16.gmra.mrb[0].mxu0 %v2649
        %v2697 = vpop.f32.mrb[0].mxu0
        %v2698 = vadd.f32 0.0, %v2697
        %v2699 = vpop.f32.mrb[0].mxu0
        %v2700 = vadd.f32 0.0, %v2699
        %v2701 = vpop.f32.mrb[0].mxu0
        %v2702 = vadd.f32 0.0, %v2701
        %v2703 = vpop.f32.mrb[0].mxu0
        %v2704 = vadd.f32 0.0, %v2703
        %2705 = vmatprep.mubr.bf16.mxu0 0
        %2706 = vmatmul.mubr.bf16.gmra.mrb[0].mxu0 %v2652
        %v2707 = vpop.f32.mrb[0].mxu0
        %v2708 = vadd.f32 0.0, %v2707
        %v2709 = vpop.f32.mrb[0].mxu0
        %v2710 = vadd.f32 0.0, %v2709
        %v2711 = vpop.f32.mrb[0].mxu0
        %v2712 = vadd.f32 0.0, %v2711
        %v2713 = vpop.f32.mrb[0].mxu0
        %v2714 = vadd.f32 0.0, %v2713
        %2715 = vmatprep.mubr.bf16.mxu0 0
        %2716 = vmatmul.mubr.bf16.gmra.mrb[0].mxu0 %v2655
        %v2717 = vpop.f32.mrb[0].mxu0
        %v2718 = vadd.f32 0.0, %v2717
        %v2719 = vpop.f32.mrb[0].mxu0
        %v2720 = vadd.f32 0.0, %v2719
        %v2721 = vpop.f32.mrb[0].mxu0
        %v2722 = vadd.f32 0.0, %v2721
        %v2723 = vpop.f32.mrb[0].mxu0
        %v2724 = vadd.f32 0.0, %v2723
        %2725 = vmatprep.mubr.bf16.mxu0 0
        %2726 = vmatmul.mubr.bf16.gmra.mrb[0].mxu0 %v2658
        %v2727 = vpop.f32.mrb[0].mxu0
        %v2728 = vadd.f32 0.0, %v2727
        %v2729 = vpop.f32.mrb[0].mxu0
        %v2730 = vadd.f32 0.0, %v2729
        %v2731 = vpop.f32.mrb[0].mxu0
        %v2732 = vadd.f32 0.0, %v2731
        %v2733 = vpop.f32.mrb[0].mxu0
        %v2734 = vadd.f32 0.0, %v2733
        %2735 = vmatprep.mubr.bf16.mxu0 0
        %2736 = vmatmul.mubr.bf16.gmra.mrb[0].mxu0 %v2661
        %v2737 = vpop.f32.mrb[0].mxu0
        %v2738 = vadd.f32 0.0, %v2737
        %v2739 = vpop.f32.mrb[0].mxu0
        %v2740 = vadd.f32 0.0, %v2739
        %v2741 = vpop.f32.mrb[0].mxu0
        %v2742 = vadd.f32 0.0, %v2741
        %v2743 = vpop.f32.mrb[0].mxu0
        %v2744 = vadd.f32 0.0, %v2743
        %2745 = vdwg.mxu0
        %v2746 = vmul.f32 %v2698, %v1349
        %v2747 = vmul.f32 %v2700, %v1350
        %v2748 = vmul.f32 %v2702, %v1351
        %v2749 = vmul.f32 %v2704, %v1352
        %v2750 = vmul.f32 %v2708, %v1353
        %v2751 = vmul.f32 %v2710, %v1354
        %v2752 = vmul.f32 %v2712, %v1355
        %v2753 = vmul.f32 %v2714, %v1356
        %v2754 = vmul.f32 %v2718, %v1357
        %v2755 = vmul.f32 %v2720, %v1358
        %v2756 = vmul.f32 %v2722, %v1359
        %v2757 = vmul.f32 %v2724, %v1360
        %v2758 = vmul.f32 %v2728, %v1361
        %v2759 = vmul.f32 %v2730, %v1362
        %v2760 = vmul.f32 %v2732, %v1363
        %v2761 = vmul.f32 %v2734, %v1364
        %v2762 = vld [vmem:[%s2 + $0xc0] sm:$0xf]
        %v2763 = vld [vmem:[%s2 + $0xc4] sm:$0xf]
        %v2764 = vld [vmem:[%s2 + $0xc8] sm:$0xf]
        %v2765 = vld [vmem:[%s2 + $0xcc] sm:$0xf]
        %v2766 = vld [vmem:[%s2 + $0xd0] sm:$0xf]
        %v2767 = vld [vmem:[%s2 + $0xd4] sm:$0xf]
        %v2768 = vld [vmem:[%s2 + $0xd8] sm:$0xf]
        %v2769 = vld [vmem:[%s2 + $0xdc] sm:$0xf]
        %v2770 = vpack.c.bf16 %v2748, %v2746
        %v2771 = vpack.c.bf16 %v2749, %v2747
        %v2772 = vpack.c.bf16 %v2752, %v2750
        %v2773 = vpack.c.bf16 %v2753, %v2751
        %v2774 = vpack.c.bf16 %v2756, %v2754
        %v2775 = vpack.c.bf16 %v2757, %v2755
        %v2776 = vpack.c.bf16 %v2760, %v2758
        %v2777 = vpack.c.bf16 %v2761, %v2759
        %v2786 = vunpack.c.l.b16 %v2762
        %v2787 = vunpack.c.l.b16 %v2763
        %v2788 = vunpack.c.l.b16 %v2764
        %v2789 = vunpack.c.l.b16 %v2765
        %v2790 = vunpack.c.l.b16 %v2766
        %v2791 = vunpack.c.l.b16 %v2767
        %v2792 = vunpack.c.l.b16 %v2768
        %v2793 = vunpack.c.l.b16 %v2769
        %v2794 = vpack.c.b16 %v2787, %v2786
        %v2795 = vpack.c.b16 %v2789, %v2788
        %v2796 = vpack.c.b16 %v2791, %v2790
        %v2797 = vpack.c.b16 %v2793, %v2792
        %v2799 = vsel %vm975, %v2794, 0
        %v2802 = vsel %vm975, %v2795, 0
        %v2805 = vsel %vm975, %v2796, 0
        %v2808 = vsel %vm975, %v2797, 0
        %2810 = vmatprep.subr.bf16.mxu0 %v2771
        %2811 = vmatpush1.bf16.msra.mxu0 %v2770
        %2812 = vmatprep.subr.bf16.mxu0 %v2773
        %2813 = vmatpush1.bf16.msra.mxu0 %v2772
        %2814 = vmatprep.subr.bf16.mxu0 %v2775
        %2815 = vmatpush1.bf16.msra.mxu0 %v2774
        %2816 = vmatprep.subr.bf16.mxu0 %v2777
        %2817 = vmatpush1.bf16.msra.mxu0 %v2776
        %2818 = vmatprep.subr.bf16.mxu0 0
        %2819 = vmatpush1.bf16.msra.mxu0 0
        %2820 = vmatprep.subr.bf16.mxu0 0
        %2821 = vmatpush1.bf16.msra.mxu0 0
        %2822 = vmatprep.subr.bf16.mxu0 0
        %2823 = vmatpush1.bf16.msra.mxu0 0
        %2824 = vmatprep.subr.bf16.mxu0 0
        %2825 = vmatpush1.bf16.msra.mxu0 0
        %2826 = vmatprep.subr.bf16.mxu0 0
        %2827 = vmatpush1.bf16.msra.mxu0 0
        %2828 = vmatprep.subr.bf16.mxu0 0
        %2829 = vmatpush1.bf16.msra.mxu0 0
        %2830 = vmatprep.subr.bf16.mxu0 0
        %2831 = vmatpush1.bf16.msra.mxu0 0
        %2832 = vmatprep.subr.bf16.mxu0 0
        %2833 = vmatpush1.bf16.msra.mxu0 0
        %2834 = vmatprep.subr.bf16.mxu0 0
        %2835 = vmatpush1.bf16.msra.mxu0 0
        %2836 = vmatprep.subr.bf16.mxu0 0
        %2837 = vmatpush1.bf16.msra.mxu0 0
        %2838 = vmatprep.subr.bf16.mxu0 0
        %2839 = vmatpush1.bf16.msra.mxu0 0
        %2840 = vmatprep.subr.bf16.mxu0 0
        %2841 = vmatpush1.bf16.msra.mxu0 0
        %2842 = vmatprep.mubr.bf16.mxu0 0
        %2843 = vmatmul.mubr.bf16.gmra.mrb[0].mxu0 %v2799
        %v2844 = vpop.f32.mrb[0].mxu0
        %v2845 = vadd.f32 0.0, %v2844
        %v2846 = vpop.f32.mrb[0].mxu0
        %v2847 = vadd.f32 0.0, %v2846
        %v2848 = vpop.f32.mrb[0].mxu0
        %v2849 = vadd.f32 0.0, %v2848
        %v2850 = vpop.f32.mrb[0].mxu0
        %v2851 = vadd.f32 0.0, %v2850
        %2852 = vmatprep.mubr.bf16.mxu0 0
        %2853 = vmatmul.mubr.bf16.gmra.mrb[0].mxu0 %v2802
        %v2854 = vpop.f32.mrb[0].mxu0
        %v2855 = vadd.f32 0.0, %v2854
        %v2856 = vpop.f32.mrb[0].mxu0
        %v2857 = vadd.f32 0.0, %v2856
        %v2858 = vpop.f32.mrb[0].mxu0
        %v2859 = vadd.f32 0.0, %v2858
        %v2860 = vpop.f32.mrb[0].mxu0
        %v2861 = vadd.f32 0.0, %v2860
        %2862 = vmatprep.mubr.bf16.mxu0 0
        %2863 = vmatmul.mubr.bf16.gmra.mrb[0].mxu0 %v2805
        %v2864 = vpop.f32.mrb[0].mxu0
        %v2865 = vadd.f32 0.0, %v2864
        %v2866 = vpop.f32.mrb[0].mxu0
        %v2867 = vadd.f32 0.0, %v2866
        %v2868 = vpop.f32.mrb[0].mxu0
        %v2869 = vadd.f32 0.0, %v2868
        %v2870 = vpop.f32.mrb[0].mxu0
        %v2871 = vadd.f32 0.0, %v2870
        %2872 = vmatprep.mubr.bf16.mxu0 0
        %2873 = vmatmul.mubr.bf16.gmra.mrb[0].mxu0 %v2808
        %v2874 = vpop.f32.mrb[0].mxu0
        %v2875 = vadd.f32 0.0, %v2874
        %v2876 = vpop.f32.mrb[0].mxu0
        %v2877 = vadd.f32 0.0, %v2876
        %v2878 = vpop.f32.mrb[0].mxu0
        %v2879 = vadd.f32 0.0, %v2878
        %v2880 = vpop.f32.mrb[0].mxu0
        %v2881 = vadd.f32 0.0, %v2880
        %2882 = vdwg.mxu0
        %v2883 = vmul.f32 %v2845, %v891
        %v2884 = vmul.f32 %v2847, %v892
        %v2885 = vmul.f32 %v2849, %v893
        %v2886 = vmul.f32 %v2851, %v894
        %v2887 = vmul.f32 %v2855, %v895
        %v2888 = vmul.f32 %v2857, %v896
        %v2889 = vmul.f32 %v2859, %v897
        %v2890 = vmul.f32 %v2861, %v898
        %v2891 = vmul.f32 %v2865, %v899
        %v2892 = vmul.f32 %v2867, %v900
        %v2893 = vmul.f32 %v2869, %v901
        %v2894 = vmul.f32 %v2871, %v902
        %v2895 = vmul.f32 %v2875, %v903
        %v2896 = vmul.f32 %v2877, %v904
        %v2897 = vmul.f32 %v2879, %v905
        %v2898 = vmul.f32 %v2881, %v906
        %v2899 = vld [vmem:[%s2 + $0xe0] sm:$0xf]
        %v2900 = vld [vmem:[%s2 + $0xe4] sm:$0xf]
        %v2901 = vpack.c.bf16 %v2885, %v2883
        %v2902 = vpack.c.bf16 %v2886, %v2884
        %v2903 = vpack.c.bf16 %v2889, %v2887
        %v2904 = vpack.c.bf16 %v2890, %v2888
        %v2905 = vpack.c.bf16 %v2893, %v2891
        %v2906 = vpack.c.bf16 %v2894, %v2892
        %v2907 = vpack.c.bf16 %v2897, %v2895
        %v2908 = vpack.c.bf16 %v2898, %v2896
        %v2911 = vunpack.c.l.b16 %v2899
        %v2912 = vunpack.c.l.b16 %v2900
        %v2913 = vpack.c.b16 %v2912, %v2911
        %v2915 = vsel %vm975, %v2913, 0
        %2917 = vmatprep.subr.bf16.mxu0 %v2902
        %2918 = vmatpush1.bf16.msra.mxu0 %v2901
        %2919 = vmatprep.subr.bf16.mxu0 %v2904
        %2920 = vmatpush1.bf16.msra.mxu0 %v2903
        %2921 = vmatprep.subr.bf16.mxu0 %v2906
        %2922 = vmatpush1.bf16.msra.mxu0 %v2905
        %2923 = vmatprep.subr.bf16.mxu0 %v2908
        %2924 = vmatpush1.bf16.msra.mxu0 %v2907
        %2925 = vmatprep.subr.bf16.mxu0 0
        %2926 = vmatpush1.bf16.msra.mxu0 0
        %2927 = vmatprep.subr.bf16.mxu0 0
        %2928 = vmatpush1.bf16.msra.mxu0 0
        %2929 = vmatprep.subr.bf16.mxu0 0
        %2930 = vmatpush1.bf16.msra.mxu0 0
        %2931 = vmatprep.subr.bf16.mxu0 0
        %2932 = vmatpush1.bf16.msra.mxu0 0
        %2933 = vmatprep.subr.bf16.mxu0 0
        %2934 = vmatpush1.bf16.msra.mxu0 0
        %2935 = vmatprep.subr.bf16.mxu0 0
        %2936 = vmatpush1.bf16.msra.mxu0 0
        %2937 = vmatprep.subr.bf16.mxu0 0
        %2938 = vmatpush1.bf16.msra.mxu0 0
        %2939 = vmatprep.subr.bf16.mxu0 0
        %2940 = vmatpush1.bf16.msra.mxu0 0
        %2941 = vmatprep.subr.bf16.mxu0 0
        %2942 = vmatpush1.bf16.msra.mxu0 0
        %2943 = vmatprep.subr.bf16.mxu0 0
        %2944 = vmatpush1.bf16.msra.mxu0 0
        %2945 = vmatprep.subr.bf16.mxu0 0
        %2946 = vmatpush1.bf16.msra.mxu0 0
        %2947 = vmatprep.subr.bf16.mxu0 0
        %2948 = vmatpush1.bf16.msra.mxu0 0
        %2949 = vmatprep.mubr.bf16.mxu0 0
        %2950 = vmatmul.mubr.bf16.gmra.mrb[0].mxu0 %v2915
        %v2951 = vpop.f32.mrb[0].mxu0
        %v2952 = vadd.f32 %v2738, %v2951
        %v2953 = vpop.f32.mrb[0].mxu0
        %v2954 = vadd.f32 %v2740, %v2953
        %v2955 = vpop.f32.mrb[0].mxu0
        %v2956 = vadd.f32 %v2742, %v2955
        %v2957 = vpop.f32.mrb[0].mxu0
        %v2958 = vadd.f32 %v2744, %v2957
        %2959 = vdwg.mxu0
        %v2960 = vld [vmem:[%s3] sm:$0xf]
        %v2961 = vld [vmem:[%s3 + $0x4] sm:$0xf]
        %v2962 = vld [vmem:[%s3 + $0x8] sm:$0xf]
        %v2963 = vld [vmem:[%s3 + $0xc] sm:$0xf]
        %v2964 = vld [vmem:[%s3 + $0x10] sm:$0xf]
        %v2965 = vld [vmem:[%s3 + $0x14] sm:$0xf]
        %v2966 = vld [vmem:[%s3 + $0x18] sm:$0xf]
        %v2967 = vld [vmem:[%s3 + $0x1c] sm:$0xf]
        %v2968 = vpack.c.bf16 %v2956, %v2952
        %v2969 = vpack.c.bf16 %v2958, %v2954
        %v2978 = vunpack.c.l.b16 %v2960
        %v2979 = vunpack.c.l.b16 %v2961
        %v2980 = vunpack.c.l.b16 %v2962
        %v2981 = vunpack.c.l.b16 %v2963
        %v2982 = vunpack.c.l.b16 %v2964
        %v2983 = vunpack.c.l.b16 %v2965
        %v2984 = vunpack.c.l.b16 %v2966
        %v2985 = vunpack.c.l.b16 %v2967
        %v2986 = vpack.c.b16 %v2979, %v2978
        %v2987 = vpack.c.b16 %v2981, %v2980
        %v2988 = vpack.c.b16 %v2983, %v2982
        %v2989 = vpack.c.b16 %v2985, %v2984
        %vm2990 = vcmask 130048
        %v2992 = vsel %vm2990, %v2986, 0
        %v2995 = vsel %vm2990, %v2987, 0
        %v2998 = vsel %vm2990, %v2988, 0
        %v3001 = vsel %vm2990, %v2989, 0
        %3003 = vmatprep.subr.bf16.mxu0 %v2969
        %3004 = vmatpush1.bf16.msra.mxu0 %v2968
        %3005 = vmatprep.subr.bf16.mxu0 0
        %3006 = vmatpush1.bf16.msra.mxu0 0
        %3007 = vmatprep.subr.bf16.mxu0 0
        %3008 = vmatpush1.bf16.msra.mxu0 0
        %3009 = vmatprep.subr.bf16.mxu0 0
        %3010 = vmatpush1.bf16.msra.mxu0 0
        %3011 = vmatprep.subr.bf16.mxu0 0
        %3012 = vmatpush1.bf16.msra.mxu0 0
        %3013 = vmatprep.subr.bf16.mxu0 0
        %3014 = vmatpush1.bf16.msra.mxu0 0
        %3015 = vmatprep.subr.bf16.mxu0 0
        %3016 = vmatpush1.bf16.msra.mxu0 0
        %3017 = vmatprep.subr.bf16.mxu0 0
        %3018 = vmatpush1.bf16.msra.mxu0 0
        %3019 = vmatprep.subr.bf16.mxu0 0
        %3020 = vmatpush1.bf16.msra.mxu0 0
        %3021 = vmatprep.subr.bf16.mxu0 0
        %3022 = vmatpush1.bf16.msra.mxu0 0
        %3023 = vmatprep.subr.bf16.mxu0 0
        %3024 = vmatpush1.bf16.msra.mxu0 0
        %3025 = vmatprep.subr.bf16.mxu0 0
        %3026 = vmatpush1.bf16.msra.mxu0 0
        %3027 = vmatprep.subr.bf16.mxu0 0
        %3028 = vmatpush1.bf16.msra.mxu0 0
        %3029 = vmatprep.subr.bf16.mxu0 0
        %3030 = vmatpush1.bf16.msra.mxu0 0
        %3031 = vmatprep.subr.bf16.mxu0 0
        %3032 = vmatpush1.bf16.msra.mxu0 0
        %3033 = vmatprep.subr.bf16.mxu0 0
        %3034 = vmatpush1.bf16.msra.mxu0 0
        %3035 = vmatprep.mubr.bf16.mxu0 0
        %3036 = vmatmul.mubr.bf16.gmra.mrb[0].mxu0 %v2992
        %v3037 = vpop.f32.mrb[0].mxu0
        %v3038 = vadd.f32 0.0, %v3037
        %v3039 = vpop.f32.mrb[0].mxu0
        %v3040 = vadd.f32 0.0, %v3039
        %v3041 = vpop.f32.mrb[0].mxu0
        %v3042 = vadd.f32 0.0, %v3041
        %v3043 = vpop.f32.mrb[0].mxu0
        %v3044 = vadd.f32 0.0, %v3043
        %3045 = vmatprep.mubr.bf16.mxu0 0
        %3046 = vmatmul.mubr.bf16.gmra.mrb[0].mxu0 %v2995
        %v3047 = vpop.f32.mrb[0].mxu0
        %v3048 = vadd.f32 0.0, %v3047
        %v3049 = vpop.f32.mrb[0].mxu0
        %v3050 = vadd.f32 0.0, %v3049
        %v3051 = vpop.f32.mrb[0].mxu0
        %v3052 = vadd.f32 0.0, %v3051
        %v3053 = vpop.f32.mrb[0].mxu0
        %v3054 = vadd.f32 0.0, %v3053
        %3055 = vmatprep.mubr.bf16.mxu0 0
        %3056 = vmatmul.mubr.bf16.gmra.mrb[0].mxu0 %v2998
        %v3057 = vpop.f32.mrb[0].mxu0
        %v3058 = vadd.f32 0.0, %v3057
        %v3059 = vpop.f32.mrb[0].mxu0
        %v3060 = vadd.f32 0.0, %v3059
        %v3061 = vpop.f32.mrb[0].mxu0
        %v3062 = vadd.f32 0.0, %v3061
        %v3063 = vpop.f32.mrb[0].mxu0
        %v3064 = vadd.f32 0.0, %v3063
        %3065 = vmatprep.mubr.bf16.mxu0 0
        %3066 = vmatmul.mubr.bf16.gmra.mrb[0].mxu0 %v3001
        %v3067 = vpop.f32.mrb[0].mxu0
        %v3068 = vadd.f32 0.0, %v3067
        %v3069 = vpop.f32.mrb[0].mxu0
        %v3070 = vadd.f32 0.0, %v3069
        %v3071 = vpop.f32.mrb[0].mxu0
        %v3072 = vadd.f32 0.0, %v3071
        %v3073 = vpop.f32.mrb[0].mxu0
        %v3074 = vadd.f32 0.0, %v3073
        %3075 = vdwg.mxu0
        %v3076 = vadd.f32 %v469, %v3038
        %v3077 = vadd.f32 %v471, %v3040
        %v3078 = vadd.f32 %v473, %v3042
        %v3079 = vadd.f32 %v475, %v3044
        %v3080 = vadd.f32 %v479, %v3048
        %v3081 = vadd.f32 %v481, %v3050
        %v3082 = vadd.f32 %v483, %v3052
        %v3083 = vadd.f32 %v485, %v3054
        %v3084 = vadd.f32 %v489, %v3058
        %v3085 = vadd.f32 %v491, %v3060
        %v3086 = vadd.f32 %v493, %v3062
        %v3087 = vadd.f32 %v495, %v3064
        %v3088 = vadd.f32 %v499, %v3068
        %v3089 = vadd.f32 %v501, %v3070
        %v3090 = vadd.f32 %v503, %v3072
        %v3091 = vadd.f32 %v505, %v3074
        %v3092 = vld [vmem:[%s4] sm:$0xf]
        %v3093 = vld [vmem:[%s4 + $0x4] sm:$0xf]
        %v3094 = vld [vmem:[%s4 + $0x8] sm:$0xf]
        %v3095 = vld [vmem:[%s4 + $0xc] sm:$0xf]
        %v3096 = vld [vmem:[%s4 + $0x10] sm:$0xf]
        %v3097 = vld [vmem:[%s4 + $0x14] sm:$0xf]
        %v3098 = vld [vmem:[%s4 + $0x18] sm:$0xf]
        %v3099 = vld [vmem:[%s4 + $0x1c] sm:$0xf]
        %v3100 = vpack.c.bf16 %v2396, %v2392
        %v3101 = vpack.c.bf16 %v2398, %v2394
        %v3102 = vpack.c.bf16 %v2406, %v2402
        %v3103 = vpack.c.bf16 %v2408, %v2404
        %v3104 = vpack.c.bf16 %v2416, %v2412
        %v3105 = vpack.c.bf16 %v2418, %v2414
        %v3114 = vunpack.c.l.b16 %v3092
        %v3115 = vunpack.c.l.b16 %v3093
        %v3116 = vunpack.c.l.b16 %v3094
        %v3117 = vunpack.c.l.b16 %v3095
        %v3118 = vunpack.c.l.b16 %v3096
        %v3119 = vunpack.c.l.b16 %v3097
        %v3120 = vunpack.c.l.b16 %v3098
        %v3121 = vunpack.c.l.b16 %v3099
        %v3122 = vpack.c.b16 %v3115, %v3114
        %v3123 = vpack.c.b16 %v3117, %v3116
        %v3124 = vpack.c.b16 %v3119, %v3118
        %v3125 = vpack.c.b16 %v3121, %v3120
        %vm3126 = vcmask 392192
        %v3128 = vsel %vm3126, %v3122, 0
        %v3131 = vsel %vm3126, %v3123, 0
        %v3134 = vsel %vm3126, %v3124, 0
        %v3137 = vsel %vm3126, %v3125, 0
        %3139 = vmatprep.subr.bf16.mxu0 %v3101
        %3140 = vmatpush1.bf16.msra.mxu0 %v3100
        %3141 = vmatprep.subr.bf16.mxu0 %v3103
        %3142 = vmatpush1.bf16.msra.mxu0 %v3102
        %3143 = vmatprep.subr.bf16.mxu0 %v3105
        %3144 = vmatpush1.bf16.msra.mxu0 %v3104
        %3145 = vmatprep.subr.bf16.mxu0 0
        %3146 = vmatpush1.bf16.msra.mxu0 0
        %3147 = vmatprep.subr.bf16.mxu0 0
        %3148 = vmatpush1.bf16.msra.mxu0 0
        %3149 = vmatprep.subr.bf16.mxu0 0
        %3150 = vmatpush1.bf16.msra.mxu0 0
        %3151 = vmatprep.subr.bf16.mxu0 0
        %3152 = vmatpush1.bf16.msra.mxu0 0
        %3153 = vmatprep.subr.bf16.mxu0 0
        %3154 = vmatpush1.bf16.msra.mxu0 0
        %3155 = vmatprep.subr.bf16.mxu0 0
        %3156 = vmatpush1.bf16.msra.mxu0 0
        %3157 = vmatprep.subr.bf16.mxu0 0
        %3158 = vmatpush1.bf16.msra.mxu0 0
        %3159 = vmatprep.subr.bf16.mxu0 0
        %3160 = vmatpush1.bf16.msra.mxu0 0
        %3161 = vmatprep.subr.bf16.mxu0 0
        %3162 = vmatpush1.bf16.msra.mxu0 0
        %3163 = vmatprep.subr.bf16.mxu0 0
        %3164 = vmatpush1.bf16.msra.mxu0 0
        %3165 = vmatprep.subr.bf16.mxu0 0
        %3166 = vmatpush1.bf16.msra.mxu0 0
        %3167 = vmatprep.subr.bf16.mxu0 0
        %3168 = vmatpush1.bf16.msra.mxu0 0
        %3169 = vmatprep.subr.bf16.mxu0 0
        %3170 = vmatpush1.bf16.msra.mxu0 0
        %3171 = vmatprep.mubr.bf16.mxu0 0
        %3172 = vmatmul.mubr.bf16.gmra.mrb[0].mxu0 %v3128
        %v3173 = vpop.f32.mrb[0].mxu0
        %v3174 = vadd.f32 0.0, %v3173
        %v3175 = vpop.f32.mrb[0].mxu0
        %v3176 = vadd.f32 0.0, %v3175
        %v3177 = vpop.f32.mrb[0].mxu0
        %v3178 = vadd.f32 0.0, %v3177
        %v3179 = vpop.f32.mrb[0].mxu0
        %v3180 = vadd.f32 0.0, %v3179
        %3181 = vmatprep.mubr.bf16.mxu0 0
        %3182 = vmatmul.mubr.bf16.gmra.mrb[0].mxu0 %v3131
        %v3183 = vpop.f32.mrb[0].mxu0
        %v3184 = vadd.f32 0.0, %v3183
        %v3185 = vpop.f32.mrb[0].mxu0
        %v3186 = vadd.f32 0.0, %v3185
        %v3187 = vpop.f32.mrb[0].mxu0
        %v3188 = vadd.f32 0.0, %v3187
        %v3189 = vpop.f32.mrb[0].mxu0
        %v3190 = vadd.f32 0.0, %v3189
        %3191 = vmatprep.mubr.bf16.mxu0 0
        %3192 = vmatmul.mubr.bf16.gmra.mrb[0].mxu0 %v3134
        %v3193 = vpop.f32.mrb[0].mxu0
        %v3194 = vadd.f32 0.0, %v3193
        %v3195 = vpop.f32.mrb[0].mxu0
        %v3196 = vadd.f32 0.0, %v3195
        %v3197 = vpop.f32.mrb[0].mxu0
        %v3198 = vadd.f32 0.0, %v3197
        %v3199 = vpop.f32.mrb[0].mxu0
        %v3200 = vadd.f32 0.0, %v3199
        %3201 = vmatprep.mubr.bf16.mxu0 0
        %3202 = vmatmul.mubr.bf16.gmra.mrb[0].mxu0 %v3137
        %v3203 = vpop.f32.mrb[0].mxu0
        %v3204 = vadd.f32 0.0, %v3203
        %v3205 = vpop.f32.mrb[0].mxu0
        %v3206 = vadd.f32 0.0, %v3205
        %v3207 = vpop.f32.mrb[0].mxu0
        %v3208 = vadd.f32 0.0, %v3207
        %v3209 = vpop.f32.mrb[0].mxu0
        %v3210 = vadd.f32 0.0, %v3209
        %3211 = vdwg.mxu0
        %v3212 = vadd.f32 %v3076, %v3174
        %v3213 = vadd.f32 %v3077, %v3176
        %v3214 = vadd.f32 %v3078, %v3178
        %v3215 = vadd.f32 %v3079, %v3180
        %v3216 = vadd.f32 %v3080, %v3184
        %v3217 = vadd.f32 %v3081, %v3186
        %v3218 = vadd.f32 %v3082, %v3188
        %v3219 = vadd.f32 %v3083, %v3190
        %v3220 = vadd.f32 %v3084, %v3194
        %v3221 = vadd.f32 %v3085, %v3196
        %v3222 = vadd.f32 %v3086, %v3198
        %v3223 = vadd.f32 %v3087, %v3200
        %v3224 = vadd.f32 %v3088, %v3204
        %v3225 = vadd.f32 %v3089, %v3206
        %v3226 = vadd.f32 %v3090, %v3208
        %v3227 = vadd.f32 %v3091, %v3210
        %3228 = vset.pattern.permute.xlu0 5
        %3229 = vperm.xlu0 %3228, %v256
        %v3230 = vpop.permute.xlu0 %3229
        %3232 = vset.pattern.permute.xlu0 5
        %3233 = vperm.xlu0 %3232, %v257
        %v3234 = vpop.permute.xlu0 %3233
        %3236 = vset.pattern.permute.xlu0 5
        %3237 = vperm.xlu0 %3236, %v258
        %v3238 = vpop.permute.xlu0 %3237
        %3240 = vset.pattern.permute.xlu0 5
        %3241 = vperm.xlu0 %3240, %v259
        %v3242 = vpop.permute.xlu0 %3241
        %3244 = vset.pattern.permute.xlu0 5
        %3245 = vperm.xlu0 %3244, %v260
        %v3246 = vpop.permute.xlu0 %3245
        %3248 = vset.pattern.permute.xlu0 5
        %3249 = vperm.xlu0 %3248, %v261
        %v3250 = vpop.permute.xlu0 %3249
        %3252 = vset.pattern.permute.xlu0 5
        %3253 = vperm.xlu0 %3252, %v262
        %v3254 = vpop.permute.xlu0 %3253
        %3256 = vset.pattern.permute.xlu0 5
        %3257 = vperm.xlu0 %3256, %v263
        %v3258 = vpop.permute.xlu0 %3257
        %v3260 = vadd.f32 %v3212, %v3230
        %v3261 = vadd.f32 %v3213, %v3230
        %v3262 = vadd.f32 %v3214, %v3234
        %v3263 = vadd.f32 %v3215, %v3234
        %v3264 = vadd.f32 %v3216, %v3238
        %v3265 = vadd.f32 %v3217, %v3238
        %v3266 = vadd.f32 %v3218, %v3242
        %v3267 = vadd.f32 %v3219, %v3242
        %v3268 = vadd.f32 %v3220, %v3246
        %v3269 = vadd.f32 %v3221, %v3246
        %v3270 = vadd.f32 %v3222, %v3250
        %v3271 = vadd.f32 %v3223, %v3250
        %v3272 = vadd.f32 %v3224, %v3254
        %v3273 = vadd.f32 %v3225, %v3254
        %v3274 = vadd.f32 %v3226, %v3258
        %v3275 = vadd.f32 %v3227, %v3258
        %v3276 = vmax.f32 %v3260, 0.0
        %v3277 = vmax.f32 %v3261, 0.0
        %v3278 = vmax.f32 %v3262, 0.0
        %v3279 = vmax.f32 %v3263, 0.0
        %v3280 = vmax.f32 %v3264, 0.0
        %v3281 = vmax.f32 %v3265, 0.0
        %v3282 = vmax.f32 %v3266, 0.0
        %v3283 = vmax.f32 %v3267, 0.0
        %v3284 = vmax.f32 %v3268, 0.0
        %v3285 = vmax.f32 %v3269, 0.0
        %v3286 = vmax.f32 %v3270, 0.0
        %v3287 = vmax.f32 %v3271, 0.0
        %v3288 = vmax.f32 %v3272, 0.0
        %v3289 = vmax.f32 %v3273, 0.0
        %v3290 = vmax.f32 %v3274, 0.0
        %v3291 = vmax.f32 %v3275, 0.0
        %v3292 = vld [vmem:[%s2 + $0xe8] sm:$0xf]
        %v3293 = vld [vmem:[%s2 + $0xec] sm:$0xf]
        %v3294 = vld [vmem:[%s2 + $0xf0] sm:$0xf]
        %v3295 = vld [vmem:[%s2 + $0xf4] sm:$0xf]
        %v3296 = vld [vmem:[%s2 + $0xf8] sm:$0xf]
        %v3297 = vld [vmem:[%s2 + $0xfc] sm:$0xf]
        %v3298 = vld [vmem:[%s2 + $0x100] sm:$0xf]
        %v3299 = vld [vmem:[%s2 + $0x104] sm:$0xf]
        %v3300 = vpack.c.bf16 %v3278, %v3276
        %v3301 = vpack.c.bf16 %v3279, %v3277
        %v3302 = vpack.c.bf16 %v3282, %v3280
        %v3303 = vpack.c.bf16 %v3283, %v3281
        %v3304 = vpack.c.bf16 %v3286, %v3284
        %v3305 = vpack.c.bf16 %v3287, %v3285
        %v3306 = vpack.c.bf16 %v3290, %v3288
        %v3307 = vpack.c.bf16 %v3291, %v3289
        %3308 = vset.pattern.permute.xlu0 6
        %3309 = vperm.xlu0 %3308, %v256
        %v3310 = vpop.permute.xlu0 %3309
        %3312 = vset.pattern.permute.xlu0 6
        %3313 = vperm.xlu0 %3312, %v257
        %v3314 = vpop.permute.xlu0 %3313
        %3316 = vset.pattern.permute.xlu0 6
        %3317 = vperm.xlu0 %3316, %v258
        %v3318 = vpop.permute.xlu0 %3317
        %3320 = vset.pattern.permute.xlu0 6
        %3321 = vperm.xlu0 %3320, %v259
        %v3322 = vpop.permute.xlu0 %3321
        %3324 = vset.pattern.permute.xlu0 6
        %3325 = vperm.xlu0 %3324, %v260
        %v3326 = vpop.permute.xlu0 %3325
        %3328 = vset.pattern.permute.xlu0 6
        %3329 = vperm.xlu0 %3328, %v261
        %v3330 = vpop.permute.xlu0 %3329
        %3332 = vset.pattern.permute.xlu0 6
        %3333 = vperm.xlu0 %3332, %v262
        %v3334 = vpop.permute.xlu0 %3333
        %3336 = vset.pattern.permute.xlu0 6
        %3337 = vperm.xlu0 %3336, %v263
        %v3338 = vpop.permute.xlu0 %3337
        %v3348 = vunpack.c.l.b16 %v3292
        %v3349 = vunpack.c.l.b16 %v3293
        %v3350 = vunpack.c.l.b16 %v3294
        %v3351 = vunpack.c.l.b16 %v3295
        %v3352 = vunpack.c.l.b16 %v3296
        %v3353 = vunpack.c.l.b16 %v3297
        %v3354 = vunpack.c.l.b16 %v3298
        %v3355 = vunpack.c.l.b16 %v3299
        %v3356 = vpack.c.b16 %v3349, %v3348
        %v3357 = vpack.c.b16 %v3351, %v3350
        %v3358 = vpack.c.b16 %v3353, %v3352
        %v3359 = vpack.c.b16 %v3355, %v3354
        %v3361 = vsel %vm975, %v3356, 0
        %v3364 = vsel %vm975, %v3357, 0
        %v3367 = vsel %vm975, %v3358, 0
        %v3370 = vsel %vm975, %v3359, 0
        %3372 = vmatprep.subr.bf16.mxu0 %v3301
        %3373 = vmatpush1.bf16.msra.mxu0 %v3300
        %3374 = vmatprep.subr.bf16.mxu0 %v3303
        %3375 = vmatpush1.bf16.msra.mxu0 %v3302
        %3376 = vmatprep.subr.bf16.mxu0 %v3305
        %3377 = vmatpush1.bf16.msra.mxu0 %v3304
        %3378 = vmatprep.subr.bf16.mxu0 %v3307
        %3379 = vmatpush1.bf16.msra.mxu0 %v3306
        %3380 = vmatprep.subr.bf16.mxu0 0
        %3381 = vmatpush1.bf16.msra.mxu0 0
        %3382 = vmatprep.subr.bf16.mxu0 0
        %3383 = vmatpush1.bf16.msra.mxu0 0
        %3384 = vmatprep.subr.bf16.mxu0 0
        %3385 = vmatpush1.bf16.msra.mxu0 0
        %3386 = vmatprep.subr.bf16.mxu0 0
        %3387 = vmatpush1.bf16.msra.mxu0 0
        %3388 = vmatprep.subr.bf16.mxu0 0
        %3389 = vmatpush1.bf16.msra.mxu0 0
        %3390 = vmatprep.subr.bf16.mxu0 0
        %3391 = vmatpush1.bf16.msra.mxu0 0
        %3392 = vmatprep.subr.bf16.mxu0 0
        %3393 = vmatpush1.bf16.msra.mxu0 0
        %3394 = vmatprep.subr.bf16.mxu0 0
        %3395 = vmatpush1.bf16.msra.mxu0 0
        %3396 = vmatprep.subr.bf16.mxu0 0
        %3397 = vmatpush1.bf16.msra.mxu0 0
        %3398 = vmatprep.subr.bf16.mxu0 0
        %3399 = vmatpush1.bf16.msra.mxu0 0
        %3400 = vmatprep.subr.bf16.mxu0 0
        %3401 = vmatpush1.bf16.msra.mxu0 0
        %3402 = vmatprep.subr.bf16.mxu0 0
        %3403 = vmatpush1.bf16.msra.mxu0 0
        %3404 = vmatprep.mubr.bf16.mxu0 0
        %3405 = vmatmul.mubr.bf16.gmra.mrb[0].mxu0 %v3361
        %v3406 = vpop.f32.mrb[0].mxu0
        %v3407 = vadd.f32 %v3310, %v3406
        %v3408 = vpop.f32.mrb[0].mxu0
        %v3409 = vadd.f32 %v3310, %v3408
        %v3410 = vpop.f32.mrb[0].mxu0
        %v3411 = vadd.f32 %v3314, %v3410
        %v3412 = vpop.f32.mrb[0].mxu0
        %v3413 = vadd.f32 %v3314, %v3412
        %3414 = vmatprep.mubr.bf16.mxu0 0
        %3415 = vmatmul.mubr.bf16.gmra.mrb[0].mxu0 %v3364
        %v3416 = vpop.f32.mrb[0].mxu0
        %v3417 = vadd.f32 %v3318, %v3416
        %v3418 = vpop.f32.mrb[0].mxu0
        %v3419 = vadd.f32 %v3318, %v3418
        %v3420 = vpop.f32.mrb[0].mxu0
        %v3421 = vadd.f32 %v3322, %v3420
        %v3422 = vpop.f32.mrb[0].mxu0
        %v3423 = vadd.f32 %v3322, %v3422
        %3424 = vmatprep.mubr.bf16.mxu0 0
        %3425 = vmatmul.mubr.bf16.gmra.mrb[0].mxu0 %v3367
        %v3426 = vpop.f32.mrb[0].mxu0
        %v3427 = vadd.f32 %v3326, %v3426
        %v3428 = vpop.f32.mrb[0].mxu0
        %v3429 = vadd.f32 %v3326, %v3428
        %v3430 = vpop.f32.mrb[0].mxu0
        %v3431 = vadd.f32 %v3330, %v3430
        %v3432 = vpop.f32.mrb[0].mxu0
        %v3433 = vadd.f32 %v3330, %v3432
        %3434 = vmatprep.mubr.bf16.mxu0 0
        %3435 = vmatmul.mubr.bf16.gmra.mrb[0].mxu0 %v3370
        %v3436 = vpop.f32.mrb[0].mxu0
        %v3437 = vadd.f32 %v3334, %v3436
        %v3438 = vpop.f32.mrb[0].mxu0
        %v3439 = vadd.f32 %v3334, %v3438
        %v3440 = vpop.f32.mrb[0].mxu0
        %v3441 = vadd.f32 %v3338, %v3440
        %v3442 = vpop.f32.mrb[0].mxu0
        %v3443 = vadd.f32 %v3338, %v3442
        %3444 = vdwg.mxu0
        %v3445 = vmax.f32 %v3407, 0.0
        %v3446 = vmax.f32 %v3409, 0.0
        %v3447 = vmax.f32 %v3411, 0.0
        %v3448 = vmax.f32 %v3413, 0.0
        %v3449 = vmax.f32 %v3417, 0.0
        %v3450 = vmax.f32 %v3419, 0.0
        %v3451 = vmax.f32 %v3421, 0.0
        %v3452 = vmax.f32 %v3423, 0.0
        %v3453 = vmax.f32 %v3427, 0.0
        %v3454 = vmax.f32 %v3429, 0.0
        %v3455 = vmax.f32 %v3431, 0.0
        %v3456 = vmax.f32 %v3433, 0.0
        %v3457 = vmax.f32 %v3437, 0.0
        %v3458 = vmax.f32 %v3439, 0.0
        %v3459 = vmax.f32 %v3441, 0.0
        %v3460 = vmax.f32 %v3443, 0.0
        %v3461 = vld [vmem:[%s2 + $0x108] sm:$0xf]
        %v3462 = vld [vmem:[%s2 + $0x10c] sm:$0xf]
        %v3463 = vpack.c.bf16 %v3447, %v3445
        %v3464 = vpack.c.bf16 %v3448, %v3446
        %v3465 = vpack.c.bf16 %v3451, %v3449
        %v3466 = vpack.c.bf16 %v3452, %v3450
        %v3467 = vpack.c.bf16 %v3455, %v3453
        %v3468 = vpack.c.bf16 %v3456, %v3454
        %v3469 = vpack.c.bf16 %v3459, %v3457
        %v3470 = vpack.c.bf16 %v3460, %v3458
        %3471 = vset.pattern.permute.xlu0 7
        %3472 = vperm.xlu0 %3471, %v256
        %v3473 = vpop.permute.xlu0 %3472
        %3475 = vset.pattern.permute.xlu0 7
        %3476 = vperm.xlu0 %3475, %v257
        %v3477 = vpop.permute.xlu0 %3476
        %v3480 = vunpack.c.l.b16 %v3461
        %v3481 = vunpack.c.l.b16 %v3462
        %v3482 = vpack.c.b16 %v3481, %v3480
        %v3484 = vsel %vm975, %v3482, 0
        %3486 = vmatprep.subr.bf16.mxu0 %v3464
        %3487 = vmatpush1.bf16.msra.mxu0 %v3463
        %3488 = vmatprep.subr.bf16.mxu0 %v3466
        %3489 = vmatpush1.bf16.msra.mxu0 %v3465
        %3490 = vmatprep.subr.bf16.mxu0 %v3468
        %3491 = vmatpush1.bf16.msra.mxu0 %v3467
        %3492 = vmatprep.subr.bf16.mxu0 %v3470
        %3493 = vmatpush1.bf16.msra.mxu0 %v3469
        %3494 = vmatprep.subr.bf16.mxu0 0
        %3495 = vmatpush1.bf16.msra.mxu0 0
        %3496 = vmatprep.subr.bf16.mxu0 0
        %3497 = vmatpush1.bf16.msra.mxu0 0
        %3498 = vmatprep.subr.bf16.mxu0 0
        %3499 = vmatpush1.bf16.msra.mxu0 0
        %3500 = vmatprep.subr.bf16.mxu0 0
        %3501 = vmatpush1.bf16.msra.mxu0 0
        %3502 = vmatprep.subr.bf16.mxu0 0
        %3503 = vmatpush1.bf16.msra.mxu0 0
        %3504 = vmatprep.subr.bf16.mxu0 0
        %3505 = vmatpush1.bf16.msra.mxu0 0
        %3506 = vmatprep.subr.bf16.mxu0 0
        %3507 = vmatpush1.bf16.msra.mxu0 0
        %3508 = vmatprep.subr.bf16.mxu0 0
        %3509 = vmatpush1.bf16.msra.mxu0 0
        %3510 = vmatprep.subr.bf16.mxu0 0
        %3511 = vmatpush1.bf16.msra.mxu0 0
        %3512 = vmatprep.subr.bf16.mxu0 0
        %3513 = vmatpush1.bf16.msra.mxu0 0
        %3514 = vmatprep.subr.bf16.mxu0 0
        %3515 = vmatpush1.bf16.msra.mxu0 0
        %3516 = vmatprep.subr.bf16.mxu0 0
        %3517 = vmatpush1.bf16.msra.mxu0 0
        %3518 = vmatprep.mubr.bf16.mxu0 0
        %3519 = vmatmul.mubr.bf16.gmra.mrb[0].mxu0 %v3484
        %v3520 = vpop.f32.mrb[0].mxu0
        %v3521 = vadd.f32 %v3473, %v3520
        %v3522 = vpop.f32.mrb[0].mxu0
        %v3523 = vadd.f32 %v3473, %v3522
        %v3524 = vpop.f32.mrb[0].mxu0
        %v3525 = vpop.f32.mrb[0].mxu0
        %3526 = vdwg.mxu0
        %v3527 = vtanh.pop %v3521
        %v3528 = vtanh.pop %v3523
        %v3531 = vrot.slane %v2392, 5
        %v3532 = vrot.slane %v2394, 5
        %vm3535 = vcmask 1042432
        %v3536 = vsel %vm3535, %v3527, %v3531
        %v3537 = vsel %vm3535, %v3528, %v3532
        %v3540 = vcombine.low %v3536, %v3537
        %3542 = vst [vmem:[%s245] sm:$0xff] %v3540
        %s3543 = sand.u32 %s159, 1
        %s3544 = scalar_lea.sflag [#allocation3], %s3543
        %s3545 = sand.u32 %s159, 1
        %s3546 = smul.addr %s3545, 8
        %s3547 = scalar_lea.vmem [#allocation2], %s3546
        // Predicated region
        $region45: #{tpu_custom_call.1} parent=43 // pred_check
          %p3548 = pneg %p169
        $region46: #{tpu_custom_call.1} parent=43 // pred_check_branch
          %3550 = sbr.rel (%p3548) target = $region48
        $region47: #{tpu_custom_call.1} parent=43 // pred_region
          %s3551 = smul.u32 2, %s20
          %s3553 = ssub.s32 128, 128
          %3554 = vsyncadd %s3544, %s3553
          %s3555 = smul.addr %s3551, 64
          %s3556 = scalar_lea.hbm %s6, %s3555
          %s3558 = sshll.u32 %s3547, 4
          %s3559 = int_to_ptr.vmem [resolvable:$true] %s3558
          %3561 = dma.vmem_to_hbm [thread:$0]  %s3559, 128, %s3556, %s3544
        $region48: #{tpu_custom_call.1} parent=43 // pred_fallthru
          _
      $region44: #{tpu_custom_call.1} parent=5 // pred_fallthru
        _
      %p3562 = scmp.le.s32.totalorder 2, %s15
      // Predicated region
      $region49: #{tpu_custom_call.1} parent=5 // pred_check
        %p3563 = pneg %p3562
      $region50: #{tpu_custom_call.1} parent=5 // pred_check_branch
        %3565 = sbr.rel (%p3563) target = $region52
      $region51: #{tpu_custom_call.1} parent=5 // pred_region
        %s3566 = ssub.s32 %s15, 2
        // Predicated region
        $region53: #{tpu_custom_call.1} parent=51 // pred_check
          %p3567 = pneg %p175
        $region54: #{tpu_custom_call.1} parent=51 // pred_check_branch
          %3569 = sbr.rel (%p3567) target = $region56
        $region55: #{tpu_custom_call.1} parent=51 // pred_region
          %s3570 = sand.u32 %s160, 1
          %s3571 = scalar_lea.sflag [#allocation3], %s3570
          %s3572 = sand.u32 %s160, 1
          %s3573 = smul.addr %s3572, 8
          %s3574 = scalar_lea.vmem [#allocation2], %s3573
          %3575 = dma.done %s3571, 128
        $region56: #{tpu_custom_call.1} parent=51 // pred_fallthru
          _
      $region52: #{tpu_custom_call.1} parent=5 // pred_fallthru
        _
    $region6: #{tpu_custom_call.1} parent=1 // loop_footer
      %s19 = sadd.s32 1, %s15
    $region7: #{tpu_custom_call.1} parent=1 // loop_footer_branch
      %14 = sbr.rel target = $region3
    $region8: #{tpu_custom_call.1} parent=1 // loop_exit
      _
    %3576 = vsyncpa [#allocation3], 1
    %s3577 = scalar_lea.sflag [#allocation3], 1
    %3578 = vsyncpa %s3577, 1

</llo_original>
